<compile_context>
chip_gen: v6e
topology: v6e:2x2x1
jax: 0.10.0
libtpu: 0.0.40
codegen_flags: <defaults>
</compile_context>

<pallas_src>
import functools
import math

import jax
import jax.numpy as jnp
from jax.experimental import pallas as pl
from jax.experimental.pallas import tpu as pltpu


MASK_NEG = -1e9

PACKED_LAYER_KEYS = (
    "ln", "wqkv1", "bqkv1", "wo1", "bo1",
    "wq2", "bq2", "wkv2", "bkv2", "wo2", "bo2",
    "wf1", "bf1", "wf2", "bf2",
)


def _round_up(x, m):
    return ((x + m - 1) // m) * m


# ----------------------------------------------------------------------------
# Shared math (used inside the Pallas kernel and by the pure-JAX reference)
# ----------------------------------------------------------------------------
def _layer_norm(x, g, b, eps=1e-5):
    mu = jnp.mean(x, axis=-1, keepdims=True)
    var = jnp.mean(jnp.square(x - mu), axis=-1, keepdims=True)
    return (x - mu) * jax.lax.rsqrt(var + eps) * g + b


def _mha_core(q, k, v, mask_neg, scale, num_heads, dh):
    """Multi-head attention core. q: (bt,T,D) f32, k/v: (bt,S,D) f32,
    mask_neg: (bt,T,S) additive f32. Heads are static lane slices; the
    score/context matmuls are inherently per-head (contraction dim = dh)."""
    ctx = []
    for h in range(num_heads):
        sl = slice(h * dh, (h + 1) * dh)
        s = jnp.einsum("btk,bsk->bts",
                       q[..., sl].astype(jnp.bfloat16),
                       k[..., sl].astype(jnp.bfloat16),
                       preferred_element_type=jnp.float32) * scale
        s = s + mask_neg
        s = s - jnp.max(s, axis=-1, keepdims=True)
        p = jnp.exp(s)
        p = p / jnp.sum(p, axis=-1, keepdims=True)          # exact softmax
        ctx.append(jnp.einsum("bts,bsk->btk",
                              p.astype(jnp.bfloat16),
                              v[..., sl].astype(jnp.bfloat16),
                              preferred_element_type=jnp.float32))
    return jnp.concatenate(ctx, axis=-1)                     # (bt, T, D)


def _decoder_layer_math(x, enc_bf16, smask_neg, emask_neg, w, num_heads):
    """One pre-norm transformer decoder layer on a batch tile.
    x: (bt,T,D) f32; enc_bf16: (bt,S,D) bf16. Fused full-width weights."""
    (ln, wqkv1, bqkv1, wo1, bo1, wq2, bq2, wkv2, bkv2, wo2, bo2,
     wf1, bf1, wf2, bf2) = w
    bt, T, D = x.shape
    S = enc_bf16.shape[1]
    H = num_heads
    dh = D // H
    scale = 1.0 / math.sqrt(dh)

    def mm(a_bf16, w_bf16, bias_f32):
        return jnp.dot(a_bf16, w_bf16,
                       preferred_element_type=jnp.float32) + bias_f32

    # --- masked self-attention ----------------------------------------------
    y = _layer_norm(x, ln[0:1, :], ln[1:2, :])
    qkv = mm(y.reshape(bt * T, D).astype(jnp.bfloat16), wqkv1, bqkv1)  # (bt*T,3D)
    q = qkv[:, 0 * D:1 * D].reshape(bt, T, D)
    k = qkv[:, 1 * D:2 * D].reshape(bt, T, D)
    v = qkv[:, 2 * D:3 * D].reshape(bt, T, D)
    ctx = _mha_core(q, k, v, smask_neg, scale, H, dh)
    x = x + mm(ctx.reshape(bt * T, D).astype(jnp.bfloat16),
               wo1, bo1).reshape(bt, T, D)

    # --- encoder (cross) attention ------------------------------------------
    y = _layer_norm(x, ln[2:3, :], ln[3:4, :])
    q2 = mm(y.reshape(bt * T, D).astype(jnp.bfloat16),
            wq2, bq2).reshape(bt, T, D)
    kv2 = mm(enc_bf16.reshape(bt * S, D), wkv2, bkv2)                  # (bt*S,2D)
    k2 = kv2[:, :D].reshape(bt, S, D)
    v2 = kv2[:, D:].reshape(bt, S, D)
    ctx2 = _mha_core(q2, k2, v2, emask_neg, scale, H, dh)
    x = x + mm(ctx2.reshape(bt * T, D).astype(jnp.bfloat16),
               wo2, bo2).reshape(bt, T, D)

    # --- position-wise FFN ----------------------------------------------------
    y = _layer_norm(x, ln[4:5, :], ln[5:6, :])
    h1 = jnp.maximum(
        mm(y.reshape(bt * T, D).astype(jnp.bfloat16), wf1, bf1), 0.0)
    x = x + mm(h1.astype(jnp.bfloat16), wf2, bf2).reshape(bt, T, D)
    return x


def _fc_logsoftmax_math(x2d, fc_w):
    logits = jnp.dot(x2d.astype(jnp.bfloat16), fc_w,
                     preferred_element_type=jnp.float32)
    z = logits - jnp.max(logits, axis=-1, keepdims=True)
    return z - jnp.log(jnp.sum(jnp.exp(z), axis=-1, keepdims=True))


# ----------------------------------------------------------------------------
# Kernel 1: all decoder layers fused, activations resident in VMEM
# ----------------------------------------------------------------------------
def fused_decoder_layers_kernel(tgt_lens_ref, enc_lens_ref,          # SMEM scalars
                                x_ref, enc_ref,
                                ln_ref, wqkv1_ref, bqkv1_ref, wo1_ref, bo1_ref,
                                wq2_ref, bq2_ref, wkv2_ref, bkv2_ref,
                                wo2_ref, bo2_ref,
                                wf1_ref, bf1_ref, wf2_ref, bf2_ref,
                                out_ref,
                                acc_ref, smask_ref, emask_ref,
                                *, num_heads, bt):
    l = pl.program_id(1)
    b0 = pl.program_id(0) * bt
    T = x_ref.shape[1]
    S = enc_ref.shape[1]

    # Layer 0: load activations and build the additive masks once per batch
    # tile (reused across all layers).
    @pl.when(l == 0)
    def _init():
        acc_ref[...] = x_ref[...]
        rows = jax.lax.broadcasted_iota(jnp.int32, (T, T), 0)
        cols = jax.lax.broadcasted_iota(jnp.int32, (T, T), 1)
        ecols = jax.lax.broadcasted_iota(jnp.int32, (T, S), 1)
        for j in range(bt):
            t_len = tgt_lens_ref[b0 + j]
            e_len = enc_lens_ref[b0 + j]
            smask_ref[j] = jnp.where((cols > rows) | (cols >= t_len),
                                     MASK_NEG, 0.0).astype(jnp.float32)
            emask_ref[j] = jnp.where(ecols >= e_len,
                                     MASK_NEG, 0.0).astype(jnp.float32)

    x = acc_ref[...]                        # (bt, T, D) f32, layer-resident
    enc = enc_ref[...]                      # (bt, S, D) bf16

    w = (ln_ref[...], wqkv1_ref[...], bqkv1_ref[...], wo1_ref[...], bo1_ref[...],
         wq2_ref[...], bq2_ref[...], wkv2_ref[...], bkv2_ref[...],
         wo2_ref[...], bo2_ref[...],
         wf1_ref[...], bf1_ref[...], wf2_ref[...], bf2_ref[...])
    x_new = _decoder_layer_math(x, enc, smask_ref[...], emask_ref[...],
                                w, num_heads)
    acc_ref[...] = x_new

    @pl.when(l == pl.num_programs(1) - 1)
    def _fin():
        out_ref[...] = x_new


def transformer_decoder_layers_pallas(packed, x, enc, enc_lens, tgt_lens,
                                      num_heads, batch_tile=None):
    B, T, D = x.shape
    S = enc.shape[1]
    L = packed["ln"].shape[0]

    # Fold enough batch rows per step that M = bt*T ~ 256 (fills the MXU)
    # while keeping the activation block small enough for VMEM.
    if batch_tile is None:
        batch_tile = max(1, min(B, (256 + T - 1) // T))
    bt = batch_tile
    B_pad = _round_up(B, bt)
    if B_pad != B:
        pad = B_pad - B
        x = jnp.pad(x, ((0, pad), (0, 0), (0, 0)))
        enc = jnp.pad(enc, ((0, pad), (0, 0), (0, 0)))
        tgt_lens = jnp.pad(tgt_lens, (0, pad), constant_values=1)
        enc_lens = jnp.pad(enc_lens, (0, pad), constant_values=1)

    enc_bf16 = enc.astype(jnp.bfloat16)     # halve encoder HBM/VMEM traffic

    def bmap(b, l, *_):
        return (b, 0, 0)

    def layer_spec(arr):
        trailing = tuple(int(d) for d in arr.shape[1:])
        zeros = (0,) * len(trailing)
        return pl.BlockSpec((None,) + trailing,
                            lambda b, l, *_, _z=zeros: (l,) + _z)

    in_specs = [
        pl.BlockSpec((bt, T, D), bmap),          # embedded targets (f32)
        pl.BlockSpec((bt, S, D), bmap),          # encoder outputs (bf16)
    ] + [layer_spec(packed[k]) for k in PACKED_LAYER_KEYS]

    # Explicit VMEM budget: double-buffered per-layer weight blocks + blocked
    # activations + resident scratch, with headroom.
    def nbytes(shape, dtype):
        n = 1
        for d in shape:
            n *= int(d)
        return n * jnp.dtype(dtype).itemsize

    resident = 0
    for k in PACKED_LAYER_KEYS:
        a = packed[k]
        resident += 2 * nbytes(a.shape[1:], a.dtype)       # double-buffered
    resident += 2 * nbytes((bt, T, D), jnp.float32)        # x in
    resident += 2 * nbytes((bt, S, D), jnp.bfloat16)       # enc in
    resident += 2 * nbytes((bt, T, D), jnp.float32)        # out
    resident += nbytes((bt, T, D), jnp.float32)            # acc scratch
    resident += nbytes((bt, T, T), jnp.float32)            # self-attn mask
    resident += nbytes((bt, T, S), jnp.float32)            # cross-attn mask
    vmem_limit = max(16 << 20, min(int(resident * 2) + (8 << 20), 100 << 20))

    grid_spec = pltpu.PrefetchScalarGridSpec(
        num_scalar_prefetch=2,
        grid=(B_pad // bt, L),
        in_specs=in_specs,
        out_specs=pl.BlockSpec((bt, T, D), bmap),
        scratch_shapes=[pltpu.VMEM((bt, T, D), jnp.float32),
                        pltpu.VMEM((bt, T, T), jnp.float32),
                        pltpu.VMEM((bt, T, S), jnp.float32)],
    )

    out = pl.pallas_call(
        functools.partial(fused_decoder_layers_kernel,
                          num_heads=num_heads, bt=bt),
        out_shape=jax.ShapeDtypeStruct((B_pad, T, D), jnp.float32),
        grid_spec=grid_spec,
        compiler_params=pltpu.CompilerParams(
            dimension_semantics=("parallel", "arbitrary"),
            vmem_limit_bytes=vmem_limit),
    )(tgt_lens.astype(jnp.int32), enc_lens.astype(jnp.int32),
      x, enc_bf16, *[packed[k] for k in PACKED_LAYER_KEYS])
    return out[:B]


# ----------------------------------------------------------------------------
# Kernels 2+3: vocab-tiled fc (no bias) + log_softmax
#   pass 1: online logsumexp over C tiles; pass 2: logits - lse
# ----------------------------------------------------------------------------
def _lse_kernel(x_ref, w_ref, lse_ref, m_scr, l_scr, *, c_valid, tc):
    c = pl.program_id(1)

    @pl.when(c == 0)
    def _():
        m_scr[...] = jnp.full_like(m_scr, -jnp.inf)
        l_scr[...] = jnp.zeros_like(l_scr)

    logits = jnp.dot(x_ref[...].astype(jnp.bfloat16), w_ref[...],
                     preferred_element_type=jnp.float32)
    col = c * tc + jax.lax.broadcasted_iota(jnp.int32, logits.shape, 1)
    logits = jnp.where(col < c_valid, logits, -1e30)         # mask padded vocab

    m_new = jnp.maximum(m_scr[...], jnp.max(logits, axis=-1, keepdims=True))
    alpha = jnp.exp(m_scr[...] - m_new)
    l_scr[...] = alpha * l_scr[...] + jnp.sum(jnp.exp(logits - m_new),
                                              axis=-1, keepdims=True)
    m_scr[...] = m_new

    @pl.when(c == pl.num_programs(1) - 1)
    def _():
        lse_ref[...] = m_scr[...] + jnp.log(l_scr[...])


def _logprob_kernel(x_ref, w_ref, lse_ref, out_ref):
    logits = jnp.dot(x_ref[...].astype(jnp.bfloat16), w_ref[...],
                     preferred_element_type=jnp.float32)
    out_ref[...] = logits - lse_ref[...]


def fc_logsoftmax_pallas(x_mid, fc_w):
    B, T, D = x_mid.shape
    C = fc_w.shape[1]
    M = B * T
    x_flat = x_mid.reshape(M, D)

    tm = min(256, _round_up(M, 8))
    M_pad = _round_up(M, tm)
    tc = min(2048, _round_up(C, 128))
    C_pad = _round_up(C, tc)

    if M_pad != M:
        x_flat = jnp.pad(x_flat, ((0, M_pad - M), (0, 0)))
    w = fc_w if C_pad == C else jnp.pad(fc_w, ((0, 0), (0, C_pad - C)))

    nm, nc = M_pad // tm, C_pad // tc

    lse = pl.pallas_call(
        functools.partial(_lse_kernel, c_valid=C, tc=tc),
        out_shape=jax.ShapeDtypeStruct((M_pad, 1), jnp.float32),
        grid=(nm, nc),
        in_specs=[pl.BlockSpec((tm, D), lambda m, c: (m, 0)),
                  pl.BlockSpec((D, tc), lambda m, c: (0, c))],
        out_specs=pl.BlockSpec((tm, 1), lambda m, c: (m, 0)),
        scratch_shapes=[pltpu.VMEM((tm, 1), jnp.float32),
                        pltpu.VMEM((tm, 1), jnp.float32)],
        compiler_params=pltpu.CompilerParams(
            dimension_semantics=("parallel", "arbitrary")),
    )(x_flat, w)

    logp = pl.pallas_call(
        _logprob_kernel,
        out_shape=jax.ShapeDtypeStruct((M_pad, C_pad), jnp.float32),
        grid=(nm, nc),
        in_specs=[pl.BlockSpec((tm, D), lambda m, c: (m, 0)),
                  pl.BlockSpec((D, tc), lambda m, c: (0, c)),
                  pl.BlockSpec((tm, 1), lambda m, c: (m, 0))],
        out_specs=pl.BlockSpec((tm, tc), lambda m, c: (m, c)),
        compiler_params=pltpu.CompilerParams(
            dimension_semantics=("parallel", "parallel")),
    )(x_flat, w, lse)

    return logp[:M, :C].reshape(B, T, C)


def transformer_decoder_pallas(packed, x, enc, enc_lens, tgt_lens, num_heads):
    x_mid = transformer_decoder_layers_pallas(packed, x, enc, enc_lens,
                                              tgt_lens, num_heads)
    return fc_logsoftmax_pallas(x_mid, packed["fc_w"])


# ----------------------------------------------------------------------------
# Glue: embedding, positional encoding, masks, weight packing (plain JAX)
# ----------------------------------------------------------------------------
def sinusoid_pe(length, d_model):
    pos = jnp.arange(length, dtype=jnp.float32)[:, None]
    div = jnp.exp(jnp.arange(0, d_model, 2, dtype=jnp.float32)
                  * (-(math.log(10000.0) / d_model)))
    pe = jnp.zeros((length, d_model), dtype=jnp.float32)
    pe = pe.at[:, 0::2].set(jnp.sin(pos * div))
    pe = pe.at[:, 1::2].set(jnp.cos(pos * div))
    return pe


def embed_targets(embedding, targets, d_model):
    T = targets.shape[1]
    x = embedding[targets] * math.sqrt(d_model) + sinusoid_pe(T, d_model)[None]
    return x.astype(jnp.float32)


def build_additive_masks(tgt_lens, enc_lens, T, S):
    B = tgt_lens.shape[0]
    rows = jnp.arange(T)[None, :, None]
    cols = jnp.arange(T)[None, None, :]
    masked = (cols > rows) | (cols >= tgt_lens[:, None, None])
    smask = jnp.where(masked, MASK_NEG, 0.0).astype(jnp.float32)
    ecols = jnp.arange(S)[None, None, :]
    emask = jnp.where(ecols >= enc_lens[:, None, None], MASK_NEG, 0.0)
    emask = jnp.broadcast_to(emask, (B, T, S)).astype(jnp.float32)
    return smask, emask


def pack_params(params):
    """Stack per-layer weights along L, fuse QKV / KV (full-width), cast the
    matmul weights to bf16 (biases / layernorm params stay f32)."""
    D = params["fc_w"].shape[0]
    stacks = {k: [] for k in PACKED_LAYER_KEYS}
    for lp in params["layers"]:
        stacks["ln"].append(jnp.stack(
            [lp["ln1_g"], lp["ln1_b"], lp["ln2_g"],
             lp["ln2_b"], lp["ln3_g"], lp["ln3_b"]], axis=0))
        stacks["wqkv1"].append(jnp.concatenate(
            [lp["wq1"], lp["wk1"], lp["wv1"]], axis=1))
        stacks["bqkv1"].append(jnp.concatenate(
            [lp["bq1"], lp["bk1"], lp["bv1"]]).reshape(1, -1))
        stacks["wo1"].append(lp["wo1"])
        stacks["bo1"].append(lp["bo1"].reshape(1, D))
        stacks["wq2"].append(lp["wq2"])
        stacks["bq2"].append(lp["bq2"].reshape(1, -1))
        stacks["wkv2"].append(jnp.concatenate([lp["wk2"], lp["wv2"]], axis=1))
        stacks["bkv2"].append(jnp.concatenate(
            [lp["bk2"], lp["bv2"]]).reshape(1, -1))
        stacks["wo2"].append(lp["wo2"])
        stacks["bo2"].append(lp["bo2"].reshape(1, D))
        stacks["wf1"].append(lp["wf1"])
        stacks["bf1"].append(lp["bf1"].reshape(1, -1))
        stacks["wf2"].append(lp["wf2"])
        stacks["bf2"].append(lp["bf2"].reshape(1, D))

    bf16_keys = {"wqkv1", "wo1", "wq2", "wkv2", "wo2", "wf1", "wf2"}
    packed = {k: jnp.stack(v, axis=0).astype(
                  jnp.bfloat16 if k in bf16_keys else jnp.float32)
              for k, v in stacks.items()}
    packed["fc_w"] = params["fc_w"].astype(jnp.bfloat16)
    return packed


# ----------------------------------------------------------------------------
# Pure-JAX reference (identical packed weights / precision path)
# ----------------------------------------------------------------------------
def transformer_decoder_ref(packed, x, enc, enc_lens, tgt_lens, num_heads):
    B, T, D = x.shape
    S = enc.shape[1]
    smask, emask = build_additive_masks(tgt_lens, enc_lens, T, S)
    enc_bf16 = enc.astype(jnp.bfloat16)
    L = packed["ln"].shape[0]
    for l in range(L):
        w = tuple(packed[k][l] for k in PACKED_LAYER_KEYS)
        x = _decoder_layer_math(x, enc_bf16, smask, emask, w, num_heads)
    logp = _fc_logsoftmax_math(x.reshape(B * T, D), packed["fc_w"])
    return logp.reshape(B, T, -1)


# ----------------------------------------------------------------------------
# Deterministic parameter init (torch-like per-layer layout, packed afterwards)
# ----------------------------------------------------------------------------
def init_params(key, num_classes, d_model, d_ff, num_layers, pad_id):
    keys = iter(jax.random.split(key, 4 + num_layers * 40))

    def nrm(shape, scale=0.05):
        return scale * jax.random.normal(next(keys), shape, dtype=jnp.float32)

    emb = nrm((num_classes, d_model), 1.0).at[pad_id].set(0.0)  # padding row = 0
    layers = []
    for _ in range(num_layers):
        lp = {}
        for name in ("ln1", "ln2", "ln3"):
            lp[name + "_g"] = jnp.ones((d_model,), jnp.float32) + nrm((d_model,))
            lp[name + "_b"] = nrm((d_model,))
        for idx in ("1", "2"):
            for w in ("q", "k", "v", "o"):
                lp["w" + w + idx] = nrm((d_model, d_model))
                lp["b" + w + idx] = nrm((d_model,))
        lp["wf1"] = nrm((d_model, d_ff))
        lp["bf1"] = nrm((d_ff,))
        lp["wf2"] = nrm((d_ff, d_model))
        lp["bf2"] = nrm((d_model,))
        layers.append(lp)
    fc_w = nrm((d_model, num_classes))
    return {"embedding": emb, "layers": layers, "fc_w": fc_w}


# ----------------------------------------------------------------------------
if __name__ == "__main__":
    B, T, S = 2, 8, 10            # batch, target seq len, encoder seq len
    D, H, FF = 32, 4, 64          # d_model, num_heads, d_ff
    L, C = 2, 16                  # num_layers, num_classes
    PAD_ID, SOS_ID, EOS_ID = 0, 1, 2

    key = jax.random.PRNGKey(0)
    k_params, k_tgt, k_enc = jax.random.split(key, 3)

    params = init_params(k_params, C, D, FF, L, PAD_ID)
    packed = pack_params(params)

    # targets in [3, C): no eos tokens -> the torch eos filter is the identity
    targets = jax.random.randint(k_tgt, (B, T), 3, C, dtype=jnp.int32)
    encoder_outputs = jax.random.normal(k_enc, (B, S, D), dtype=jnp.float32)
    target_lengths = jnp.array([T, T - 2], dtype=jnp.int32)
    encoder_output_lengths = jnp.array([S, S - 3], dtype=jnp.int32)

    x = embed_targets(params["embedding"], targets, D)
    enc = encoder_outputs.astype(jnp.float32)

    out = transformer_decoder_pallas(packed, x, enc,
                                     encoder_output_lengths, target_lengths, H)
    out = jax.block_until_ready(out)
    assert out.shape == (B, T, C)
    assert bool(jnp.all(jnp.isfinite(out)))

    ref = transformer_decoder_ref(packed, x, enc,
                                  encoder_output_lengths, target_lengths, H)
    ref = jax.block_until_ready(ref)
    max_diff = float(jnp.max(jnp.abs(out - ref)))
    assert max_diff < 2e-2, f"kernel/reference mismatch: {max_diff}"

    print("KERNEL_OK")
</pallas_src>

<mosaic_0001>
module attributes {stable_mosaic.version = 11 : i64} {
  func.func @fused_decoder_layers_kernel(%arg0: i32, %arg1: i32, %arg2: memref<2xi32, #tpu.memory_space<smem>>, %arg3: memref<2xi32, #tpu.memory_space<smem>>, %arg4: memref<2x8x32xf32, #tpu.memory_space<vmem>>, %arg5: memref<2x10x32xbf16, #tpu.memory_space<vmem>>, %arg6: memref<1x6x32xf32, #tpu.memory_space<vmem>>, %arg7: memref<1x32x96xbf16, #tpu.memory_space<vmem>>, %arg8: memref<1x1x96xf32, #tpu.memory_space<vmem>>, %arg9: memref<1x32x32xbf16, #tpu.memory_space<vmem>>, %arg10: memref<1x1x32xf32, #tpu.memory_space<vmem>>, %arg11: memref<1x32x32xbf16, #tpu.memory_space<vmem>>, %arg12: memref<1x1x32xf32, #tpu.memory_space<vmem>>, %arg13: memref<1x32x64xbf16, #tpu.memory_space<vmem>>, %arg14: memref<1x1x64xf32, #tpu.memory_space<vmem>>, %arg15: memref<1x32x32xbf16, #tpu.memory_space<vmem>>, %arg16: memref<1x1x32xf32, #tpu.memory_space<vmem>>, %arg17: memref<1x32x64xbf16, #tpu.memory_space<vmem>>, %arg18: memref<1x1x64xf32, #tpu.memory_space<vmem>>, %arg19: memref<1x64x32xbf16, #tpu.memory_space<vmem>>, %arg20: memref<1x1x32xf32, #tpu.memory_space<vmem>>, %arg21: memref<2x8x32xf32, #tpu.memory_space<vmem>>, %arg22: memref<2x8x32xf32, #tpu.memory_space<vmem>>, %arg23: memref<2x8x8xf32, #tpu.memory_space<vmem>>, %arg24: memref<2x8x10xf32, #tpu.memory_space<vmem>>) attributes {dimension_semantics = [#tpu.dimension_semantics<parallel>, #tpu.dimension_semantics<arbitrary>], iteration_bounds = array<i64: 1, 2>, scalar_prefetch = 2 : i64, scratch_operands = 3 : i64, tpu.core_type = #tpu.core_type<tc>, window_params = [{transform_indices = @transform_0, window_bounds = array<i64: 2, 8, 32>}, {transform_indices = @transform_1, window_bounds = array<i64: 2, 10, 32>}, {transform_indices = @transform_2, window_bounds = array<i64: 1, 6, 32>}, {transform_indices = @transform_3, window_bounds = array<i64: 1, 32, 96>}, {transform_indices = @transform_4, window_bounds = array<i64: 1, 1, 96>}, {transform_indices = @transform_5, window_bounds = array<i64: 1, 32, 32>}, {transform_indices = @transform_6, window_bounds = array<i64: 1, 1, 32>}, {transform_indices = @transform_7, window_bounds = array<i64: 1, 32, 32>}, {transform_indices = @transform_8, window_bounds = array<i64: 1, 1, 32>}, {transform_indices = @transform_9, window_bounds = array<i64: 1, 32, 64>}, {transform_indices = @transform_10, window_bounds = array<i64: 1, 1, 64>}, {transform_indices = @transform_11, window_bounds = array<i64: 1, 32, 32>}, {transform_indices = @transform_12, window_bounds = array<i64: 1, 1, 32>}, {transform_indices = @transform_13, window_bounds = array<i64: 1, 32, 64>}, {transform_indices = @transform_14, window_bounds = array<i64: 1, 1, 64>}, {transform_indices = @transform_15, window_bounds = array<i64: 1, 64, 32>}, {transform_indices = @transform_16, window_bounds = array<i64: 1, 1, 32>}, {transform_indices = @transform_17, window_bounds = array<i64: 2, 8, 32>}]} {
    %c2_i32 = arith.constant 2 : i32
    %0 = arith.muli %arg0, %c2_i32 : i32
    %c0_i32 = arith.constant 0 : i32
    %1 = arith.cmpi eq, %arg1, %c0_i32 : i32
    %2 = arith.extui %1 : i1 to i32
    %c0_i32_0 = arith.constant 0 : i32
    %3 = arith.cmpi ne, %2, %c0_i32_0 : i32
    scf.if %3 {
      %c0_123 = arith.constant 0 : index
      %c0_124 = arith.constant 0 : index
      %c0_125 = arith.constant 0 : index
      %342 = vector.load %arg4[%c0_123, %c0_124, %c0_125] : memref<2x8x32xf32, #tpu.memory_space<vmem>>, vector<2x8x32xf32>
      %c0_126 = arith.constant 0 : index
      %c0_127 = arith.constant 0 : index
      %c0_128 = arith.constant 0 : index
      %343 = vector.load %arg22[%c0_126, %c0_127, %c0_128] : memref<2x8x32xf32, #tpu.memory_space<vmem>>, vector<2x8x32xf32>
      tpu.vector_store %arg22[%c0_126, %c0_127, %c0_128], %342 {strides = array<i32>} : memref<2x8x32xf32, #tpu.memory_space<vmem>>, vector<2x8x32xf32>,
      %344 = tpu.iota {dimensions = array<i32: 0>} : vector<8x8xi32>
      %345 = tpu.iota {dimensions = array<i32: 1>} : vector<8x8xi32>
      %346 = tpu.iota {dimensions = array<i32: 1>} : vector<8x10xi32>
      %c0_i32_129 = arith.constant 0 : i32
      %347 = arith.addi %0, %c0_i32_129 : i32
      %348 = arith.index_cast %347 : i32 to index
      %349 = memref.load %arg2[%348] : memref<2xi32, #tpu.memory_space<smem>>
      %c0_i32_130 = arith.constant 0 : i32
      %350 = arith.addi %0, %c0_i32_130 : i32
      %351 = arith.index_cast %350 : i32 to index
      %352 = memref.load %arg3[%351] : memref<2xi32, #tpu.memory_space<smem>>
      %353 = arith.cmpi sgt, %345, %344 : vector<8x8xi32>
      %354 = vector.broadcast %349 : i32 to vector<8x8xi32>
      %355 = arith.cmpi sge, %345, %354 : vector<8x8xi32>
      %356 = arith.ori %353, %355 : vector<8x8xi1>
      %cst_131 = arith.constant -1.000000e+09 : f32
      %cst_132 = arith.constant 0.000000e+00 : f32
      %357 = vector.broadcast %cst_131 : f32 to vector<8x8xf32>
      %358 = vector.broadcast %cst_132 : f32 to vector<8x8xf32>
      %359 = arith.select %356, %357, %358 : vector<8x8xi1>, vector<8x8xf32>
      %c0_133 = arith.constant 0 : index
      %c0_134 = arith.constant 0 : index
      %c0_135 = arith.constant 0 : index
      %360 = vector.load %arg23[%c0_133, %c0_134, %c0_135] : memref<2x8x8xf32, #tpu.memory_space<vmem>>, vector<1x8x8xf32>
      %361 = vector.shape_cast %360 : vector<1x8x8xf32> to vector<8x8xf32>
      %362 = vector.shape_cast %359 : vector<8x8xf32> to vector<1x8x8xf32>
      tpu.vector_store %arg23[%c0_133, %c0_134, %c0_135], %362 {strides = array<i32>} : memref<2x8x8xf32, #tpu.memory_space<vmem>>, vector<1x8x8xf32>,
      %363 = vector.broadcast %352 : i32 to vector<8x10xi32>
      %364 = arith.cmpi sge, %346, %363 : vector<8x10xi32>
      %cst_136 = arith.constant -1.000000e+09 : f32
      %cst_137 = arith.constant 0.000000e+00 : f32
      %365 = vector.broadcast %cst_136 : f32 to vector<8x10xf32>
      %366 = vector.broadcast %cst_137 : f32 to vector<8x10xf32>
      %367 = arith.select %364, %365, %366 : vector<8x10xi1>, vector<8x10xf32>
      %c0_138 = arith.constant 0 : index
      %c0_139 = arith.constant 0 : index
      %c0_140 = arith.constant 0 : index
      %368 = vector.load %arg24[%c0_138, %c0_139, %c0_140] : memref<2x8x10xf32, #tpu.memory_space<vmem>>, vector<1x8x10xf32>
      %369 = vector.shape_cast %368 : vector<1x8x10xf32> to vector<8x10xf32>
      %370 = vector.shape_cast %367 : vector<8x10xf32> to vector<1x8x10xf32>
      tpu.vector_store %arg24[%c0_138, %c0_139, %c0_140], %370 {strides = array<i32>} : memref<2x8x10xf32, #tpu.memory_space<vmem>>, vector<1x8x10xf32>,
      %c1_i32_141 = arith.constant 1 : i32
      %371 = arith.addi %0, %c1_i32_141 : i32
      %372 = arith.index_cast %371 : i32 to index
      %373 = memref.load %arg2[%372] : memref<2xi32, #tpu.memory_space<smem>>
      %c1_i32_142 = arith.constant 1 : i32
      %374 = arith.addi %0, %c1_i32_142 : i32
      %375 = arith.index_cast %374 : i32 to index
      %376 = memref.load %arg3[%375] : memref<2xi32, #tpu.memory_space<smem>>
      %377 = arith.cmpi sgt, %345, %344 : vector<8x8xi32>
      %378 = vector.broadcast %373 : i32 to vector<8x8xi32>
      %379 = arith.cmpi sge, %345, %378 : vector<8x8xi32>
      %380 = arith.ori %377, %379 : vector<8x8xi1>
      %cst_143 = arith.constant -1.000000e+09 : f32
      %cst_144 = arith.constant 0.000000e+00 : f32
      %381 = vector.broadcast %cst_143 : f32 to vector<8x8xf32>
      %382 = vector.broadcast %cst_144 : f32 to vector<8x8xf32>
      %383 = arith.select %380, %381, %382 : vector<8x8xi1>, vector<8x8xf32>
      %c1 = arith.constant 1 : index
      %c0_145 = arith.constant 0 : index
      %c0_146 = arith.constant 0 : index
      %384 = vector.load %arg23[%c1, %c0_145, %c0_146] : memref<2x8x8xf32, #tpu.memory_space<vmem>>, vector<1x8x8xf32>
      %385 = vector.shape_cast %384 : vector<1x8x8xf32> to vector<8x8xf32>
      %386 = vector.shape_cast %383 : vector<8x8xf32> to vector<1x8x8xf32>
      tpu.vector_store %arg23[%c1, %c0_145, %c0_146], %386 {strides = array<i32>} : memref<2x8x8xf32, #tpu.memory_space<vmem>>, vector<1x8x8xf32>,
      %387 = vector.broadcast %376 : i32 to vector<8x10xi32>
      %388 = arith.cmpi sge, %346, %387 : vector<8x10xi32>
      %cst_147 = arith.constant -1.000000e+09 : f32
      %cst_148 = arith.constant 0.000000e+00 : f32
      %389 = vector.broadcast %cst_147 : f32 to vector<8x10xf32>
      %390 = vector.broadcast %cst_148 : f32 to vector<8x10xf32>
      %391 = arith.select %388, %389, %390 : vector<8x10xi1>, vector<8x10xf32>
      %c1_149 = arith.constant 1 : index
      %c0_150 = arith.constant 0 : index
      %c0_151 = arith.constant 0 : index
      %392 = vector.load %arg24[%c1_149, %c0_150, %c0_151] : memref<2x8x10xf32, #tpu.memory_space<vmem>>, vector<1x8x10xf32>
      %393 = vector.shape_cast %392 : vector<1x8x10xf32> to vector<8x10xf32>
      %394 = vector.shape_cast %391 : vector<8x10xf32> to vector<1x8x10xf32>
      tpu.vector_store %arg24[%c1_149, %c0_150, %c0_151], %394 {strides = array<i32>} : memref<2x8x10xf32, #tpu.memory_space<vmem>>, vector<1x8x10xf32>,
    } else {
    }
    %c0 = arith.constant 0 : index
    %c0_1 = arith.constant 0 : index
    %c0_2 = arith.constant 0 : index
    %4 = vector.load %arg22[%c0, %c0_1, %c0_2] : memref<2x8x32xf32, #tpu.memory_space<vmem>>, vector<2x8x32xf32>
    %c0_3 = arith.constant 0 : index
    %c0_4 = arith.constant 0 : index
    %c0_5 = arith.constant 0 : index
    %5 = vector.load %arg5[%c0_3, %c0_4, %c0_5] : memref<2x10x32xbf16, #tpu.memory_space<vmem>>, vector<2x10x32xbf16>
    %c0_6 = arith.constant 0 : index
    %c0_7 = arith.constant 0 : index
    %c0_8 = arith.constant 0 : index
    %6 = vector.load %arg6[%c0_6, %c0_7, %c0_8] : memref<1x6x32xf32, #tpu.memory_space<vmem>>, vector<1x6x32xf32>
    %7 = vector.shape_cast %6 : vector<1x6x32xf32> to vector<6x32xf32>
    %c0_9 = arith.constant 0 : index
    %c0_10 = arith.constant 0 : index
    %c0_11 = arith.constant 0 : index
    %8 = vector.load %arg7[%c0_9, %c0_10, %c0_11] : memref<1x32x96xbf16, #tpu.memory_space<vmem>>, vector<1x32x96xbf16>
    %9 = vector.shape_cast %8 : vector<1x32x96xbf16> to vector<32x96xbf16>
    %c0_12 = arith.constant 0 : index
    %c0_13 = arith.constant 0 : index
    %c0_14 = arith.constant 0 : index
    %10 = vector.load %arg8[%c0_12, %c0_13, %c0_14] : memref<1x1x96xf32, #tpu.memory_space<vmem>>, vector<1x1x96xf32>
    %11 = vector.shape_cast %10 : vector<1x1x96xf32> to vector<1x96xf32>
    %c0_15 = arith.constant 0 : index
    %c0_16 = arith.constant 0 : index
    %c0_17 = arith.constant 0 : index
    %12 = vector.load %arg9[%c0_15, %c0_16, %c0_17] : memref<1x32x32xbf16, #tpu.memory_space<vmem>>, vector<1x32x32xbf16>
    %13 = vector.shape_cast %12 : vector<1x32x32xbf16> to vector<32x32xbf16>
    %c0_18 = arith.constant 0 : index
    %c0_19 = arith.constant 0 : index
    %c0_20 = arith.constant 0 : index
    %14 = vector.load %arg10[%c0_18, %c0_19, %c0_20] : memref<1x1x32xf32, #tpu.memory_space<vmem>>, vector<1x1x32xf32>
    %15 = vector.shape_cast %14 : vector<1x1x32xf32> to vector<1x32xf32>
    %c0_21 = arith.constant 0 : index
    %c0_22 = arith.constant 0 : index
    %c0_23 = arith.constant 0 : index
    %16 = vector.load %arg11[%c0_21, %c0_22, %c0_23] : memref<1x32x32xbf16, #tpu.memory_space<vmem>>, vector<1x32x32xbf16>
    %17 = vector.shape_cast %16 : vector<1x32x32xbf16> to vector<32x32xbf16>
    %c0_24 = arith.constant 0 : index
    %c0_25 = arith.constant 0 : index
    %c0_26 = arith.constant 0 : index
    %18 = vector.load %arg12[%c0_24, %c0_25, %c0_26] : memref<1x1x32xf32, #tpu.memory_space<vmem>>, vector<1x1x32xf32>
    %19 = vector.shape_cast %18 : vector<1x1x32xf32> to vector<1x32xf32>
    %c0_27 = arith.constant 0 : index
    %c0_28 = arith.constant 0 : index
    %c0_29 = arith.constant 0 : index
    %20 = vector.load %arg13[%c0_27, %c0_28, %c0_29] : memref<1x32x64xbf16, #tpu.memory_space<vmem>>, vector<1x32x64xbf16>
    %21 = vector.shape_cast %20 : vector<1x32x64xbf16> to vector<32x64xbf16>
    %c0_30 = arith.constant 0 : index
    %c0_31 = arith.constant 0 : index
    %c0_32 = arith.constant 0 : index
    %22 = vector.load %arg14[%c0_30, %c0_31, %c0_32] : memref<1x1x64xf32, #tpu.memory_space<vmem>>, vector<1x1x64xf32>
    %23 = vector.shape_cast %22 : vector<1x1x64xf32> to vector<1x64xf32>
    %c0_33 = arith.constant 0 : index
    %c0_34 = arith.constant 0 : index
    %c0_35 = arith.constant 0 : index
    %24 = vector.load %arg15[%c0_33, %c0_34, %c0_35] : memref<1x32x32xbf16, #tpu.memory_space<vmem>>, vector<1x32x32xbf16>
    %25 = vector.shape_cast %24 : vector<1x32x32xbf16> to vector<32x32xbf16>
    %c0_36 = arith.constant 0 : index
    %c0_37 = arith.constant 0 : index
    %c0_38 = arith.constant 0 : index
    %26 = vector.load %arg16[%c0_36, %c0_37, %c0_38] : memref<1x1x32xf32, #tpu.memory_space<vmem>>, vector<1x1x32xf32>
    %27 = vector.shape_cast %26 : vector<1x1x32xf32> to vector<1x32xf32>
    %c0_39 = arith.constant 0 : index
    %c0_40 = arith.constant 0 : index
    %c0_41 = arith.constant 0 : index
    %28 = vector.load %arg17[%c0_39, %c0_40, %c0_41] : memref<1x32x64xbf16, #tpu.memory_space<vmem>>, vector<1x32x64xbf16>
    %29 = vector.shape_cast %28 : vector<1x32x64xbf16> to vector<32x64xbf16>
    %c0_42 = arith.constant 0 : index
    %c0_43 = arith.constant 0 : index
    %c0_44 = arith.constant 0 : index
    %30 = vector.load %arg18[%c0_42, %c0_43, %c0_44] : memref<1x1x64xf32, #tpu.memory_space<vmem>>, vector<1x1x64xf32>
    %31 = vector.shape_cast %30 : vector<1x1x64xf32> to vector<1x64xf32>
    %c0_45 = arith.constant 0 : index
    %c0_46 = arith.constant 0 : index
    %c0_47 = arith.constant 0 : index
    %32 = vector.load %arg19[%c0_45, %c0_46, %c0_47] : memref<1x64x32xbf16, #tpu.memory_space<vmem>>, vector<1x64x32xbf16>
    %33 = vector.shape_cast %32 : vector<1x64x32xbf16> to vector<64x32xbf16>
    %c0_48 = arith.constant 0 : index
    %c0_49 = arith.constant 0 : index
    %c0_50 = arith.constant 0 : index
    %34 = vector.load %arg20[%c0_48, %c0_49, %c0_50] : memref<1x1x32xf32, #tpu.memory_space<vmem>>, vector<1x1x32xf32>
    %35 = vector.shape_cast %34 : vector<1x1x32xf32> to vector<1x32xf32>
    %c0_51 = arith.constant 0 : index
    %c0_52 = arith.constant 0 : index
    %c0_53 = arith.constant 0 : index
    %36 = vector.load %arg23[%c0_51, %c0_52, %c0_53] : memref<2x8x8xf32, #tpu.memory_space<vmem>>, vector<2x8x8xf32>
    %c0_54 = arith.constant 0 : index
    %c0_55 = arith.constant 0 : index
    %c0_56 = arith.constant 0 : index
    %37 = vector.load %arg24[%c0_54, %c0_55, %c0_56] : memref<2x8x10xf32, #tpu.memory_space<vmem>>, vector<2x8x10xf32>
    %38 = vector.extract_strided_slice %7 {offsets = [0, 0], sizes = [1, 32], strides = [1, 1]} : vector<6x32xf32> to vector<1x32xf32>
    %39 = vector.extract_strided_slice %7 {offsets = [1, 0], sizes = [1, 32], strides = [1, 1]} : vector<6x32xf32> to vector<1x32xf32>
    %cst = arith.constant dense<0.000000e+00> : vector<2x8xf32>
    %40 = vector.multi_reduction <add>, %4, %cst [2] : vector<2x8x32xf32> to vector<2x8xf32>
    %41 = vector.shape_cast %40 : vector<2x8xf32> to vector<2x8x1xf32>
    %cst_57 = arith.constant 3.200000e+01 : f32
    %42 = vector.broadcast %cst_57 : f32 to vector<2x8x1xf32>
    %43 = arith.divf %41, %42 : vector<2x8x1xf32>
    %44 = vector.broadcast %43 : vector<2x8x1xf32> to vector<2x8x32xf32>
    %45 = arith.subf %4, %44 : vector<2x8x32xf32>
    %46 = arith.mulf %45, %45 : vector<2x8x32xf32>
    %cst_58 = arith.constant dense<0.000000e+00> : vector<2x8xf32>
    %47 = vector.multi_reduction <add>, %46, %cst_58 [2] : vector<2x8x32xf32> to vector<2x8xf32>
    %48 = vector.shape_cast %47 : vector<2x8xf32> to vector<2x8x1xf32>
    %cst_59 = arith.constant 3.200000e+01 : f32
    %49 = vector.broadcast %cst_59 : f32 to vector<2x8x1xf32>
    %50 = arith.divf %48, %49 : vector<2x8x1xf32>
    %51 = vector.broadcast %43 : vector<2x8x1xf32> to vector<2x8x32xf32>
    %52 = arith.subf %4, %51 : vector<2x8x32xf32>
    %cst_60 = arith.constant 9.99999974E-6 : f32
    %53 = vector.broadcast %cst_60 : f32 to vector<2x8x1xf32>
    %54 = arith.addf %50, %53 : vector<2x8x1xf32>
    %55 = math.rsqrt %54 : vector<2x8x1xf32>
    %56 = vector.broadcast %55 : vector<2x8x1xf32> to vector<2x8x32xf32>
    %57 = arith.mulf %52, %56 : vector<2x8x32xf32>
    %58 = vector.shape_cast %38 : vector<1x32xf32> to vector<1x1x32xf32>
    %59 = vector.broadcast %58 : vector<1x1x32xf32> to vector<2x8x32xf32>
    %60 = arith.mulf %57, %59 : vector<2x8x32xf32>
    %61 = vector.shape_cast %39 : vector<1x32xf32> to vector<1x1x32xf32>
    %62 = vector.broadcast %61 : vector<1x1x32xf32> to vector<2x8x32xf32>
    %63 = arith.addf %60, %62 : vector<2x8x32xf32>
    %64 = vector.shape_cast %63 : vector<2x8x32xf32> to vector<16x32xf32>
    %65 = arith.truncf %64 : vector<16x32xf32> to vector<16x32xbf16>
    %cst_61 = arith.constant dense<0.000000e+00> : vector<16x96xf32>
    %66 = tpu.matmul %65, %9, %cst_61 {dimension_numbers = #tpu.dot_dimension_numbers<[1], [0], [0], [1], [0, 0, 1, 1], [], []>} : vector<16x32xbf16>, vector<32x96xbf16>, vector<16x96xf32> -> vector<16x96xf32>
    %67 = vector.broadcast %11 : vector<1x96xf32> to vector<16x96xf32>
    %68 = arith.addf %66, %67 : vector<16x96xf32>
    %69 = vector.extract_strided_slice %68 {offsets = [0, 0], sizes = [16, 32], strides = [1, 1]} : vector<16x96xf32> to vector<16x32xf32>
    %70 = vector.shape_cast %69 : vector<16x32xf32> to vector<2x8x32xf32>
    %71 = vector.extract_strided_slice %68 {offsets = [0, 32], sizes = [16, 32], strides = [1, 1]} : vector<16x96xf32> to vector<16x32xf32>
    %72 = vector.shape_cast %71 : vector<16x32xf32> to vector<2x8x32xf32>
    %73 = vector.extract_strided_slice %68 {offsets = [0, 64], sizes = [16, 32], strides = [1, 1]} : vector<16x96xf32> to vector<16x32xf32>
    %74 = vector.shape_cast %73 : vector<16x32xf32> to vector<2x8x32xf32>
    %75 = vector.extract_strided_slice %70 {offsets = [0, 0, 0], sizes = [2, 8, 8], strides = [1, 1, 1]} : vector<2x8x32xf32> to vector<2x8x8xf32>
    %76 = arith.truncf %75 : vector<2x8x8xf32> to vector<2x8x8xbf16>
    %77 = vector.extract_strided_slice %72 {offsets = [0, 0, 0], sizes = [2, 8, 8], strides = [1, 1, 1]} : vector<2x8x32xf32> to vector<2x8x8xf32>
    %78 = arith.truncf %77 : vector<2x8x8xf32> to vector<2x8x8xbf16>
    "tpu.trace_start"() <{level = 10 : i32, message = "btk,bsk->bts"}> : () -> ()
    %cst_62 = arith.constant dense<0.000000e+00> : vector<2x8x8xf32>
    %79 = tpu.matmul %76, %78, %cst_62 {dimension_numbers = #tpu.dot_dimension_numbers<[2], [2], [1], [1], [0, 0, 0, 1, 1, 1], [0], [0]>} : vector<2x8x8xbf16>, vector<2x8x8xbf16>, vector<2x8x8xf32> -> vector<2x8x8xf32>
    "tpu.trace_stop"() : () -> ()
    %cst_63 = arith.constant 0.353553385 : f32
    %80 = vector.broadcast %cst_63 : f32 to vector<2x8x8xf32>
    %81 = arith.mulf %79, %80 : vector<2x8x8xf32>
    %82 = arith.addf %81, %36 : vector<2x8x8xf32>
    %cst_64 = arith.constant dense<0xFF800000> : vector<2x8xf32>
    %83 = vector.multi_reduction <maximumf>, %82, %cst_64 [2] : vector<2x8x8xf32> to vector<2x8xf32>
    %84 = vector.shape_cast %83 : vector<2x8xf32> to vector<2x8x1xf32>
    %85 = vector.broadcast %84 : vector<2x8x1xf32> to vector<2x8x8xf32>
    %86 = arith.subf %82, %85 : vector<2x8x8xf32>
    %87 = math.exp %86 : vector<2x8x8xf32>
    %cst_65 = arith.constant dense<0.000000e+00> : vector<2x8xf32>
    %88 = vector.multi_reduction <add>, %87, %cst_65 [2] : vector<2x8x8xf32> to vector<2x8xf32>
    %89 = vector.shape_cast %88 : vector<2x8xf32> to vector<2x8x1xf32>
    %90 = vector.broadcast %89 : vector<2x8x1xf32> to vector<2x8x8xf32>
    %91 = arith.divf %87, %90 : vector<2x8x8xf32>
    %92 = arith.truncf %91 : vector<2x8x8xf32> to vector<2x8x8xbf16>
    %93 = vector.extract_strided_slice %74 {offsets = [0, 0, 0], sizes = [2, 8, 8], strides = [1, 1, 1]} : vector<2x8x32xf32> to vector<2x8x8xf32>
    %94 = arith.truncf %93 : vector<2x8x8xf32> to vector<2x8x8xbf16>
    "tpu.trace_start"() <{level = 10 : i32, message = "bts,bsk->btk"}> : () -> ()
    %cst_66 = arith.constant dense<0.000000e+00> : vector<2x8x8xf32>
    %95 = tpu.matmul %92, %94, %cst_66 {dimension_numbers = #tpu.dot_dimension_numbers<[2], [1], [1], [2], [0, 0, 0, 1, 1, 2], [0], [0]>} : vector<2x8x8xbf16>, vector<2x8x8xbf16>, vector<2x8x8xf32> -> vector<2x8x8xf32>
    "tpu.trace_stop"() : () -> ()
    %96 = vector.extract_strided_slice %70 {offsets = [0, 0, 8], sizes = [2, 8, 8], strides = [1, 1, 1]} : vector<2x8x32xf32> to vector<2x8x8xf32>
    %97 = arith.truncf %96 : vector<2x8x8xf32> to vector<2x8x8xbf16>
    %98 = vector.extract_strided_slice %72 {offsets = [0, 0, 8], sizes = [2, 8, 8], strides = [1, 1, 1]} : vector<2x8x32xf32> to vector<2x8x8xf32>
    %99 = arith.truncf %98 : vector<2x8x8xf32> to vector<2x8x8xbf16>
    "tpu.trace_start"() <{level = 10 : i32, message = "btk,bsk->bts"}> : () -> ()
    %cst_67 = arith.constant dense<0.000000e+00> : vector<2x8x8xf32>
    %100 = tpu.matmul %97, %99, %cst_67 {dimension_numbers = #tpu.dot_dimension_numbers<[2], [2], [1], [1], [0, 0, 0, 1, 1, 1], [0], [0]>} : vector<2x8x8xbf16>, vector<2x8x8xbf16>, vector<2x8x8xf32> -> vector<2x8x8xf32>
    "tpu.trace_stop"() : () -> ()
    %cst_68 = arith.constant 0.353553385 : f32
    %101 = vector.broadcast %cst_68 : f32 to vector<2x8x8xf32>
    %102 = arith.mulf %100, %101 : vector<2x8x8xf32>
    %103 = arith.addf %102, %36 : vector<2x8x8xf32>
    %cst_69 = arith.constant dense<0xFF800000> : vector<2x8xf32>
    %104 = vector.multi_reduction <maximumf>, %103, %cst_69 [2] : vector<2x8x8xf32> to vector<2x8xf32>
    %105 = vector.shape_cast %104 : vector<2x8xf32> to vector<2x8x1xf32>
    %106 = vector.broadcast %105 : vector<2x8x1xf32> to vector<2x8x8xf32>
    %107 = arith.subf %103, %106 : vector<2x8x8xf32>
    %108 = math.exp %107 : vector<2x8x8xf32>
    %cst_70 = arith.constant dense<0.000000e+00> : vector<2x8xf32>
    %109 = vector.multi_reduction <add>, %108, %cst_70 [2] : vector<2x8x8xf32> to vector<2x8xf32>
    %110 = vector.shape_cast %109 : vector<2x8xf32> to vector<2x8x1xf32>
    %111 = vector.broadcast %110 : vector<2x8x1xf32> to vector<2x8x8xf32>
    %112 = arith.divf %108, %111 : vector<2x8x8xf32>
    %113 = arith.truncf %112 : vector<2x8x8xf32> to vector<2x8x8xbf16>
    %114 = vector.extract_strided_slice %74 {offsets = [0, 0, 8], sizes = [2, 8, 8], strides = [1, 1, 1]} : vector<2x8x32xf32> to vector<2x8x8xf32>
    %115 = arith.truncf %114 : vector<2x8x8xf32> to vector<2x8x8xbf16>
    "tpu.trace_start"() <{level = 10 : i32, message = "bts,bsk->btk"}> : () -> ()
    %cst_71 = arith.constant dense<0.000000e+00> : vector<2x8x8xf32>
    %116 = tpu.matmul %113, %115, %cst_71 {dimension_numbers = #tpu.dot_dimension_numbers<[2], [1], [1], [2], [0, 0, 0, 1, 1, 2], [0], [0]>} : vector<2x8x8xbf16>, vector<2x8x8xbf16>, vector<2x8x8xf32> -> vector<2x8x8xf32>
    "tpu.trace_stop"() : () -> ()
    %117 = vector.extract_strided_slice %70 {offsets = [0, 0, 16], sizes = [2, 8, 8], strides = [1, 1, 1]} : vector<2x8x32xf32> to vector<2x8x8xf32>
    %118 = arith.truncf %117 : vector<2x8x8xf32> to vector<2x8x8xbf16>
    %119 = vector.extract_strided_slice %72 {offsets = [0, 0, 16], sizes = [2, 8, 8], strides = [1, 1, 1]} : vector<2x8x32xf32> to vector<2x8x8xf32>
    %120 = arith.truncf %119 : vector<2x8x8xf32> to vector<2x8x8xbf16>
    "tpu.trace_start"() <{level = 10 : i32, message = "btk,bsk->bts"}> : () -> ()
    %cst_72 = arith.constant dense<0.000000e+00> : vector<2x8x8xf32>
    %121 = tpu.matmul %118, %120, %cst_72 {dimension_numbers = #tpu.dot_dimension_numbers<[2], [2], [1], [1], [0, 0, 0, 1, 1, 1], [0], [0]>} : vector<2x8x8xbf16>, vector<2x8x8xbf16>, vector<2x8x8xf32> -> vector<2x8x8xf32>
    "tpu.trace_stop"() : () -> ()
    %cst_73 = arith.constant 0.353553385 : f32
    %122 = vector.broadcast %cst_73 : f32 to vector<2x8x8xf32>
    %123 = arith.mulf %121, %122 : vector<2x8x8xf32>
    %124 = arith.addf %123, %36 : vector<2x8x8xf32>
    %cst_74 = arith.constant dense<0xFF800000> : vector<2x8xf32>
    %125 = vector.multi_reduction <maximumf>, %124, %cst_74 [2] : vector<2x8x8xf32> to vector<2x8xf32>
    %126 = vector.shape_cast %125 : vector<2x8xf32> to vector<2x8x1xf32>
    %127 = vector.broadcast %126 : vector<2x8x1xf32> to vector<2x8x8xf32>
    %128 = arith.subf %124, %127 : vector<2x8x8xf32>
    %129 = math.exp %128 : vector<2x8x8xf32>
    %cst_75 = arith.constant dense<0.000000e+00> : vector<2x8xf32>
    %130 = vector.multi_reduction <add>, %129, %cst_75 [2] : vector<2x8x8xf32> to vector<2x8xf32>
    %131 = vector.shape_cast %130 : vector<2x8xf32> to vector<2x8x1xf32>
    %132 = vector.broadcast %131 : vector<2x8x1xf32> to vector<2x8x8xf32>
    %133 = arith.divf %129, %132 : vector<2x8x8xf32>
    %134 = arith.truncf %133 : vector<2x8x8xf32> to vector<2x8x8xbf16>
    %135 = vector.extract_strided_slice %74 {offsets = [0, 0, 16], sizes = [2, 8, 8], strides = [1, 1, 1]} : vector<2x8x32xf32> to vector<2x8x8xf32>
    %136 = arith.truncf %135 : vector<2x8x8xf32> to vector<2x8x8xbf16>
    "tpu.trace_start"() <{level = 10 : i32, message = "bts,bsk->btk"}> : () -> ()
    %cst_76 = arith.constant dense<0.000000e+00> : vector<2x8x8xf32>
    %137 = tpu.matmul %134, %136, %cst_76 {dimension_numbers = #tpu.dot_dimension_numbers<[2], [1], [1], [2], [0, 0, 0, 1, 1, 2], [0], [0]>} : vector<2x8x8xbf16>, vector<2x8x8xbf16>, vector<2x8x8xf32> -> vector<2x8x8xf32>
    "tpu.trace_stop"() : () -> ()
    %138 = vector.extract_strided_slice %70 {offsets = [0, 0, 24], sizes = [2, 8, 8], strides = [1, 1, 1]} : vector<2x8x32xf32> to vector<2x8x8xf32>
    %139 = arith.truncf %138 : vector<2x8x8xf32> to vector<2x8x8xbf16>
    %140 = vector.extract_strided_slice %72 {offsets = [0, 0, 24], sizes = [2, 8, 8], strides = [1, 1, 1]} : vector<2x8x32xf32> to vector<2x8x8xf32>
    %141 = arith.truncf %140 : vector<2x8x8xf32> to vector<2x8x8xbf16>
    "tpu.trace_start"() <{level = 10 : i32, message = "btk,bsk->bts"}> : () -> ()
    %cst_77 = arith.constant dense<0.000000e+00> : vector<2x8x8xf32>
    %142 = tpu.matmul %139, %141, %cst_77 {dimension_numbers = #tpu.dot_dimension_numbers<[2], [2], [1], [1], [0, 0, 0, 1, 1, 1], [0], [0]>} : vector<2x8x8xbf16>, vector<2x8x8xbf16>, vector<2x8x8xf32> -> vector<2x8x8xf32>
    "tpu.trace_stop"() : () -> ()
    %cst_78 = arith.constant 0.353553385 : f32
    %143 = vector.broadcast %cst_78 : f32 to vector<2x8x8xf32>
    %144 = arith.mulf %142, %143 : vector<2x8x8xf32>
    %145 = arith.addf %144, %36 : vector<2x8x8xf32>
    %cst_79 = arith.constant dense<0xFF800000> : vector<2x8xf32>
    %146 = vector.multi_reduction <maximumf>, %145, %cst_79 [2] : vector<2x8x8xf32> to vector<2x8xf32>
    %147 = vector.shape_cast %146 : vector<2x8xf32> to vector<2x8x1xf32>
    %148 = vector.broadcast %147 : vector<2x8x1xf32> to vector<2x8x8xf32>
    %149 = arith.subf %145, %148 : vector<2x8x8xf32>
    %150 = math.exp %149 : vector<2x8x8xf32>
    %cst_80 = arith.constant dense<0.000000e+00> : vector<2x8xf32>
    %151 = vector.multi_reduction <add>, %150, %cst_80 [2] : vector<2x8x8xf32> to vector<2x8xf32>
    %152 = vector.shape_cast %151 : vector<2x8xf32> to vector<2x8x1xf32>
    %153 = vector.broadcast %152 : vector<2x8x1xf32> to vector<2x8x8xf32>
    %154 = arith.divf %150, %153 : vector<2x8x8xf32>
    %155 = arith.truncf %154 : vector<2x8x8xf32> to vector<2x8x8xbf16>
    %156 = vector.extract_strided_slice %74 {offsets = [0, 0, 24], sizes = [2, 8, 8], strides = [1, 1, 1]} : vector<2x8x32xf32> to vector<2x8x8xf32>
    %157 = arith.truncf %156 : vector<2x8x8xf32> to vector<2x8x8xbf16>
    "tpu.trace_start"() <{level = 10 : i32, message = "bts,bsk->btk"}> : () -> ()
    %cst_81 = arith.constant dense<0.000000e+00> : vector<2x8x8xf32>
    %158 = tpu.matmul %155, %157, %cst_81 {dimension_numbers = #tpu.dot_dimension_numbers<[2], [1], [1], [2], [0, 0, 0, 1, 1, 2], [0], [0]>} : vector<2x8x8xbf16>, vector<2x8x8xbf16>, vector<2x8x8xf32> -> vector<2x8x8xf32>
    "tpu.trace_stop"() : () -> ()
    %159 = tpu.concatenate %95, %116, %137, %158 in 2 : vector<2x8x8xf32>, vector<2x8x8xf32>, vector<2x8x8xf32>, vector<2x8x8xf32> -> vector<2x8x32xf32>
    %160 = vector.shape_cast %159 : vector<2x8x32xf32> to vector<16x32xf32>
    %161 = arith.truncf %160 : vector<16x32xf32> to vector<16x32xbf16>
    %cst_82 = arith.constant dense<0.000000e+00> : vector<16x32xf32>
    %162 = tpu.matmul %161, %13, %cst_82 {dimension_numbers = #tpu.dot_dimension_numbers<[1], [0], [0], [1], [0, 0, 1, 1], [], []>} : vector<16x32xbf16>, vector<32x32xbf16>, vector<16x32xf32> -> vector<16x32xf32>
    %163 = vector.broadcast %15 : vector<1x32xf32> to vector<16x32xf32>
    %164 = arith.addf %162, %163 : vector<16x32xf32>
    %165 = vector.shape_cast %164 : vector<16x32xf32> to vector<2x8x32xf32>
    %166 = arith.addf %4, %165 : vector<2x8x32xf32>
    %167 = vector.extract_strided_slice %7 {offsets = [2, 0], sizes = [1, 32], strides = [1, 1]} : vector<6x32xf32> to vector<1x32xf32>
    %168 = vector.extract_strided_slice %7 {offsets = [3, 0], sizes = [1, 32], strides = [1, 1]} : vector<6x32xf32> to vector<1x32xf32>
    %cst_83 = arith.constant dense<0.000000e+00> : vector<2x8xf32>
    %169 = vector.multi_reduction <add>, %166, %cst_83 [2] : vector<2x8x32xf32> to vector<2x8xf32>
    %170 = vector.shape_cast %169 : vector<2x8xf32> to vector<2x8x1xf32>
    %cst_84 = arith.constant 3.200000e+01 : f32
    %171 = vector.broadcast %cst_84 : f32 to vector<2x8x1xf32>
    %172 = arith.divf %170, %171 : vector<2x8x1xf32>
    %173 = vector.broadcast %172 : vector<2x8x1xf32> to vector<2x8x32xf32>
    %174 = arith.subf %166, %173 : vector<2x8x32xf32>
    %175 = arith.mulf %174, %174 : vector<2x8x32xf32>
    %cst_85 = arith.constant dense<0.000000e+00> : vector<2x8xf32>
    %176 = vector.multi_reduction <add>, %175, %cst_85 [2] : vector<2x8x32xf32> to vector<2x8xf32>
    %177 = vector.shape_cast %176 : vector<2x8xf32> to vector<2x8x1xf32>
    %cst_86 = arith.constant 3.200000e+01 : f32
    %178 = vector.broadcast %cst_86 : f32 to vector<2x8x1xf32>
    %179 = arith.divf %177, %178 : vector<2x8x1xf32>
    %180 = vector.broadcast %172 : vector<2x8x1xf32> to vector<2x8x32xf32>
    %181 = arith.subf %166, %180 : vector<2x8x32xf32>
    %cst_87 = arith.constant 9.99999974E-6 : f32
    %182 = vector.broadcast %cst_87 : f32 to vector<2x8x1xf32>
    %183 = arith.addf %179, %182 : vector<2x8x1xf32>
    %184 = math.rsqrt %183 : vector<2x8x1xf32>
    %185 = vector.broadcast %184 : vector<2x8x1xf32> to vector<2x8x32xf32>
    %186 = arith.mulf %181, %185 : vector<2x8x32xf32>
    %187 = vector.shape_cast %167 : vector<1x32xf32> to vector<1x1x32xf32>
    %188 = vector.broadcast %187 : vector<1x1x32xf32> to vector<2x8x32xf32>
    %189 = arith.mulf %186, %188 : vector<2x8x32xf32>
    %190 = vector.shape_cast %168 : vector<1x32xf32> to vector<1x1x32xf32>
    %191 = vector.broadcast %190 : vector<1x1x32xf32> to vector<2x8x32xf32>
    %192 = arith.addf %189, %191 : vector<2x8x32xf32>
    %193 = vector.shape_cast %192 : vector<2x8x32xf32> to vector<16x32xf32>
    %194 = arith.truncf %193 : vector<16x32xf32> to vector<16x32xbf16>
    %cst_88 = arith.constant dense<0.000000e+00> : vector<16x32xf32>
    %195 = tpu.matmul %194, %17, %cst_88 {dimension_numbers = #tpu.dot_dimension_numbers<[1], [0], [0], [1], [0, 0, 1, 1], [], []>} : vector<16x32xbf16>, vector<32x32xbf16>, vector<16x32xf32> -> vector<16x32xf32>
    %196 = vector.broadcast %19 : vector<1x32xf32> to vector<16x32xf32>
    %197 = arith.addf %195, %196 : vector<16x32xf32>
    %198 = vector.shape_cast %197 : vector<16x32xf32> to vector<2x8x32xf32>
    %199 = vector.shape_cast %5 : vector<2x10x32xbf16> to vector<20x32xbf16>
    %cst_89 = arith.constant dense<0.000000e+00> : vector<20x64xf32>
    %200 = tpu.matmul %199, %21, %cst_89 {dimension_numbers = #tpu.dot_dimension_numbers<[1], [0], [0], [1], [0, 0, 1, 1], [], []>} : vector<20x32xbf16>, vector<32x64xbf16>, vector<20x64xf32> -> vector<20x64xf32>
    %201 = vector.broadcast %23 : vector<1x64xf32> to vector<20x64xf32>
    %202 = arith.addf %200, %201 : vector<20x64xf32>
    %203 = vector.extract_strided_slice %202 {offsets = [0, 0], sizes = [20, 32], strides = [1, 1]} : vector<20x64xf32> to vector<20x32xf32>
    %204 = vector.shape_cast %203 : vector<20x32xf32> to vector<2x10x32xf32>
    %205 = vector.extract_strided_slice %202 {offsets = [0, 32], sizes = [20, 32], strides = [1, 1]} : vector<20x64xf32> to vector<20x32xf32>
    %206 = vector.shape_cast %205 : vector<20x32xf32> to vector<2x10x32xf32>
    %207 = vector.extract_strided_slice %198 {offsets = [0, 0, 0], sizes = [2, 8, 8], strides = [1, 1, 1]} : vector<2x8x32xf32> to vector<2x8x8xf32>
    %208 = arith.truncf %207 : vector<2x8x8xf32> to vector<2x8x8xbf16>
    %209 = vector.extract_strided_slice %204 {offsets = [0, 0, 0], sizes = [2, 10, 8], strides = [1, 1, 1]} : vector<2x10x32xf32> to vector<2x10x8xf32>
    %210 = arith.truncf %209 : vector<2x10x8xf32> to vector<2x10x8xbf16>
    "tpu.trace_start"() <{level = 10 : i32, message = "btk,bsk->bts"}> : () -> ()
    %cst_90 = arith.constant dense<0.000000e+00> : vector<2x8x10xf32>
    %211 = tpu.matmul %208, %210, %cst_90 {dimension_numbers = #tpu.dot_dimension_numbers<[2], [2], [1], [1], [0, 0, 0, 1, 1, 1], [0], [0]>} : vector<2x8x8xbf16>, vector<2x10x8xbf16>, vector<2x8x10xf32> -> vector<2x8x10xf32>
    "tpu.trace_stop"() : () -> ()
    %cst_91 = arith.constant 0.353553385 : f32
    %212 = vector.broadcast %cst_91 : f32 to vector<2x8x10xf32>
    %213 = arith.mulf %211, %212 : vector<2x8x10xf32>
    %214 = arith.addf %213, %37 : vector<2x8x10xf32>
    %cst_92 = arith.constant dense<0xFF800000> : vector<2x8xf32>
    %215 = vector.multi_reduction <maximumf>, %214, %cst_92 [2] : vector<2x8x10xf32> to vector<2x8xf32>
    %216 = vector.shape_cast %215 : vector<2x8xf32> to vector<2x8x1xf32>
    %217 = vector.broadcast %216 : vector<2x8x1xf32> to vector<2x8x10xf32>
    %218 = arith.subf %214, %217 : vector<2x8x10xf32>
    %219 = math.exp %218 : vector<2x8x10xf32>
    %cst_93 = arith.constant dense<0.000000e+00> : vector<2x8xf32>
    %220 = vector.multi_reduction <add>, %219, %cst_93 [2] : vector<2x8x10xf32> to vector<2x8xf32>
    %221 = vector.shape_cast %220 : vector<2x8xf32> to vector<2x8x1xf32>
    %222 = vector.broadcast %221 : vector<2x8x1xf32> to vector<2x8x10xf32>
    %223 = arith.divf %219, %222 : vector<2x8x10xf32>
    %224 = arith.truncf %223 : vector<2x8x10xf32> to vector<2x8x10xbf16>
    %225 = vector.extract_strided_slice %206 {offsets = [0, 0, 0], sizes = [2, 10, 8], strides = [1, 1, 1]} : vector<2x10x32xf32> to vector<2x10x8xf32>
    %226 = arith.truncf %225 : vector<2x10x8xf32> to vector<2x10x8xbf16>
    "tpu.trace_start"() <{level = 10 : i32, message = "bts,bsk->btk"}> : () -> ()
    %cst_94 = arith.constant dense<0.000000e+00> : vector<2x8x8xf32>
    %227 = tpu.matmul %224, %226, %cst_94 {dimension_numbers = #tpu.dot_dimension_numbers<[2], [1], [1], [2], [0, 0, 0, 1, 1, 2], [0], [0]>} : vector<2x8x10xbf16>, vector<2x10x8xbf16>, vector<2x8x8xf32> -> vector<2x8x8xf32>
    "tpu.trace_stop"() : () -> ()
    %228 = vector.extract_strided_slice %198 {offsets = [0, 0, 8], sizes = [2, 8, 8], strides = [1, 1, 1]} : vector<2x8x32xf32> to vector<2x8x8xf32>
    %229 = arith.truncf %228 : vector<2x8x8xf32> to vector<2x8x8xbf16>
    %230 = vector.extract_strided_slice %204 {offsets = [0, 0, 8], sizes = [2, 10, 8], strides = [1, 1, 1]} : vector<2x10x32xf32> to vector<2x10x8xf32>
    %231 = arith.truncf %230 : vector<2x10x8xf32> to vector<2x10x8xbf16>
    "tpu.trace_start"() <{level = 10 : i32, message = "btk,bsk->bts"}> : () -> ()
    %cst_95 = arith.constant dense<0.000000e+00> : vector<2x8x10xf32>
    %232 = tpu.matmul %229, %231, %cst_95 {dimension_numbers = #tpu.dot_dimension_numbers<[2], [2], [1], [1], [0, 0, 0, 1, 1, 1], [0], [0]>} : vector<2x8x8xbf16>, vector<2x10x8xbf16>, vector<2x8x10xf32> -> vector<2x8x10xf32>
    "tpu.trace_stop"() : () -> ()
    %cst_96 = arith.constant 0.353553385 : f32
    %233 = vector.broadcast %cst_96 : f32 to vector<2x8x10xf32>
    %234 = arith.mulf %232, %233 : vector<2x8x10xf32>
    %235 = arith.addf %234, %37 : vector<2x8x10xf32>
    %cst_97 = arith.constant dense<0xFF800000> : vector<2x8xf32>
    %236 = vector.multi_reduction <maximumf>, %235, %cst_97 [2] : vector<2x8x10xf32> to vector<2x8xf32>
    %237 = vector.shape_cast %236 : vector<2x8xf32> to vector<2x8x1xf32>
    %238 = vector.broadcast %237 : vector<2x8x1xf32> to vector<2x8x10xf32>
    %239 = arith.subf %235, %238 : vector<2x8x10xf32>
    %240 = math.exp %239 : vector<2x8x10xf32>
    %cst_98 = arith.constant dense<0.000000e+00> : vector<2x8xf32>
    %241 = vector.multi_reduction <add>, %240, %cst_98 [2] : vector<2x8x10xf32> to vector<2x8xf32>
    %242 = vector.shape_cast %241 : vector<2x8xf32> to vector<2x8x1xf32>
    %243 = vector.broadcast %242 : vector<2x8x1xf32> to vector<2x8x10xf32>
    %244 = arith.divf %240, %243 : vector<2x8x10xf32>
    %245 = arith.truncf %244 : vector<2x8x10xf32> to vector<2x8x10xbf16>
    %246 = vector.extract_strided_slice %206 {offsets = [0, 0, 8], sizes = [2, 10, 8], strides = [1, 1, 1]} : vector<2x10x32xf32> to vector<2x10x8xf32>
    %247 = arith.truncf %246 : vector<2x10x8xf32> to vector<2x10x8xbf16>
    "tpu.trace_start"() <{level = 10 : i32, message = "bts,bsk->btk"}> : () -> ()
    %cst_99 = arith.constant dense<0.000000e+00> : vector<2x8x8xf32>
    %248 = tpu.matmul %245, %247, %cst_99 {dimension_numbers = #tpu.dot_dimension_numbers<[2], [1], [1], [2], [0, 0, 0, 1, 1, 2], [0], [0]>} : vector<2x8x10xbf16>, vector<2x10x8xbf16>, vector<2x8x8xf32> -> vector<2x8x8xf32>
    "tpu.trace_stop"() : () -> ()
    %249 = vector.extract_strided_slice %198 {offsets = [0, 0, 16], sizes = [2, 8, 8], strides = [1, 1, 1]} : vector<2x8x32xf32> to vector<2x8x8xf32>
    %250 = arith.truncf %249 : vector<2x8x8xf32> to vector<2x8x8xbf16>
    %251 = vector.extract_strided_slice %204 {offsets = [0, 0, 16], sizes = [2, 10, 8], strides = [1, 1, 1]} : vector<2x10x32xf32> to vector<2x10x8xf32>
    %252 = arith.truncf %251 : vector<2x10x8xf32> to vector<2x10x8xbf16>
    "tpu.trace_start"() <{level = 10 : i32, message = "btk,bsk->bts"}> : () -> ()
    %cst_100 = arith.constant dense<0.000000e+00> : vector<2x8x10xf32>
    %253 = tpu.matmul %250, %252, %cst_100 {dimension_numbers = #tpu.dot_dimension_numbers<[2], [2], [1], [1], [0, 0, 0, 1, 1, 1], [0], [0]>} : vector<2x8x8xbf16>, vector<2x10x8xbf16>, vector<2x8x10xf32> -> vector<2x8x10xf32>
    "tpu.trace_stop"() : () -> ()
    %cst_101 = arith.constant 0.353553385 : f32
    %254 = vector.broadcast %cst_101 : f32 to vector<2x8x10xf32>
    %255 = arith.mulf %253, %254 : vector<2x8x10xf32>
    %256 = arith.addf %255, %37 : vector<2x8x10xf32>
    %cst_102 = arith.constant dense<0xFF800000> : vector<2x8xf32>
    %257 = vector.multi_reduction <maximumf>, %256, %cst_102 [2] : vector<2x8x10xf32> to vector<2x8xf32>
    %258 = vector.shape_cast %257 : vector<2x8xf32> to vector<2x8x1xf32>
    %259 = vector.broadcast %258 : vector<2x8x1xf32> to vector<2x8x10xf32>
    %260 = arith.subf %256, %259 : vector<2x8x10xf32>
    %261 = math.exp %260 : vector<2x8x10xf32>
    %cst_103 = arith.constant dense<0.000000e+00> : vector<2x8xf32>
    %262 = vector.multi_reduction <add>, %261, %cst_103 [2] : vector<2x8x10xf32> to vector<2x8xf32>
    %263 = vector.shape_cast %262 : vector<2x8xf32> to vector<2x8x1xf32>
    %264 = vector.broadcast %263 : vector<2x8x1xf32> to vector<2x8x10xf32>
    %265 = arith.divf %261, %264 : vector<2x8x10xf32>
    %266 = arith.truncf %265 : vector<2x8x10xf32> to vector<2x8x10xbf16>
    %267 = vector.extract_strided_slice %206 {offsets = [0, 0, 16], sizes = [2, 10, 8], strides = [1, 1, 1]} : vector<2x10x32xf32> to vector<2x10x8xf32>
    %268 = arith.truncf %267 : vector<2x10x8xf32> to vector<2x10x8xbf16>
    "tpu.trace_start"() <{level = 10 : i32, message = "bts,bsk->btk"}> : () -> ()
    %cst_104 = arith.constant dense<0.000000e+00> : vector<2x8x8xf32>
    %269 = tpu.matmul %266, %268, %cst_104 {dimension_numbers = #tpu.dot_dimension_numbers<[2], [1], [1], [2], [0, 0, 0, 1, 1, 2], [0], [0]>} : vector<2x8x10xbf16>, vector<2x10x8xbf16>, vector<2x8x8xf32> -> vector<2x8x8xf32>
    "tpu.trace_stop"() : () -> ()
    %270 = vector.extract_strided_slice %198 {offsets = [0, 0, 24], sizes = [2, 8, 8], strides = [1, 1, 1]} : vector<2x8x32xf32> to vector<2x8x8xf32>
    %271 = arith.truncf %270 : vector<2x8x8xf32> to vector<2x8x8xbf16>
    %272 = vector.extract_strided_slice %204 {offsets = [0, 0, 24], sizes = [2, 10, 8], strides = [1, 1, 1]} : vector<2x10x32xf32> to vector<2x10x8xf32>
    %273 = arith.truncf %272 : vector<2x10x8xf32> to vector<2x10x8xbf16>
    "tpu.trace_start"() <{level = 10 : i32, message = "btk,bsk->bts"}> : () -> ()
    %cst_105 = arith.constant dense<0.000000e+00> : vector<2x8x10xf32>
    %274 = tpu.matmul %271, %273, %cst_105 {dimension_numbers = #tpu.dot_dimension_numbers<[2], [2], [1], [1], [0, 0, 0, 1, 1, 1], [0], [0]>} : vector<2x8x8xbf16>, vector<2x10x8xbf16>, vector<2x8x10xf32> -> vector<2x8x10xf32>
    "tpu.trace_stop"() : () -> ()
    %cst_106 = arith.constant 0.353553385 : f32
    %275 = vector.broadcast %cst_106 : f32 to vector<2x8x10xf32>
    %276 = arith.mulf %274, %275 : vector<2x8x10xf32>
    %277 = arith.addf %276, %37 : vector<2x8x10xf32>
    %cst_107 = arith.constant dense<0xFF800000> : vector<2x8xf32>
    %278 = vector.multi_reduction <maximumf>, %277, %cst_107 [2] : vector<2x8x10xf32> to vector<2x8xf32>
    %279 = vector.shape_cast %278 : vector<2x8xf32> to vector<2x8x1xf32>
    %280 = vector.broadcast %279 : vector<2x8x1xf32> to vector<2x8x10xf32>
    %281 = arith.subf %277, %280 : vector<2x8x10xf32>
    %282 = math.exp %281 : vector<2x8x10xf32>
    %cst_108 = arith.constant dense<0.000000e+00> : vector<2x8xf32>
    %283 = vector.multi_reduction <add>, %282, %cst_108 [2] : vector<2x8x10xf32> to vector<2x8xf32>
    %284 = vector.shape_cast %283 : vector<2x8xf32> to vector<2x8x1xf32>
    %285 = vector.broadcast %284 : vector<2x8x1xf32> to vector<2x8x10xf32>
    %286 = arith.divf %282, %285 : vector<2x8x10xf32>
    %287 = arith.truncf %286 : vector<2x8x10xf32> to vector<2x8x10xbf16>
    %288 = vector.extract_strided_slice %206 {offsets = [0, 0, 24], sizes = [2, 10, 8], strides = [1, 1, 1]} : vector<2x10x32xf32> to vector<2x10x8xf32>
    %289 = arith.truncf %288 : vector<2x10x8xf32> to vector<2x10x8xbf16>
    "tpu.trace_start"() <{level = 10 : i32, message = "bts,bsk->btk"}> : () -> ()
    %cst_109 = arith.constant dense<0.000000e+00> : vector<2x8x8xf32>
    %290 = tpu.matmul %287, %289, %cst_109 {dimension_numbers = #tpu.dot_dimension_numbers<[2], [1], [1], [2], [0, 0, 0, 1, 1, 2], [0], [0]>} : vector<2x8x10xbf16>, vector<2x10x8xbf16>, vector<2x8x8xf32> -> vector<2x8x8xf32>
    "tpu.trace_stop"() : () -> ()
    %291 = tpu.concatenate %227, %248, %269, %290 in 2 : vector<2x8x8xf32>, vector<2x8x8xf32>, vector<2x8x8xf32>, vector<2x8x8xf32> -> vector<2x8x32xf32>
    %292 = vector.shape_cast %291 : vector<2x8x32xf32> to vector<16x32xf32>
    %293 = arith.truncf %292 : vector<16x32xf32> to vector<16x32xbf16>
    %cst_110 = arith.constant dense<0.000000e+00> : vector<16x32xf32>
    %294 = tpu.matmul %293, %25, %cst_110 {dimension_numbers = #tpu.dot_dimension_numbers<[1], [0], [0], [1], [0, 0, 1, 1], [], []>} : vector<16x32xbf16>, vector<32x32xbf16>, vector<16x32xf32> -> vector<16x32xf32>
    %295 = vector.broadcast %27 : vector<1x32xf32> to vector<16x32xf32>
    %296 = arith.addf %294, %295 : vector<16x32xf32>
    %297 = vector.shape_cast %296 : vector<16x32xf32> to vector<2x8x32xf32>
    %298 = arith.addf %166, %297 : vector<2x8x32xf32>
    %299 = vector.extract_strided_slice %7 {offsets = [4, 0], sizes = [1, 32], strides = [1, 1]} : vector<6x32xf32> to vector<1x32xf32>
    %300 = vector.extract_strided_slice %7 {offsets = [5, 0], sizes = [1, 32], strides = [1, 1]} : vector<6x32xf32> to vector<1x32xf32>
    %cst_111 = arith.constant dense<0.000000e+00> : vector<2x8xf32>
    %301 = vector.multi_reduction <add>, %298, %cst_111 [2] : vector<2x8x32xf32> to vector<2x8xf32>
    %302 = vector.shape_cast %301 : vector<2x8xf32> to vector<2x8x1xf32>
    %cst_112 = arith.constant 3.200000e+01 : f32
    %303 = vector.broadcast %cst_112 : f32 to vector<2x8x1xf32>
    %304 = arith.divf %302, %303 : vector<2x8x1xf32>
    %305 = vector.broadcast %304 : vector<2x8x1xf32> to vector<2x8x32xf32>
    %306 = arith.subf %298, %305 : vector<2x8x32xf32>
    %307 = arith.mulf %306, %306 : vector<2x8x32xf32>
    %cst_113 = arith.constant dense<0.000000e+00> : vector<2x8xf32>
    %308 = vector.multi_reduction <add>, %307, %cst_113 [2] : vector<2x8x32xf32> to vector<2x8xf32>
    %309 = vector.shape_cast %308 : vector<2x8xf32> to vector<2x8x1xf32>
    %cst_114 = arith.constant 3.200000e+01 : f32
    %310 = vector.broadcast %cst_114 : f32 to vector<2x8x1xf32>
    %311 = arith.divf %309, %310 : vector<2x8x1xf32>
    %312 = vector.broadcast %304 : vector<2x8x1xf32> to vector<2x8x32xf32>
    %313 = arith.subf %298, %312 : vector<2x8x32xf32>
    %cst_115 = arith.constant 9.99999974E-6 : f32
    %314 = vector.broadcast %cst_115 : f32 to vector<2x8x1xf32>
    %315 = arith.addf %311, %314 : vector<2x8x1xf32>
    %316 = math.rsqrt %315 : vector<2x8x1xf32>
    %317 = vector.broadcast %316 : vector<2x8x1xf32> to vector<2x8x32xf32>
    %318 = arith.mulf %313, %317 : vector<2x8x32xf32>
    %319 = vector.shape_cast %299 : vector<1x32xf32> to vector<1x1x32xf32>
    %320 = vector.broadcast %319 : vector<1x1x32xf32> to vector<2x8x32xf32>
    %321 = arith.mulf %318, %320 : vector<2x8x32xf32>
    %322 = vector.shape_cast %300 : vector<1x32xf32> to vector<1x1x32xf32>
    %323 = vector.broadcast %322 : vector<1x1x32xf32> to vector<2x8x32xf32>
    %324 = arith.addf %321, %323 : vector<2x8x32xf32>
    %325 = vector.shape_cast %324 : vector<2x8x32xf32> to vector<16x32xf32>
    %326 = arith.truncf %325 : vector<16x32xf32> to vector<16x32xbf16>
    %cst_116 = arith.constant dense<0.000000e+00> : vector<16x64xf32>
    %327 = tpu.matmul %326, %29, %cst_116 {dimension_numbers = #tpu.dot_dimension_numbers<[1], [0], [0], [1], [0, 0, 1, 1], [], []>} : vector<16x32xbf16>, vector<32x64xbf16>, vector<16x64xf32> -> vector<16x64xf32>
    %328 = vector.broadcast %31 : vector<1x64xf32> to vector<16x64xf32>
    %329 = arith.addf %327, %328 : vector<16x64xf32>
    %cst_117 = arith.constant 0.000000e+00 : f32
    %330 = vector.broadcast %cst_117 : f32 to vector<16x64xf32>
    %331 = arith.maximumf %329, %330 : vector<16x64xf32>
    %332 = arith.truncf %331 : vector<16x64xf32> to vector<16x64xbf16>
    %cst_118 = arith.constant dense<0.000000e+00> : vector<16x32xf32>
    %333 = tpu.matmul %332, %33, %cst_118 {dimension_numbers = #tpu.dot_dimension_numbers<[1], [0], [0], [1], [0, 0, 1, 1], [], []>} : vector<16x64xbf16>, vector<64x32xbf16>, vector<16x32xf32> -> vector<16x32xf32>
    %334 = vector.broadcast %35 : vector<1x32xf32> to vector<16x32xf32>
    %335 = arith.addf %333, %334 : vector<16x32xf32>
    %336 = vector.shape_cast %335 : vector<16x32xf32> to vector<2x8x32xf32>
    %337 = arith.addf %298, %336 : vector<2x8x32xf32>
    %c0_119 = arith.constant 0 : index
    %c0_120 = arith.constant 0 : index
    %c0_121 = arith.constant 0 : index
    %338 = vector.load %arg22[%c0_119, %c0_120, %c0_121] : memref<2x8x32xf32, #tpu.memory_space<vmem>>, vector<2x8x32xf32>
    tpu.vector_store %arg22[%c0_119, %c0_120, %c0_121], %337 {strides = array<i32>} : memref<2x8x32xf32, #tpu.memory_space<vmem>>, vector<2x8x32xf32>,
    %c1_i32 = arith.constant 1 : i32
    %339 = arith.cmpi eq, %arg1, %c1_i32 : i32
    %340 = arith.extui %339 : i1 to i32
    %c0_i32_122 = arith.constant 0 : i32
    %341 = arith.cmpi ne, %340, %c0_i32_122 : i32
    scf.if %341 {
      %c0_123 = arith.constant 0 : index
      %c0_124 = arith.constant 0 : index
      %c0_125 = arith.constant 0 : index
      %342 = vector.load %arg21[%c0_123, %c0_124, %c0_125] : memref<2x8x32xf32, #tpu.memory_space<vmem>>, vector<2x8x32xf32>
      tpu.vector_store %arg21[%c0_123, %c0_124, %c0_125], %337 {strides = array<i32>} : memref<2x8x32xf32, #tpu.memory_space<vmem>>, vector<2x8x32xf32>,
    } else {
    }
    return
  }
  func.func @transform_0(%arg0: i32, %arg1: i32, %arg2: memref<2xi32, #tpu.memory_space<smem>>, %arg3: memref<2xi32, #tpu.memory_space<smem>>) -> (i32, i32, i32) {
    %c0_i32 = arith.constant 0 : i32
    %c0_i32_0 = arith.constant 0 : i32
    %c0_i32_1 = arith.constant 0 : i32
    return %arg0, %c0_i32, %c0_i32_0 : i32, i32, i32
  }
  func.func @transform_1(%arg0: i32, %arg1: i32, %arg2: memref<2xi32, #tpu.memory_space<smem>>, %arg3: memref<2xi32, #tpu.memory_space<smem>>) -> (i32, i32, i32) {
    %c0_i32 = arith.constant 0 : i32
    %c0_i32_0 = arith.constant 0 : i32
    %c0_i32_1 = arith.constant 0 : i32
    return %arg0, %c0_i32, %c0_i32_0 : i32, i32, i32
  }
  func.func @transform_2(%arg0: i32, %arg1: i32, %arg2: memref<2xi32, #tpu.memory_space<smem>>, %arg3: memref<2xi32, #tpu.memory_space<smem>>) -> (i32, i32, i32) {
    %c0_i32 = arith.constant 0 : i32
    %c0_i32_0 = arith.constant 0 : i32
    %c0_i32_1 = arith.constant 0 : i32
    return %arg1, %c0_i32, %c0_i32_0 : i32, i32, i32
  }
  func.func @transform_3(%arg0: i32, %arg1: i32, %arg2: memref<2xi32, #tpu.memory_space<smem>>, %arg3: memref<2xi32, #tpu.memory_space<smem>>) -> (i32, i32, i32) {
    %c0_i32 = arith.constant 0 : i32
    %c0_i32_0 = arith.constant 0 : i32
    %c0_i32_1 = arith.constant 0 : i32
    return %arg1, %c0_i32, %c0_i32_0 : i32, i32, i32
  }
  func.func @transform_4(%arg0: i32, %arg1: i32, %arg2: memref<2xi32, #tpu.memory_space<smem>>, %arg3: memref<2xi32, #tpu.memory_space<smem>>) -> (i32, i32, i32) {
    %c0_i32 = arith.constant 0 : i32
    %c0_i32_0 = arith.constant 0 : i32
    %c0_i32_1 = arith.constant 0 : i32
    return %arg1, %c0_i32, %c0_i32_0 : i32, i32, i32
  }
  func.func @transform_5(%arg0: i32, %arg1: i32, %arg2: memref<2xi32, #tpu.memory_space<smem>>, %arg3: memref<2xi32, #tpu.memory_space<smem>>) -> (i32, i32, i32) {
    %c0_i32 = arith.constant 0 : i32
    %c0_i32_0 = arith.constant 0 : i32
    %c0_i32_1 = arith.constant 0 : i32
    return %arg1, %c0_i32, %c0_i32_0 : i32, i32, i32
  }
  func.func @transform_6(%arg0: i32, %arg1: i32, %arg2: memref<2xi32, #tpu.memory_space<smem>>, %arg3: memref<2xi32, #tpu.memory_space<smem>>) -> (i32, i32, i32) {
    %c0_i32 = arith.constant 0 : i32
    %c0_i32_0 = arith.constant 0 : i32
    %c0_i32_1 = arith.constant 0 : i32
    return %arg1, %c0_i32, %c0_i32_0 : i32, i32, i32
  }
  func.func @transform_7(%arg0: i32, %arg1: i32, %arg2: memref<2xi32, #tpu.memory_space<smem>>, %arg3: memref<2xi32, #tpu.memory_space<smem>>) -> (i32, i32, i32) {
    %c0_i32 = arith.constant 0 : i32
    %c0_i32_0 = arith.constant 0 : i32
    %c0_i32_1 = arith.constant 0 : i32
    return %arg1, %c0_i32, %c0_i32_0 : i32, i32, i32
  }
  func.func @transform_8(%arg0: i32, %arg1: i32, %arg2: memref<2xi32, #tpu.memory_space<smem>>, %arg3: memref<2xi32, #tpu.memory_space<smem>>) -> (i32, i32, i32) {
    %c0_i32 = arith.constant 0 : i32
    %c0_i32_0 = arith.constant 0 : i32
    %c0_i32_1 = arith.constant 0 : i32
    return %arg1, %c0_i32, %c0_i32_0 : i32, i32, i32
  }
  func.func @transform_9(%arg0: i32, %arg1: i32, %arg2: memref<2xi32, #tpu.memory_space<smem>>, %arg3: memref<2xi32, #tpu.memory_space<smem>>) -> (i32, i32, i32) {
    %c0_i32 = arith.constant 0 : i32
    %c0_i32_0 = arith.constant 0 : i32
    %c0_i32_1 = arith.constant 0 : i32
    return %arg1, %c0_i32, %c0_i32_0 : i32, i32, i32
  }
  func.func @transform_10(%arg0: i32, %arg1: i32, %arg2: memref<2xi32, #tpu.memory_space<smem>>, %arg3: memref<2xi32, #tpu.memory_space<smem>>) -> (i32, i32, i32) {
    %c0_i32 = arith.constant 0 : i32
    %c0_i32_0 = arith.constant 0 : i32
    %c0_i32_1 = arith.constant 0 : i32
    return %arg1, %c0_i32, %c0_i32_0 : i32, i32, i32
  }
  func.func @transform_11(%arg0: i32, %arg1: i32, %arg2: memref<2xi32, #tpu.memory_space<smem>>, %arg3: memref<2xi32, #tpu.memory_space<smem>>) -> (i32, i32, i32) {
    %c0_i32 = arith.constant 0 : i32
    %c0_i32_0 = arith.constant 0 : i32
    %c0_i32_1 = arith.constant 0 : i32
    return %arg1, %c0_i32, %c0_i32_0 : i32, i32, i32
  }
  func.func @transform_12(%arg0: i32, %arg1: i32, %arg2: memref<2xi32, #tpu.memory_space<smem>>, %arg3: memref<2xi32, #tpu.memory_space<smem>>) -> (i32, i32, i32) {
    %c0_i32 = arith.constant 0 : i32
    %c0_i32_0 = arith.constant 0 : i32
    %c0_i32_1 = arith.constant 0 : i32
    return %arg1, %c0_i32, %c0_i32_0 : i32, i32, i32
  }
  func.func @transform_13(%arg0: i32, %arg1: i32, %arg2: memref<2xi32, #tpu.memory_space<smem>>, %arg3: memref<2xi32, #tpu.memory_space<smem>>) -> (i32, i32, i32) {
    %c0_i32 = arith.constant 0 : i32
    %c0_i32_0 = arith.constant 0 : i32
    %c0_i32_1 = arith.constant 0 : i32
    return %arg1, %c0_i32, %c0_i32_0 : i32, i32, i32
  }
  func.func @transform_14(%arg0: i32, %arg1: i32, %arg2: memref<2xi32, #tpu.memory_space<smem>>, %arg3: memref<2xi32, #tpu.memory_space<smem>>) -> (i32, i32, i32) {
    %c0_i32 = arith.constant 0 : i32
    %c0_i32_0 = arith.constant 0 : i32
    %c0_i32_1 = arith.constant 0 : i32
    return %arg1, %c0_i32, %c0_i32_0 : i32, i32, i32
  }
  func.func @transform_15(%arg0: i32, %arg1: i32, %arg2: memref<2xi32, #tpu.memory_space<smem>>, %arg3: memref<2xi32, #tpu.memory_space<smem>>) -> (i32, i32, i32) {
    %c0_i32 = arith.constant 0 : i32
    %c0_i32_0 = arith.constant 0 : i32
    %c0_i32_1 = arith.constant 0 : i32
    return %arg1, %c0_i32, %c0_i32_0 : i32, i32, i32
  }
  func.func @transform_16(%arg0: i32, %arg1: i32, %arg2: memref<2xi32, #tpu.memory_space<smem>>, %arg3: memref<2xi32, #tpu.memory_space<smem>>) -> (i32, i32, i32) {
    %c0_i32 = arith.constant 0 : i32
    %c0_i32_0 = arith.constant 0 : i32
    %c0_i32_1 = arith.constant 0 : i32
    return %arg1, %c0_i32, %c0_i32_0 : i32, i32, i32
  }
  func.func @transform_17(%arg0: i32, %arg1: i32, %arg2: memref<2xi32, #tpu.memory_space<smem>>, %arg3: memref<2xi32, #tpu.memory_space<smem>>) -> (i32, i32, i32) {
    %c0_i32 = arith.constant 0 : i32
    %c0_i32_0 = arith.constant 0 : i32
    %c0_i32_1 = arith.constant 0 : i32
    return %arg0, %c0_i32, %c0_i32_0 : i32, i32, i32
  }
}

</mosaic_0001>

<llo_original>
// kernel: tpu_custom_call.1
$region0: #{tpu_custom_call.1}
  #allocation0 [shape = 'u32[]', space=smem, size = 0x4, offset = 0x4, fixed_abs, tag = 'smem constant byte address 0x4 - core index']
  #allocation1 [shape = 'u32[144,128]{1,0:T(1,128)}', space=vmem, size = 0x12000, scoped, tag = 'internal scratch']
  #allocation2 [shape = 'f32[2,8,32]{2,1,0:T(8,128)}', space=vmem, size = 0x2000, scoped, tag = 'scratch operand']
  #allocation3 [shape = 'f32[2,8,8]{2,1,0:T(8,128)}', space=vmem, size = 0x2000, scoped, tag = 'scratch operand']
  #allocation4 [shape = 'f32[2,8,10]{2,1,0:T(8,128)}', space=vmem, size = 0x2000, scoped, tag = 'scratch operand']
  #allocation5 [shape = 's32[1]{0}', space=sflag, size = 0x4, scoped, tag = 'scoped memory for tpu_custom_call.1']
  #allocation6 [shape = 'u8[512]{0}', space=smem, size = 0x200, scoped, tag = 'prefetched SMEM operand 0']
  #allocation7 [shape = 'u8[512]{0}', space=smem, size = 0x200, scoped, tag = 'prefetched SMEM operand 1']
  %s0 = inlined_call_operand.hbm [shape: s32[2], index: 0, kind: input, shape index: {}]
  %s1 = inlined_call_operand.hbm [shape: s32[2], index: 1, kind: input, shape index: {}]
  %s2 = inlined_call_operand.hbm [shape: f32[2,8,32], index: 2, kind: input, shape index: {}]
  %s3 = inlined_call_operand.vmem [shape: bf16[2,10,32], index: 3, kind: input, shape index: {}]
  %s4 = inlined_call_operand.vmem [shape: f32[2,6,32], index: 4, kind: input, shape index: {}]
  %s5 = inlined_call_operand.vmem [shape: bf16[2,32,96], index: 5, kind: input, shape index: {}]
  %s6 = inlined_call_operand.hbm [shape: f32[2,1,96], index: 6, kind: input, shape index: {}]
  %s7 = inlined_call_operand.vmem [shape: bf16[2,32,32], index: 7, kind: input, shape index: {}]
  %s8 = inlined_call_operand.vmem [shape: f32[2,1,32], index: 8, kind: input, shape index: {}]
  %s9 = inlined_call_operand.vmem [shape: bf16[2,32,32], index: 9, kind: input, shape index: {}]
  %s10 = inlined_call_operand.vmem [shape: f32[2,1,32], index: 10, kind: input, shape index: {}]
  %s11 = inlined_call_operand.vmem [shape: bf16[2,32,64], index: 11, kind: input, shape index: {}]
  %s12 = inlined_call_operand.vmem [shape: f32[2,1,64], index: 12, kind: input, shape index: {}]
  %s13 = inlined_call_operand.vmem [shape: bf16[2,32,32], index: 13, kind: input, shape index: {}]
  %s14 = inlined_call_operand.vmem [shape: f32[2,1,32], index: 14, kind: input, shape index: {}]
  %s15 = inlined_call_operand.hbm [shape: bf16[2,32,64], index: 15, kind: input, shape index: {}]
  %s16 = inlined_call_operand.vmem [shape: f32[2,1,64], index: 16, kind: input, shape index: {}]
  %s17 = inlined_call_operand.vmem [shape: bf16[2,64,32], index: 17, kind: input, shape index: {}]
  %s18 = inlined_call_operand.vmem [shape: f32[2,1,32], index: 18, kind: input, shape index: {}]
  %s19 = inlined_call_operand.hbm [shape: f32[2,8,32], index: 19, kind: output, shape index: {}]
  %s20 = sld [smem:[#allocation0]]
  $region121: #{tpu_custom_call.1} parent=0
    _
  %s22 = ssub.s32 1, %s20
  %s23 = scalar_select 0, %s22, %s20
  %25 = dma.hbm_to_smem %s0, 16, [#allocation6], [#allocation5]
  %27 = dma.hbm_to_smem %s1, 16, [#allocation7], [#allocation5]
  %28 = dma.done [#allocation5], 32
  %29 = sfence
  $region1: #{tpu_custom_call.1} parent=0
    #allocation8 [shape = 'u8[8192]{0}', space=vmem, size = 0x2000, scoped, tag = 'input window, operand 2, single buffered']
    #allocation9 [shape = 's32[2]{0}', space=sflag, size = 0x8, scoped, tag = 'scoped memory for tpu_custom_call.1']
    #allocation10 [shape = 's32[2]{0}', space=sflag, size = 0x8, scoped, tag = 'scoped memory for tpu_custom_call.1']
    #allocation11 [shape = 'u8[1024]{0}', space=vmem, size = 0x400, scoped, tag = 'input window, operand 6']
    #allocation12 [shape = 's32[2]{0}', space=sflag, size = 0x8, scoped, tag = 'scoped memory for tpu_custom_call.1']
    #allocation13 [shape = 'u8[16384]{0}', space=vmem, size = 0x4000, scoped, tag = 'input window, operand 15']
    #allocation14 [shape = 'u8[8192]{0}', space=vmem, size = 0x2000, scoped, tag = 'output window, operand 0, single buffered']
    %30 = vsyncpa [#allocation9], 0
    %31 = vsyncpa [#allocation12], 0
    %s32 = scalar_lea.sflag [#allocation12], 1
    %33 = vsyncpa %s32, 0
    %34 = vsyncpa [#allocation10], 0
    loop: start=0, step=1, limit=4
    $region2: #{tpu_custom_call.1} parent=1 // loop_pre_header
      _
    $region3: #{tpu_custom_call.1} parent=1 // loop_header
      %s36 = sphi 0, %s40
      %p37 = scmp.ge.s32.totalorder %s36, 4
      %s43 = sphi 0, %s55
      %s44 = sphi 0, %s51
      %s45 = sphi 0, %s43
      %s46 = sphi 0, %s44
      %s47 = sphi 0, %s45
      %s48 = sphi 0, %s46
      %s58 = sphi 0, %s60
      %s61 = sphi 0, %s58
      %s62 = sphi 0, %s61
      %s78 = sphi 0, %s62
      %s84 = sphi 0, %s86
      %s87 = sphi 0, %s84
      %s88 = sphi 0, %s87
      %s104 = sphi 0, %s88
      %s110 = sphi 0, %s112
      %s113 = sphi 0, %s110
      %s114 = sphi 0, %s113
      %s130 = sphi 0, %s114
      %s136 = sphi 0, %s138
      %s139 = sphi 0, %s136
      %s140 = sphi 0, %s139
      %s156 = sphi 0, %s140
      %s162 = sphi 0, %s164
      %s165 = sphi 0, %s162
      %s166 = sphi 0, %s165
      %s182 = sphi 0, %s166
      %s188 = sphi 0, %s190
      %s191 = sphi 0, %s188
      %s192 = sphi 0, %s191
      %s208 = sphi 0, %s192
      %s214 = sphi 0, %s216
      %s217 = sphi 0, %s214
      %s218 = sphi 0, %s217
      %s234 = sphi 0, %s218
      %s240 = sphi 0, %s242
      %s243 = sphi 0, %s240
      %s244 = sphi 0, %s243
      %s260 = sphi 0, %s244
      %s266 = sphi 0, %s268
      %s269 = sphi 0, %s266
      %s270 = sphi 0, %s269
      %s286 = sphi 0, %s270
      %s292 = sphi 0, %s294
      %s295 = sphi 0, %s292
      %s296 = sphi 0, %s295
      %s312 = sphi 0, %s296
      %s318 = sphi 0, %s320
      %s321 = sphi 0, %s318
      %s322 = sphi 0, %s321
      %s338 = sphi 0, %s322
      %s344 = sphi 0, %s346
      %s347 = sphi 0, %s344
      %s348 = sphi 0, %s347
      %s364 = sphi 0, %s348
      %s370 = sphi 0, %s372
      %s373 = sphi 0, %s370
      %s374 = sphi 0, %s373
      %s390 = sphi 0, %s374
      %s396 = sphi 0, %s398
      %s399 = sphi 0, %s396
      %s400 = sphi 0, %s399
      %s416 = sphi 0, %s400
      %s422 = sphi 0, %s424
      %s425 = sphi 0, %s422
      %s426 = sphi 0, %s425
      %s442 = sphi 0, %s426
      %s448 = sphi 0, %s450
      %s451 = sphi 0, %s448
      %s452 = sphi 0, %s451
      %s468 = sphi 0, %s452
      %s474 = sphi 0, %s476
      %s477 = sphi 0, %s474
      %s478 = sphi 0, %s477
      %s494 = sphi 0, %s478
      %s500 = sphi 0, %s502
      %s503 = sphi 0, %s500
      %s504 = sphi 0, %s503
      %s520 = sphi 0, %s504
    $region4: #{tpu_custom_call.1} parent=1 // loop_header_branch
      %39 = sbr.rel (%p37) target = $region8
    $region5: #{tpu_custom_call.1} parent=1 // loop_body
      %s41 = ssub.s32 %s36, 1
      %s42 = ssub.s32 %s36, 2
      %s49 = sadd.s32 1, %s44
      %p50 = scmp.ge.s32.totalorder %s49, 2
      %s51 = scalar_select %p50, 0, %s49
      %s52 = sadd.s32 1, %s43
      %s53 = scalar_select %p50, %s52, %s43
      %p54 = scmp.ge.s32.totalorder %s53, 1
      %s55 = scalar_select %p54, 0, %s53
      %s56 = ssub.s32 %s43, %s55
      %p57 = scmp.eq.s32.totalorder %s56, 0
      %s59 = sadd.s32 %s58, 1
      %s60 = scalar_select %p57, %s58, %s59
      %p63 = pneg %p57
      %p64 = scmp.eq.s32.totalorder %s36, 1
      %p65 = por %p63, %p64
      %p66 = scmp.ne.s32.totalorder %s58, %s61
      %p67 = scmp.eq.s32.totalorder %s36, 0
      %p68 = por %p66, %p67
      %p69 = scmp.ne.s32.totalorder %s58, %s61
      %p70 = scmp.eq.s32.totalorder %s41, 1
      %p71 = por %p69, %p70
      %p72 = scmp.ne.s32.totalorder %s61, %s62
      %p73 = scmp.eq.s32.totalorder %s41, 0
      %p74 = por %p72, %p73
      %p75 = scmp.ne.s32.totalorder %s61, %s62
      %p76 = scmp.eq.s32.totalorder %s42, 1
      %p77 = por %p75, %p76
      %p79 = scmp.ne.s32.totalorder %s62, %s78
      %p80 = scmp.eq.s32.totalorder %s42, 0
      %p81 = por %p79, %p80
      %s82 = ssub.s32 %s43, %s55
      %p83 = scmp.eq.s32.totalorder %s82, 0
      %s85 = sadd.s32 %s84, 1
      %s86 = scalar_select %p83, %s84, %s85
      %p89 = pneg %p83
      %p90 = scmp.eq.s32.totalorder %s36, 1
      %p91 = por %p89, %p90
      %p92 = scmp.ne.s32.totalorder %s84, %s87
      %p93 = scmp.eq.s32.totalorder %s36, 0
      %p94 = por %p92, %p93
      %p95 = scmp.ne.s32.totalorder %s84, %s87
      %p96 = scmp.eq.s32.totalorder %s41, 1
      %p97 = por %p95, %p96
      %p98 = scmp.ne.s32.totalorder %s87, %s88
      %p99 = scmp.eq.s32.totalorder %s41, 0
      %p100 = por %p98, %p99
      %p101 = scmp.ne.s32.totalorder %s87, %s88
      %p102 = scmp.eq.s32.totalorder %s42, 1
      %p103 = por %p101, %p102
      %p105 = scmp.ne.s32.totalorder %s88, %s104
      %p106 = scmp.eq.s32.totalorder %s42, 0
      %p107 = por %p105, %p106
      %s108 = ssub.s32 %s44, %s51
      %p109 = scmp.eq.s32.totalorder %s108, 0
      %s111 = sadd.s32 %s110, 1
      %s112 = scalar_select %p109, %s110, %s111
      %p115 = pneg %p109
      %p116 = scmp.eq.s32.totalorder %s36, 1
      %p117 = por %p115, %p116
      %p118 = scmp.ne.s32.totalorder %s110, %s113
      %p119 = scmp.eq.s32.totalorder %s36, 0
      %p120 = por %p118, %p119
      %p121 = scmp.ne.s32.totalorder %s110, %s113
      %p122 = scmp.eq.s32.totalorder %s41, 1
      %p123 = por %p121, %p122
      %p124 = scmp.ne.s32.totalorder %s113, %s114
      %p125 = scmp.eq.s32.totalorder %s41, 0
      %p126 = por %p124, %p125
      %p127 = scmp.ne.s32.totalorder %s113, %s114
      %p128 = scmp.eq.s32.totalorder %s42, 1
      %p129 = por %p127, %p128
      %p131 = scmp.ne.s32.totalorder %s114, %s130
      %p132 = scmp.eq.s32.totalorder %s42, 0
      %p133 = por %p131, %p132
      %s134 = ssub.s32 %s44, %s51
      %p135 = scmp.eq.s32.totalorder %s134, 0
      %s137 = sadd.s32 %s136, 1
      %s138 = scalar_select %p135, %s136, %s137
      %p141 = pneg %p135
      %p142 = scmp.eq.s32.totalorder %s36, 1
      %p143 = por %p141, %p142
      %p144 = scmp.ne.s32.totalorder %s136, %s139
      %p145 = scmp.eq.s32.totalorder %s36, 0
      %p146 = por %p144, %p145
      %p147 = scmp.ne.s32.totalorder %s136, %s139
      %p148 = scmp.eq.s32.totalorder %s41, 1
      %p149 = por %p147, %p148
      %p150 = scmp.ne.s32.totalorder %s139, %s140
      %p151 = scmp.eq.s32.totalorder %s41, 0
      %p152 = por %p150, %p151
      %p153 = scmp.ne.s32.totalorder %s139, %s140
      %p154 = scmp.eq.s32.totalorder %s42, 1
      %p155 = por %p153, %p154
      %p157 = scmp.ne.s32.totalorder %s140, %s156
      %p158 = scmp.eq.s32.totalorder %s42, 0
      %p159 = por %p157, %p158
      %s160 = ssub.s32 %s44, %s51
      %p161 = scmp.eq.s32.totalorder %s160, 0
      %s163 = sadd.s32 %s162, 1
      %s164 = scalar_select %p161, %s162, %s163
      %p167 = pneg %p161
      %p168 = scmp.eq.s32.totalorder %s36, 1
      %p169 = por %p167, %p168
      %p170 = scmp.ne.s32.totalorder %s162, %s165
      %p171 = scmp.eq.s32.totalorder %s36, 0
      %p172 = por %p170, %p171
      %p173 = scmp.ne.s32.totalorder %s162, %s165
      %p174 = scmp.eq.s32.totalorder %s41, 1
      %p175 = por %p173, %p174
      %p176 = scmp.ne.s32.totalorder %s165, %s166
      %p177 = scmp.eq.s32.totalorder %s41, 0
      %p178 = por %p176, %p177
      %p179 = scmp.ne.s32.totalorder %s165, %s166
      %p180 = scmp.eq.s32.totalorder %s42, 1
      %p181 = por %p179, %p180
      %p183 = scmp.ne.s32.totalorder %s166, %s182
      %p184 = scmp.eq.s32.totalorder %s42, 0
      %p185 = por %p183, %p184
      %s186 = ssub.s32 %s44, %s51
      %p187 = scmp.eq.s32.totalorder %s186, 0
      %s189 = sadd.s32 %s188, 1
      %s190 = scalar_select %p187, %s188, %s189
      %p193 = pneg %p187
      %p194 = scmp.eq.s32.totalorder %s36, 1
      %p195 = por %p193, %p194
      %p196 = scmp.ne.s32.totalorder %s188, %s191
      %p197 = scmp.eq.s32.totalorder %s36, 0
      %p198 = por %p196, %p197
      %p199 = scmp.ne.s32.totalorder %s188, %s191
      %p200 = scmp.eq.s32.totalorder %s41, 1
      %p201 = por %p199, %p200
      %p202 = scmp.ne.s32.totalorder %s191, %s192
      %p203 = scmp.eq.s32.totalorder %s41, 0
      %p204 = por %p202, %p203
      %p205 = scmp.ne.s32.totalorder %s191, %s192
      %p206 = scmp.eq.s32.totalorder %s42, 1
      %p207 = por %p205, %p206
      %p209 = scmp.ne.s32.totalorder %s192, %s208
      %p210 = scmp.eq.s32.totalorder %s42, 0
      %p211 = por %p209, %p210
      %s212 = ssub.s32 %s44, %s51
      %p213 = scmp.eq.s32.totalorder %s212, 0
      %s215 = sadd.s32 %s214, 1
      %s216 = scalar_select %p213, %s214, %s215
      %p219 = pneg %p213
      %p220 = scmp.eq.s32.totalorder %s36, 1
      %p221 = por %p219, %p220
      %p222 = scmp.ne.s32.totalorder %s214, %s217
      %p223 = scmp.eq.s32.totalorder %s36, 0
      %p224 = por %p222, %p223
      %p225 = scmp.ne.s32.totalorder %s214, %s217
      %p226 = scmp.eq.s32.totalorder %s41, 1
      %p227 = por %p225, %p226
      %p228 = scmp.ne.s32.totalorder %s217, %s218
      %p229 = scmp.eq.s32.totalorder %s41, 0
      %p230 = por %p228, %p229
      %p231 = scmp.ne.s32.totalorder %s217, %s218
      %p232 = scmp.eq.s32.totalorder %s42, 1
      %p233 = por %p231, %p232
      %p235 = scmp.ne.s32.totalorder %s218, %s234
      %p236 = scmp.eq.s32.totalorder %s42, 0
      %p237 = por %p235, %p236
      %s238 = ssub.s32 %s44, %s51
      %p239 = scmp.eq.s32.totalorder %s238, 0
      %s241 = sadd.s32 %s240, 1
      %s242 = scalar_select %p239, %s240, %s241
      %p245 = pneg %p239
      %p246 = scmp.eq.s32.totalorder %s36, 1
      %p247 = por %p245, %p246
      %p248 = scmp.ne.s32.totalorder %s240, %s243
      %p249 = scmp.eq.s32.totalorder %s36, 0
      %p250 = por %p248, %p249
      %p251 = scmp.ne.s32.totalorder %s240, %s243
      %p252 = scmp.eq.s32.totalorder %s41, 1
      %p253 = por %p251, %p252
      %p254 = scmp.ne.s32.totalorder %s243, %s244
      %p255 = scmp.eq.s32.totalorder %s41, 0
      %p256 = por %p254, %p255
      %p257 = scmp.ne.s32.totalorder %s243, %s244
      %p258 = scmp.eq.s32.totalorder %s42, 1
      %p259 = por %p257, %p258
      %p261 = scmp.ne.s32.totalorder %s244, %s260
      %p262 = scmp.eq.s32.totalorder %s42, 0
      %p263 = por %p261, %p262
      %s264 = ssub.s32 %s44, %s51
      %p265 = scmp.eq.s32.totalorder %s264, 0
      %s267 = sadd.s32 %s266, 1
      %s268 = scalar_select %p265, %s266, %s267
      %p271 = pneg %p265
      %p272 = scmp.eq.s32.totalorder %s36, 1
      %p273 = por %p271, %p272
      %p274 = scmp.ne.s32.totalorder %s266, %s269
      %p275 = scmp.eq.s32.totalorder %s36, 0
      %p276 = por %p274, %p275
      %p277 = scmp.ne.s32.totalorder %s266, %s269
      %p278 = scmp.eq.s32.totalorder %s41, 1
      %p279 = por %p277, %p278
      %p280 = scmp.ne.s32.totalorder %s269, %s270
      %p281 = scmp.eq.s32.totalorder %s41, 0
      %p282 = por %p280, %p281
      %p283 = scmp.ne.s32.totalorder %s269, %s270
      %p284 = scmp.eq.s32.totalorder %s42, 1
      %p285 = por %p283, %p284
      %p287 = scmp.ne.s32.totalorder %s270, %s286
      %p288 = scmp.eq.s32.totalorder %s42, 0
      %p289 = por %p287, %p288
      %s290 = ssub.s32 %s44, %s51
      %p291 = scmp.eq.s32.totalorder %s290, 0
      %s293 = sadd.s32 %s292, 1
      %s294 = scalar_select %p291, %s292, %s293
      %p297 = pneg %p291
      %p298 = scmp.eq.s32.totalorder %s36, 1
      %p299 = por %p297, %p298
      %p300 = scmp.ne.s32.totalorder %s292, %s295
      %p301 = scmp.eq.s32.totalorder %s36, 0
      %p302 = por %p300, %p301
      %p303 = scmp.ne.s32.totalorder %s292, %s295
      %p304 = scmp.eq.s32.totalorder %s41, 1
      %p305 = por %p303, %p304
      %p306 = scmp.ne.s32.totalorder %s295, %s296
      %p307 = scmp.eq.s32.totalorder %s41, 0
      %p308 = por %p306, %p307
      %p309 = scmp.ne.s32.totalorder %s295, %s296
      %p310 = scmp.eq.s32.totalorder %s42, 1
      %p311 = por %p309, %p310
      %p313 = scmp.ne.s32.totalorder %s296, %s312
      %p314 = scmp.eq.s32.totalorder %s42, 0
      %p315 = por %p313, %p314
      %s316 = ssub.s32 %s44, %s51
      %p317 = scmp.eq.s32.totalorder %s316, 0
      %s319 = sadd.s32 %s318, 1
      %s320 = scalar_select %p317, %s318, %s319
      %p323 = pneg %p317
      %p324 = scmp.eq.s32.totalorder %s36, 1
      %p325 = por %p323, %p324
      %p326 = scmp.ne.s32.totalorder %s318, %s321
      %p327 = scmp.eq.s32.totalorder %s36, 0
      %p328 = por %p326, %p327
      %p329 = scmp.ne.s32.totalorder %s318, %s321
      %p330 = scmp.eq.s32.totalorder %s41, 1
      %p331 = por %p329, %p330
      %p332 = scmp.ne.s32.totalorder %s321, %s322
      %p333 = scmp.eq.s32.totalorder %s41, 0
      %p334 = por %p332, %p333
      %p335 = scmp.ne.s32.totalorder %s321, %s322
      %p336 = scmp.eq.s32.totalorder %s42, 1
      %p337 = por %p335, %p336
      %p339 = scmp.ne.s32.totalorder %s322, %s338
      %p340 = scmp.eq.s32.totalorder %s42, 0
      %p341 = por %p339, %p340
      %s342 = ssub.s32 %s44, %s51
      %p343 = scmp.eq.s32.totalorder %s342, 0
      %s345 = sadd.s32 %s344, 1
      %s346 = scalar_select %p343, %s344, %s345
      %p349 = pneg %p343
      %p350 = scmp.eq.s32.totalorder %s36, 1
      %p351 = por %p349, %p350
      %p352 = scmp.ne.s32.totalorder %s344, %s347
      %p353 = scmp.eq.s32.totalorder %s36, 0
      %p354 = por %p352, %p353
      %p355 = scmp.ne.s32.totalorder %s344, %s347
      %p356 = scmp.eq.s32.totalorder %s41, 1
      %p357 = por %p355, %p356
      %p358 = scmp.ne.s32.totalorder %s347, %s348
      %p359 = scmp.eq.s32.totalorder %s41, 0
      %p360 = por %p358, %p359
      %p361 = scmp.ne.s32.totalorder %s347, %s348
      %p362 = scmp.eq.s32.totalorder %s42, 1
      %p363 = por %p361, %p362
      %p365 = scmp.ne.s32.totalorder %s348, %s364
      %p366 = scmp.eq.s32.totalorder %s42, 0
      %p367 = por %p365, %p366
      %s368 = ssub.s32 %s44, %s51
      %p369 = scmp.eq.s32.totalorder %s368, 0
      %s371 = sadd.s32 %s370, 1
      %s372 = scalar_select %p369, %s370, %s371
      %p375 = pneg %p369
      %p376 = scmp.eq.s32.totalorder %s36, 1
      %p377 = por %p375, %p376
      %p378 = scmp.ne.s32.totalorder %s370, %s373
      %p379 = scmp.eq.s32.totalorder %s36, 0
      %p380 = por %p378, %p379
      %p381 = scmp.ne.s32.totalorder %s370, %s373
      %p382 = scmp.eq.s32.totalorder %s41, 1
      %p383 = por %p381, %p382
      %p384 = scmp.ne.s32.totalorder %s373, %s374
      %p385 = scmp.eq.s32.totalorder %s41, 0
      %p386 = por %p384, %p385
      %p387 = scmp.ne.s32.totalorder %s373, %s374
      %p388 = scmp.eq.s32.totalorder %s42, 1
      %p389 = por %p387, %p388
      %p391 = scmp.ne.s32.totalorder %s374, %s390
      %p392 = scmp.eq.s32.totalorder %s42, 0
      %p393 = por %p391, %p392
      %s394 = ssub.s32 %s44, %s51
      %p395 = scmp.eq.s32.totalorder %s394, 0
      %s397 = sadd.s32 %s396, 1
      %s398 = scalar_select %p395, %s396, %s397
      %p401 = pneg %p395
      %p402 = scmp.eq.s32.totalorder %s36, 1
      %p403 = por %p401, %p402
      %p404 = scmp.ne.s32.totalorder %s396, %s399
      %p405 = scmp.eq.s32.totalorder %s36, 0
      %p406 = por %p404, %p405
      %p407 = scmp.ne.s32.totalorder %s396, %s399
      %p408 = scmp.eq.s32.totalorder %s41, 1
      %p409 = por %p407, %p408
      %p410 = scmp.ne.s32.totalorder %s399, %s400
      %p411 = scmp.eq.s32.totalorder %s41, 0
      %p412 = por %p410, %p411
      %p413 = scmp.ne.s32.totalorder %s399, %s400
      %p414 = scmp.eq.s32.totalorder %s42, 1
      %p415 = por %p413, %p414
      %p417 = scmp.ne.s32.totalorder %s400, %s416
      %p418 = scmp.eq.s32.totalorder %s42, 0
      %p419 = por %p417, %p418
      %s420 = ssub.s32 %s44, %s51
      %p421 = scmp.eq.s32.totalorder %s420, 0
      %s423 = sadd.s32 %s422, 1
      %s424 = scalar_select %p421, %s422, %s423
      %p427 = pneg %p421
      %p428 = scmp.eq.s32.totalorder %s36, 1
      %p429 = por %p427, %p428
      %p430 = scmp.ne.s32.totalorder %s422, %s425
      %p431 = scmp.eq.s32.totalorder %s36, 0
      %p432 = por %p430, %p431
      %p433 = scmp.ne.s32.totalorder %s422, %s425
      %p434 = scmp.eq.s32.totalorder %s41, 1
      %p435 = por %p433, %p434
      %p436 = scmp.ne.s32.totalorder %s425, %s426
      %p437 = scmp.eq.s32.totalorder %s41, 0
      %p438 = por %p436, %p437
      %p439 = scmp.ne.s32.totalorder %s425, %s426
      %p440 = scmp.eq.s32.totalorder %s42, 1
      %p441 = por %p439, %p440
      %p443 = scmp.ne.s32.totalorder %s426, %s442
      %p444 = scmp.eq.s32.totalorder %s42, 0
      %p445 = por %p443, %p444
      %s446 = ssub.s32 %s44, %s51
      %p447 = scmp.eq.s32.totalorder %s446, 0
      %s449 = sadd.s32 %s448, 1
      %s450 = scalar_select %p447, %s448, %s449
      %p453 = pneg %p447
      %p454 = scmp.eq.s32.totalorder %s36, 1
      %p455 = por %p453, %p454
      %p456 = scmp.ne.s32.totalorder %s448, %s451
      %p457 = scmp.eq.s32.totalorder %s36, 0
      %p458 = por %p456, %p457
      %p459 = scmp.ne.s32.totalorder %s448, %s451
      %p460 = scmp.eq.s32.totalorder %s41, 1
      %p461 = por %p459, %p460
      %p462 = scmp.ne.s32.totalorder %s451, %s452
      %p463 = scmp.eq.s32.totalorder %s41, 0
      %p464 = por %p462, %p463
      %p465 = scmp.ne.s32.totalorder %s451, %s452
      %p466 = scmp.eq.s32.totalorder %s42, 1
      %p467 = por %p465, %p466
      %p469 = scmp.ne.s32.totalorder %s452, %s468
      %p470 = scmp.eq.s32.totalorder %s42, 0
      %p471 = por %p469, %p470
      %s472 = ssub.s32 %s44, %s51
      %p473 = scmp.eq.s32.totalorder %s472, 0
      %s475 = sadd.s32 %s474, 1
      %s476 = scalar_select %p473, %s474, %s475
      %p479 = pneg %p473
      %p480 = scmp.eq.s32.totalorder %s36, 1
      %p481 = por %p479, %p480
      %p482 = scmp.ne.s32.totalorder %s474, %s477
      %p483 = scmp.eq.s32.totalorder %s36, 0
      %p484 = por %p482, %p483
      %p485 = scmp.ne.s32.totalorder %s474, %s477
      %p486 = scmp.eq.s32.totalorder %s41, 1
      %p487 = por %p485, %p486
      %p488 = scmp.ne.s32.totalorder %s477, %s478
      %p489 = scmp.eq.s32.totalorder %s41, 0
      %p490 = por %p488, %p489
      %p491 = scmp.ne.s32.totalorder %s477, %s478
      %p492 = scmp.eq.s32.totalorder %s42, 1
      %p493 = por %p491, %p492
      %p495 = scmp.ne.s32.totalorder %s478, %s494
      %p496 = scmp.eq.s32.totalorder %s42, 0
      %p497 = por %p495, %p496
      %s498 = ssub.s32 %s43, %s55
      %p499 = scmp.eq.s32.totalorder %s498, 0
      %s501 = sadd.s32 %s500, 1
      %s502 = scalar_select %p499, %s500, %s501
      %p505 = pneg %p499
      %p506 = scmp.eq.s32.totalorder %s36, 1
      %p507 = por %p505, %p506
      %p508 = scmp.ne.s32.totalorder %s500, %s503
      %p509 = scmp.eq.s32.totalorder %s36, 0
      %p510 = por %p508, %p509
      %p511 = scmp.ne.s32.totalorder %s500, %s503
      %p512 = scmp.eq.s32.totalorder %s41, 1
      %p513 = por %p511, %p512
      %p514 = scmp.ne.s32.totalorder %s503, %s504
      %p515 = scmp.eq.s32.totalorder %s41, 0
      %p516 = por %p514, %p515
      %p517 = scmp.ne.s32.totalorder %s503, %s504
      %p518 = scmp.eq.s32.totalorder %s42, 1
      %p519 = por %p517, %p518
      %p521 = scmp.ne.s32.totalorder %s504, %s520
      %p522 = scmp.eq.s32.totalorder %s42, 0
      %p523 = por %p521, %p522
      %p524 = scmp.le.s32.totalorder 1, %s36
      %p525 = scmp.lt.s32.totalorder %s36, 3
      %p526 = pnand %p524, %p525
      %p527 = pneg %p526
      // Predicated region
      $region9: #{tpu_custom_call.1} parent=5 // pred_check
        _
      $region10: #{tpu_custom_call.1} parent=5 // pred_check_branch
        %529 = sbr.rel (%p526) target = $region12
      $region11: #{tpu_custom_call.1} parent=5 // pred_region
        %s530 = ssub.s32 %s36, 1
        // Predicated region
        $region13: #{tpu_custom_call.1} parent=11 // pred_check
          %p531 = pneg %p74
        $region14: #{tpu_custom_call.1} parent=11 // pred_check_branch
          %533 = sbr.rel (%p531) target = $region16
        $region15: #{tpu_custom_call.1} parent=11 // pred_region
          %s534 = smul.u32 2, %s45
          %s536 = ssub.s32 256, 256
          %537 = vsyncadd [#allocation9], %s536
          %s538 = smul.addr %s534, 128
          %s539 = scalar_lea.hbm %s2, %s538
          %s540 = sshll.u32 [#allocation8], 4
          %s541 = int_to_ptr.vmem [resolvable:$true] %s540
          %546 = dma.hbm_to_vmem [thread:$0]  %s539, 256, %s541, [#allocation9], 128, 128, 8
        $region16: #{tpu_custom_call.1} parent=11 // pred_fallthru
          _
        // Predicated region
        $region17: #{tpu_custom_call.1} parent=11 // pred_check
          %p547 = pneg %p100
        $region18: #{tpu_custom_call.1} parent=11 // pred_check_branch
          %549 = sbr.rel (%p547) target = $region20
        $region19: #{tpu_custom_call.1} parent=11 // pred_region
          %s550 = smul.u32 2, %s45
          %p551 = scmp.lt.s32.totalorder %s550, 1
          %s552 = scalar_select %p551, %s550, 1
          %s553 = smul.addr %s552, 2
          %s554 = smul.addr %s553, 4
          %s555 = scalar_lea.vmem %s3, %s554
          %s556 = smul.u32 2, %s45
        $region20: #{tpu_custom_call.1} parent=11 // pred_fallthru
          _
      $region12: #{tpu_custom_call.1} parent=5 // pred_fallthru
        _
      %p557 = scmp.lt.s32.totalorder %s36, 2
      // Predicated region
      $region21: #{tpu_custom_call.1} parent=5 // pred_check
        %p558 = pneg %p557
      $region22: #{tpu_custom_call.1} parent=5 // pred_check_branch
        %560 = sbr.rel (%p558) target = $region24
      $region23: #{tpu_custom_call.1} parent=5 // pred_region
        // Predicated region
        $region25: #{tpu_custom_call.1} parent=23 // pred_check
          %p561 = pneg %p120
        $region26: #{tpu_custom_call.1} parent=23 // pred_check_branch
          %563 = sbr.rel (%p561) target = $region28
        $region27: #{tpu_custom_call.1} parent=23 // pred_region
          %p564 = scmp.lt.s32.totalorder %s44, 1
          %s565 = scalar_select %p564, %s44, 1
          %s566 = smul.addr %s565, 8
          %s567 = scalar_lea.vmem %s4, %s566
        $region28: #{tpu_custom_call.1} parent=23 // pred_fallthru
          _
        // Predicated region
        $region29: #{tpu_custom_call.1} parent=23 // pred_check
          %p568 = pneg %p146
        $region30: #{tpu_custom_call.1} parent=23 // pred_check_branch
          %570 = sbr.rel (%p568) target = $region32
        $region31: #{tpu_custom_call.1} parent=23 // pred_region
          %p571 = scmp.lt.s32.totalorder %s44, 1
          %s572 = scalar_select %p571, %s44, 1
          %s573 = smul.addr %s572, 4
          %s574 = smul.addr %s573, 4
          %s575 = scalar_lea.vmem %s5, %s574
        $region32: #{tpu_custom_call.1} parent=23 // pred_fallthru
          _
        // Predicated region
        $region33: #{tpu_custom_call.1} parent=23 // pred_check
          %p576 = pneg %p172
        $region34: #{tpu_custom_call.1} parent=23 // pred_check_branch
          %578 = sbr.rel (%p576) target = $region36
        $region35: #{tpu_custom_call.1} parent=23 // pred_region
          %s579 = sand.u32 %s36, 1
          %s580 = scalar_lea.sflag [#allocation12], %s579
          %s581 = sand.u32 %s162, 1
          %s582 = scalar_lea.vmem [#allocation11], %s581
          %s584 = ssub.s32 16, 16
          %585 = vsyncadd %s580, %s584
          %s586 = smul.addr %s44, 16
          %s587 = scalar_lea.hbm %s6, %s586
          %s589 = sshll.u32 %s582, 4
          %s590 = int_to_ptr.vmem [resolvable:$true] %s589
          %592 = dma.hbm_to_vmem [thread:$0]  %s587, 16, %s590, %s580
        $region36: #{tpu_custom_call.1} parent=23 // pred_fallthru
          _
        // Predicated region
        $region37: #{tpu_custom_call.1} parent=23 // pred_check
          %p593 = pneg %p198
        $region38: #{tpu_custom_call.1} parent=23 // pred_check_branch
          %595 = sbr.rel (%p593) target = $region40
        $region39: #{tpu_custom_call.1} parent=23 // pred_region
          %p596 = scmp.lt.s32.totalorder %s44, 1
          %s597 = scalar_select %p596, %s44, 1
          %s598 = smul.addr %s597, 4
          %s599 = smul.addr %s598, 4
          %s600 = scalar_lea.vmem %s7, %s599
        $region40: #{tpu_custom_call.1} parent=23 // pred_fallthru
          _
        // Predicated region
        $region41: #{tpu_custom_call.1} parent=23 // pred_check
          %p601 = pneg %p224
        $region42: #{tpu_custom_call.1} parent=23 // pred_check_branch
          %603 = sbr.rel (%p601) target = $region44
        $region43: #{tpu_custom_call.1} parent=23 // pred_region
          %p604 = scmp.lt.s32.totalorder %s44, 1
          %s605 = scalar_select %p604, %s44, 1
          %s606 = scalar_lea.vmem %s8, %s605
        $region44: #{tpu_custom_call.1} parent=23 // pred_fallthru
          _
        // Predicated region
        $region45: #{tpu_custom_call.1} parent=23 // pred_check
          %p607 = pneg %p250
        $region46: #{tpu_custom_call.1} parent=23 // pred_check_branch
          %609 = sbr.rel (%p607) target = $region48
        $region47: #{tpu_custom_call.1} parent=23 // pred_region
          %p610 = scmp.lt.s32.totalorder %s44, 1
          %s611 = scalar_select %p610, %s44, 1
          %s612 = smul.addr %s611, 4
          %s613 = smul.addr %s612, 4
          %s614 = scalar_lea.vmem %s9, %s613
        $region48: #{tpu_custom_call.1} parent=23 // pred_fallthru
          _
        // Predicated region
        $region49: #{tpu_custom_call.1} parent=23 // pred_check
          %p615 = pneg %p276
        $region50: #{tpu_custom_call.1} parent=23 // pred_check_branch
          %617 = sbr.rel (%p615) target = $region52
        $region51: #{tpu_custom_call.1} parent=23 // pred_region
          %p618 = scmp.lt.s32.totalorder %s44, 1
          %s619 = scalar_select %p618, %s44, 1
          %s620 = scalar_lea.vmem %s10, %s619
        $region52: #{tpu_custom_call.1} parent=23 // pred_fallthru
          _
        // Predicated region
        $region53: #{tpu_custom_call.1} parent=23 // pred_check
          %p621 = pneg %p302
        $region54: #{tpu_custom_call.1} parent=23 // pred_check_branch
          %623 = sbr.rel (%p621) target = $region56
        $region55: #{tpu_custom_call.1} parent=23 // pred_region
          %p624 = scmp.lt.s32.totalorder %s44, 1
          %s625 = scalar_select %p624, %s44, 1
          %s626 = smul.addr %s625, 4
          %s627 = smul.addr %s626, 4
          %s628 = scalar_lea.vmem %s11, %s627
        $region56: #{tpu_custom_call.1} parent=23 // pred_fallthru
          _
        // Predicated region
        $region57: #{tpu_custom_call.1} parent=23 // pred_check
          %p629 = pneg %p328
        $region58: #{tpu_custom_call.1} parent=23 // pred_check_branch
          %631 = sbr.rel (%p629) target = $region60
        $region59: #{tpu_custom_call.1} parent=23 // pred_region
          %p632 = scmp.lt.s32.totalorder %s44, 1
          %s633 = scalar_select %p632, %s44, 1
          %s634 = scalar_lea.vmem %s12, %s633
        $region60: #{tpu_custom_call.1} parent=23 // pred_fallthru
          _
        // Predicated region
        $region61: #{tpu_custom_call.1} parent=23 // pred_check
          %p635 = pneg %p354
        $region62: #{tpu_custom_call.1} parent=23 // pred_check_branch
          %637 = sbr.rel (%p635) target = $region64
        $region63: #{tpu_custom_call.1} parent=23 // pred_region
          %p638 = scmp.lt.s32.totalorder %s44, 1
          %s639 = scalar_select %p638, %s44, 1
          %s640 = smul.addr %s639, 4
          %s641 = smul.addr %s640, 4
          %s642 = scalar_lea.vmem %s13, %s641
        $region64: #{tpu_custom_call.1} parent=23 // pred_fallthru
          _
        // Predicated region
        $region65: #{tpu_custom_call.1} parent=23 // pred_check
          %p643 = pneg %p380
        $region66: #{tpu_custom_call.1} parent=23 // pred_check_branch
          %645 = sbr.rel (%p643) target = $region68
        $region67: #{tpu_custom_call.1} parent=23 // pred_region
          %p646 = scmp.lt.s32.totalorder %s44, 1
          %s647 = scalar_select %p646, %s44, 1
          %s648 = scalar_lea.vmem %s14, %s647
        $region68: #{tpu_custom_call.1} parent=23 // pred_fallthru
          _
        // Predicated region
        $region69: #{tpu_custom_call.1} parent=23 // pred_check
          %p649 = pneg %p406
        $region70: #{tpu_custom_call.1} parent=23 // pred_check_branch
          %651 = sbr.rel (%p649) target = $region72
        $region71: #{tpu_custom_call.1} parent=23 // pred_region
          %s652 = sand.u32 %s36, 1
          %s653 = scalar_lea.sflag [#allocation12], %s652
          %s654 = sand.u32 %s396, 1
          %s655 = smul.addr %s654, 16
          %s656 = scalar_lea.vmem [#allocation13], %s655
          %s658 = ssub.s32 256, 256
          %659 = vsyncadd %s653, %s658
          %s660 = smul.addr %s44, 4
          %s661 = smul.addr %s660, 64
          %s662 = scalar_lea.hbm %s15, %s661
          %s663 = sshll.u32 %s656, 4
          %s664 = int_to_ptr.vmem [resolvable:$true] %s663
          %669 = dma.hbm_to_vmem [thread:$0]  %s662, 256, %s664, %s653, 64, 64, 4
        $region72: #{tpu_custom_call.1} parent=23 // pred_fallthru
          _
        // Predicated region
        $region73: #{tpu_custom_call.1} parent=23 // pred_check
          %p670 = pneg %p432
        $region74: #{tpu_custom_call.1} parent=23 // pred_check_branch
          %672 = sbr.rel (%p670) target = $region76
        $region75: #{tpu_custom_call.1} parent=23 // pred_region
          %p673 = scmp.lt.s32.totalorder %s44, 1
          %s674 = scalar_select %p673, %s44, 1
          %s675 = scalar_lea.vmem %s16, %s674
        $region76: #{tpu_custom_call.1} parent=23 // pred_fallthru
          _
        // Predicated region
        $region77: #{tpu_custom_call.1} parent=23 // pred_check
          %p676 = pneg %p458
        $region78: #{tpu_custom_call.1} parent=23 // pred_check_branch
          %678 = sbr.rel (%p676) target = $region80
        $region79: #{tpu_custom_call.1} parent=23 // pred_region
          %p679 = scmp.lt.s32.totalorder %s44, 1
          %s680 = scalar_select %p679, %s44, 1
          %s681 = smul.addr %s680, 8
          %s682 = smul.addr %s681, 4
          %s683 = scalar_lea.vmem %s17, %s682
        $region80: #{tpu_custom_call.1} parent=23 // pred_fallthru
          _
        // Predicated region
        $region81: #{tpu_custom_call.1} parent=23 // pred_check
          %p684 = pneg %p484
        $region82: #{tpu_custom_call.1} parent=23 // pred_check_branch
          %686 = sbr.rel (%p684) target = $region84
        $region83: #{tpu_custom_call.1} parent=23 // pred_region
          %p687 = scmp.lt.s32.totalorder %s44, 1
          %s688 = scalar_select %p687, %s44, 1
          %s689 = scalar_lea.vmem %s18, %s688
        $region84: #{tpu_custom_call.1} parent=23 // pred_fallthru
          _
      $region24: #{tpu_custom_call.1} parent=5 // pred_fallthru
        _
      %p690 = scmp.le.s32.totalorder 1, %s36
      %p691 = scmp.lt.s32.totalorder %s36, 3
      %p692 = pnand %p690, %p691
      %p693 = pneg %p692
      // Predicated region
      $region85: #{tpu_custom_call.1} parent=5 // pred_check
        _
      $region86: #{tpu_custom_call.1} parent=5 // pred_check_branch
        %695 = sbr.rel (%p692) target = $region88
      $region87: #{tpu_custom_call.1} parent=5 // pred_region
        %s696 = ssub.s32 %s36, 1
        // Predicated region
        $region89: #{tpu_custom_call.1} parent=87 // pred_check
          %p697 = pneg %p74
        $region90: #{tpu_custom_call.1} parent=87 // pred_check_branch
          %699 = sbr.rel (%p697) target = $region92
        $region91: #{tpu_custom_call.1} parent=87 // pred_region
          %700 = dma.done [#allocation9], 256
        $region92: #{tpu_custom_call.1} parent=87 // pred_fallthru
          _
        %s701 = sand.u32 %s41, 1
        %s702 = scalar_lea.sflag [#allocation12], %s701
        %s703 = sand.u32 %s165, 1
        %s704 = scalar_lea.vmem [#allocation11], %s703
        // Predicated region
        $region93: #{tpu_custom_call.1} parent=87 // pred_check
          %p705 = pneg %p178
        $region94: #{tpu_custom_call.1} parent=87 // pred_check_branch
          %707 = sbr.rel (%p705) target = $region96
        $region95: #{tpu_custom_call.1} parent=87 // pred_region
          %708 = dma.done %s702, 16
        $region96: #{tpu_custom_call.1} parent=87 // pred_fallthru
          _
        %s709 = sand.u32 %s41, 1
        %s710 = scalar_lea.sflag [#allocation12], %s709
        %s711 = sand.u32 %s399, 1
        %s712 = smul.addr %s711, 16
        %s713 = scalar_lea.vmem [#allocation13], %s712
        // Predicated region
        $region97: #{tpu_custom_call.1} parent=87 // pred_check
          %p714 = pneg %p412
        $region98: #{tpu_custom_call.1} parent=87 // pred_check_branch
          %716 = sbr.rel (%p714) target = $region100
        $region99: #{tpu_custom_call.1} parent=87 // pred_region
          %717 = dma.done %s710, 256
        $region100: #{tpu_custom_call.1} parent=87 // pred_fallthru
          _
        %p718 = pneg %p74
        %p719 = pneg %p71
        %s720 = smul.u32 2, %s45
        %p721 = scmp.lt.s32.totalorder %s720, 1
        %s722 = scalar_select %p721, %s720, 1
        %s723 = smul.addr %s722, 2
        %s724 = smul.addr %s723, 4
        %s725 = scalar_lea.vmem %s3, %s724
        %p726 = pneg %p100
        %p727 = pneg %p97
        %p728 = scmp.lt.s32.totalorder %s46, 1
        %s729 = scalar_select %p728, %s46, 1
        %s730 = smul.addr %s729, 8
        %s731 = scalar_lea.vmem %s4, %s730
        %p732 = pneg %p126
        %p733 = pneg %p123
        %p734 = scmp.lt.s32.totalorder %s46, 1
        %s735 = scalar_select %p734, %s46, 1
        %s736 = smul.addr %s735, 4
        %s737 = smul.addr %s736, 4
        %s738 = scalar_lea.vmem %s5, %s737
        %p739 = pneg %p152
        %p740 = pneg %p149
        %s741 = sand.u32 %s41, 1
        %s742 = scalar_lea.sflag [#allocation12], %s741
        %s743 = sand.u32 %s165, 1
        %s744 = scalar_lea.vmem [#allocation11], %s743
        %p745 = pneg %p178
        %p746 = pneg %p175
        %p747 = scmp.lt.s32.totalorder %s46, 1
        %s748 = scalar_select %p747, %s46, 1
        %s749 = smul.addr %s748, 4
        %s750 = smul.addr %s749, 4
        %s751 = scalar_lea.vmem %s7, %s750
        %p752 = pneg %p204
        %p753 = pneg %p201
        %p754 = scmp.lt.s32.totalorder %s46, 1
        %s755 = scalar_select %p754, %s46, 1
        %s756 = scalar_lea.vmem %s8, %s755
        %p757 = pneg %p230
        %p758 = pneg %p227
        %p759 = scmp.lt.s32.totalorder %s46, 1
        %s760 = scalar_select %p759, %s46, 1
        %s761 = smul.addr %s760, 4
        %s762 = smul.addr %s761, 4
        %s763 = scalar_lea.vmem %s9, %s762
        %p764 = pneg %p256
        %p765 = pneg %p253
        %p766 = scmp.lt.s32.totalorder %s46, 1
        %s767 = scalar_select %p766, %s46, 1
        %s768 = scalar_lea.vmem %s10, %s767
        %p769 = pneg %p282
        %p770 = pneg %p279
        %p771 = scmp.lt.s32.totalorder %s46, 1
        %s772 = scalar_select %p771, %s46, 1
        %s773 = smul.addr %s772, 4
        %s774 = smul.addr %s773, 4
        %s775 = scalar_lea.vmem %s11, %s774
        %p776 = pneg %p308
        %p777 = pneg %p305
        %p778 = scmp.lt.s32.totalorder %s46, 1
        %s779 = scalar_select %p778, %s46, 1
        %s780 = scalar_lea.vmem %s12, %s779
        %p781 = pneg %p334
        %p782 = pneg %p331
        %p783 = scmp.lt.s32.totalorder %s46, 1
        %s784 = scalar_select %p783, %s46, 1
        %s785 = smul.addr %s784, 4
        %s786 = smul.addr %s785, 4
        %s787 = scalar_lea.vmem %s13, %s786
        %p788 = pneg %p360
        %p789 = pneg %p357
        %p790 = scmp.lt.s32.totalorder %s46, 1
        %s791 = scalar_select %p790, %s46, 1
        %s792 = scalar_lea.vmem %s14, %s791
        %p793 = pneg %p386
        %p794 = pneg %p383
        %s795 = sand.u32 %s41, 1
        %s796 = scalar_lea.sflag [#allocation12], %s795
        %s797 = sand.u32 %s399, 1
        %s798 = smul.addr %s797, 16
        %s799 = scalar_lea.vmem [#allocation13], %s798
        %p800 = pneg %p412
        %p801 = pneg %p409
        %p802 = scmp.lt.s32.totalorder %s46, 1
        %s803 = scalar_select %p802, %s46, 1
        %s804 = scalar_lea.vmem %s16, %s803
        %p805 = pneg %p438
        %p806 = pneg %p435
        %p807 = scmp.lt.s32.totalorder %s46, 1
        %s808 = scalar_select %p807, %s46, 1
        %s809 = smul.addr %s808, 8
        %s810 = smul.addr %s809, 4
        %s811 = scalar_lea.vmem %s17, %s810
        %p812 = pneg %p464
        %p813 = pneg %p461
        %p814 = scmp.lt.s32.totalorder %s46, 1
        %s815 = scalar_select %p814, %s46, 1
        %s816 = scalar_lea.vmem %s18, %s815
        %p817 = pneg %p490
        %p818 = pneg %p487
        %p819 = pneg %p516
        %p820 = pneg %p513
        %s821 = smul.u32 2, %s45
        %s822 = smul.u32 2, %s45
        %p823 = scmp.lt.s32.totalorder %s822, 1
        %s824 = scalar_select %p823, %s822, 1
        %s825 = smul.addr %s824, 2
        %s826 = smul.addr %s825, 4
        %s827 = scalar_lea.vmem %s3, %s826
        %s828 = smul.u32 2, %s45
        %p829 = scmp.lt.s32.totalorder %s46, 1
        %s830 = scalar_select %p829, %s46, 1
        %s831 = smul.addr %s830, 8
        %s832 = scalar_lea.vmem %s4, %s831
        %p833 = scmp.lt.s32.totalorder %s46, 1
        %s834 = scalar_select %p833, %s46, 1
        %s835 = smul.addr %s834, 4
        %s836 = smul.addr %s835, 4
        %s837 = scalar_lea.vmem %s5, %s836
        %p838 = scmp.lt.s32.totalorder %s46, 1
        %s839 = scalar_select %p838, %s46, 1
        %s840 = smul.addr %s839, 4
        %s841 = smul.addr %s840, 4
        %s842 = scalar_lea.vmem %s7, %s841
        %p843 = scmp.lt.s32.totalorder %s46, 1
        %s844 = scalar_select %p843, %s46, 1
        %s845 = scalar_lea.vmem %s8, %s844
        %p846 = scmp.lt.s32.totalorder %s46, 1
        %s847 = scalar_select %p846, %s46, 1
        %s848 = smul.addr %s847, 4
        %s849 = smul.addr %s848, 4
        %s850 = scalar_lea.vmem %s9, %s849
        %p851 = scmp.lt.s32.totalorder %s46, 1
        %s852 = scalar_select %p851, %s46, 1
        %s853 = scalar_lea.vmem %s10, %s852
        %p854 = scmp.lt.s32.totalorder %s46, 1
        %s855 = scalar_select %p854, %s46, 1
        %s856 = smul.addr %s855, 4
        %s857 = smul.addr %s856, 4
        %s858 = scalar_lea.vmem %s11, %s857
        %p859 = scmp.lt.s32.totalorder %s46, 1
        %s860 = scalar_select %p859, %s46, 1
        %s861 = scalar_lea.vmem %s12, %s860
        %p862 = scmp.lt.s32.totalorder %s46, 1
        %s863 = scalar_select %p862, %s46, 1
        %s864 = smul.addr %s863, 4
        %s865 = smul.addr %s864, 4
        %s866 = scalar_lea.vmem %s13, %s865
        %p867 = scmp.lt.s32.totalorder %s46, 1
        %s868 = scalar_select %p867, %s46, 1
        %s869 = scalar_lea.vmem %s14, %s868
        %p870 = scmp.lt.s32.totalorder %s46, 1
        %s871 = scalar_select %p870, %s46, 1
        %s872 = scalar_lea.vmem %s16, %s871
        %p873 = scmp.lt.s32.totalorder %s46, 1
        %s874 = scalar_select %p873, %s46, 1
        %s875 = smul.addr %s874, 8
        %s876 = smul.addr %s875, 4
        %s877 = scalar_lea.vmem %s17, %s876
        %p878 = scmp.lt.s32.totalorder %s46, 1
        %s879 = scalar_select %p878, %s46, 1
        %s880 = scalar_lea.vmem %s18, %s879
        %s881 = smul.u32 2, %s45
        %s883 = smul.u32 %s45, 2
        %p884 = scmp.eq.s32.totalorder %s46, 0
        // Predicated region
        $region101: #{tpu_custom_call.1} parent=87 // pred_check
          %p885 = pneg %p884
        $region102: #{tpu_custom_call.1} parent=87 // pred_check_branch
          %887 = sbr.rel (%p885) target = $region104
        $region103: #{tpu_custom_call.1} parent=87 // pred_region
          %v888 = vld [vmem:[#allocation8] sm:$0xff]
          %v889 = vld [vmem:[#allocation8 + $0x8] sm:$0xff]
          %vm890 = vcmask 261120
          %891 = vst.msk [vmem:[#allocation2] sm:$0xff] %vm890, %v888
          %892 = vst.msk [vmem:[#allocation2 + $0x8] sm:$0xff] %vm890, %v889
          %v893 = vlaneseq
          %v894 = vshrl.u32 %v893, 7
          %v895 = vlaneseq
          %v896 = vand.u32 %v895, 127
          %s897 = sld [smem:[#allocation6 + %s883]]
          %s898 = sld [smem:[#allocation7 + %s883]]
          %vm899 = vcmp.gt.s32.totalorder %v896, %v894
          %v900 = vstv %s897
          %vm901 = vcmp.ge.s32.totalorder %v896, %v900
          %vm902 = vmor %vm899, %vm901
          %v903 = vsel %vm902, -1e+09, 0.0
          %vm904 = vcmask 64512
          %905 = vst.msk [vmem:[#allocation3] sm:$0xff] %vm904, %v903
          %v906 = vstv %s898
          %vm907 = vcmp.ge.s32.totalorder %v896, %v906
          %v908 = vsel %vm907, -1e+09, 0.0
          %vm909 = vcmask 80896
          %910 = vst.msk [vmem:[#allocation4] sm:$0xff] %vm909, %v908
          %s911 = sadd.s32 %s883, 1
          %s912 = sld [smem:[#allocation6 + %s911]]
          %s913 = sld [smem:[#allocation7 + %s911]]
          %v914 = vstv %s912
          %vm915 = vcmp.ge.s32.totalorder %v896, %v914
          %vm916 = vmor %vm899, %vm915
          %v917 = vsel %vm916, -1e+09, 0.0
          %s918 = scalar_lea.vmem [#allocation3], 8
          %919 = vst.msk [vmem:[%s918] sm:$0xff] %vm904, %v917
          %v920 = vstv %s913
          %vm921 = vcmp.ge.s32.totalorder %v896, %v920
          %v922 = vsel %vm921, -1e+09, 0.0
          %s923 = scalar_lea.vmem [#allocation4], 8
          %924 = vst.msk [vmem:[%s923] sm:$0xff] %vm909, %v922
        $region104: #{tpu_custom_call.1} parent=87 // pred_fallthru
          _
        %v925 = vld [vmem:[#allocation2] sm:$0xff]
        %v926 = vld [vmem:[#allocation2 + $0x8] sm:$0xff]
        %v927 = vld [vmem:[%s827] sm:$0xf]
        %v928 = vld [vmem:[%s827 + $0x4] sm:$0x1]
        %v929 = vld [vmem:[%s827 + $0x8] sm:$0xf]
        %v930 = vld [vmem:[%s827 + $0xc] sm:$0x1]
        %v931 = vld [vmem:[%s832] sm:$0x3f]
        %v932 = vld [vmem:[%s837] sm:$0xf]
        %v933 = vld [vmem:[%s837 + $0x4] sm:$0xf]
        %v934 = vld [vmem:[%s837 + $0x8] sm:$0xf]
        %v935 = vld [vmem:[%s837 + $0xc] sm:$0xf]
        %v936 = vld [vmem:[%s704] sm:$0x1]
        %v937 = vld [vmem:[%s842] sm:$0xf]
        %v938 = vld [vmem:[%s842 + $0x4] sm:$0xf]
        %v939 = vld [vmem:[%s842 + $0x8] sm:$0xf]
        %v940 = vld [vmem:[%s842 + $0xc] sm:$0xf]
        %v941 = vld [vmem:[%s845] sm:$0x1]
        %v942 = vld [vmem:[%s850] sm:$0xf]
        %v943 = vld [vmem:[%s850 + $0x4] sm:$0xf]
        %v944 = vld [vmem:[%s850 + $0x8] sm:$0xf]
        %v945 = vld [vmem:[%s850 + $0xc] sm:$0xf]
        %v946 = vld [vmem:[%s853] sm:$0x1]
        %v947 = vld [vmem:[%s858] sm:$0xf]
        %v948 = vld [vmem:[%s858 + $0x4] sm:$0xf]
        %v949 = vld [vmem:[%s858 + $0x8] sm:$0xf]
        %v950 = vld [vmem:[%s858 + $0xc] sm:$0xf]
        %v951 = vld [vmem:[%s861] sm:$0x1]
        %v952 = vld [vmem:[%s866] sm:$0xf]
        %v953 = vld [vmem:[%s866 + $0x4] sm:$0xf]
        %v954 = vld [vmem:[%s866 + $0x8] sm:$0xf]
        %v955 = vld [vmem:[%s866 + $0xc] sm:$0xf]
        %v956 = vld [vmem:[%s869] sm:$0x1]
        %v957 = vld [vmem:[%s713] sm:$0xf]
        %v958 = vld [vmem:[%s713 + $0x4] sm:$0xf]
        %v959 = vld [vmem:[%s713 + $0x8] sm:$0xf]
        %v960 = vld [vmem:[%s713 + $0xc] sm:$0xf]
        %v961 = vld [vmem:[%s872] sm:$0x1]
        %v962 = vld [vmem:[%s877] sm:$0xf]
        %v963 = vld [vmem:[%s877 + $0x4] sm:$0xf]
        %v964 = vld [vmem:[%s877 + $0x8] sm:$0xf]
        %v965 = vld [vmem:[%s877 + $0xc] sm:$0xf]
        %v966 = vld [vmem:[%s877 + $0x10] sm:$0xf]
        %v967 = vld [vmem:[%s877 + $0x14] sm:$0xf]
        %v968 = vld [vmem:[%s877 + $0x18] sm:$0xf]
        %v969 = vld [vmem:[%s877 + $0x1c] sm:$0xf]
        %v970 = vld [vmem:[%s880] sm:$0x1]
        %v971 = vld [vmem:[#allocation3] sm:$0xff]
        %v972 = vld [vmem:[#allocation3 + $0x8] sm:$0xff]
        %v973 = vld [vmem:[#allocation4] sm:$0xff]
        %v974 = vld [vmem:[#allocation4 + $0x8] sm:$0xff]
        %vm975 = vcmask 261120
        %v976 = vsel %vm975, %v925, 0.0
        %977 = vadd.xlane.f32.xlu0 %v976
        %v978 = vpop.xlane.xlu0 %977
        %v979 = vsel %vm975, %v926, 0.0
        %980 = vadd.xlane.f32.xlu0 %v979
        %v981 = vpop.xlane.xlu0 %980
        %v982 = vrcp.pop 32.0
        %v983 = vmul.f32 %v978, %v982
        %v984 = vmul.f32 %v981, %v982
        %v985 = vsub.f32 %v925, %v983
        %v986 = vsub.f32 %v926, %v984
        %v987 = vmul.f32 %v985, %v985
        %v988 = vmul.f32 %v986, %v986
        %v989 = vsel %vm975, %v987, 0.0
        %990 = vadd.xlane.f32.xlu0 %v989
        %v991 = vpop.xlane.xlu0 %990
        %v992 = vsel %vm975, %v988, 0.0
        %993 = vadd.xlane.f32.xlu0 %v992
        %v994 = vpop.xlane.xlu0 %993
        %v995 = vmul.f32 %v991, %v982
        %v996 = vmul.f32 %v994, %v982
        %v997 = vadd.f32 %v995, 1e-05
        %v998 = vadd.f32 %v996, 1e-05
        %v999 = vrsqrt.pop %v997
        %v1000 = vrsqrt.pop %v998
        %v1001 = vmul.f32 %v985, %v999
        %v1002 = vmul.f32 %v986, %v1000
        %v1003 = vlaneseq
        %v1004 = vshrl.u32 %v1003, 7
        %v1005 = vsub.s32 0, %v1004
        %v1006 = vrot.slane %v931, %v1005
        %v1007 = vmul.f32 %v1001, %v1006
        %v1008 = vmul.f32 %v1002, %v1006
        %v1009 = vlaneseq
        %v1010 = vshrl.u32 %v1009, 7
        %v1011 = vsub.s32 1, %v1010
        %v1012 = vrot.slane %v931, %v1011
        %v1013 = vadd.f32 %v1007, %v1012
        %v1014 = vadd.f32 %v1008, %v1012
        %v1015 = vpack.c.bf16 %v1014, %v1013
        %v1017 = vlaneseq
        %v1018 = vshrl.u32 %v1017, 7
        %v1019 = vsub.s32 0, %v1018
        %v1020 = vrot.slane %v936, %v1019
        %v1026 = vunpack.c.l.b16 %v932
        %v1027 = vunpack.c.l.b16 %v933
        %v1028 = vunpack.c.l.b16 %v934
        %v1029 = vunpack.c.l.b16 %v935
        %v1030 = vpack.c.b16 %v1027, %v1026
        %v1031 = vpack.c.b16 %v1029, %v1028
        %v1035 = vsel %vm975, %v1015, 0
        %1037 = vmatprep.subr.bf16.mxu0 0
        %1038 = vmatpush1.bf16.msra.mxu0 0
        %1039 = vmatprep.subr.bf16.mxu0 0
        %1040 = vmatpush1.bf16.msra.mxu0 0
        %1041 = vmatprep.subr.bf16.mxu0 0
        %1042 = vmatpush1.bf16.msra.mxu0 0
        %1043 = vmatprep.subr.bf16.mxu0 0
        %1044 = vmatpush1.bf16.msra.mxu0 0
        %1045 = vmatprep.subr.bf16.mxu0 0
        %1046 = vmatpush1.bf16.msra.mxu0 0
        %1047 = vmatprep.subr.bf16.mxu0 0
        %1048 = vmatpush1.bf16.msra.mxu0 0
        %1049 = vmatprep.subr.bf16.mxu0 0
        %1050 = vmatpush1.bf16.msra.mxu0 %v1031
        %1051 = vmatprep.subr.bf16.mxu0 0
        %1052 = vmatpush1.bf16.msra.mxu0 %v1030
        %1053 = vmatprep.subr.bf16.mxu0 0
        %1054 = vmatpush2.bf16.msra.mxu0 0
        %1055 = vmatprep.subr.bf16.mxu0 0
        %1056 = vmatpush2.bf16.msra.mxu0 0
        %1057 = vmatprep.subr.bf16.mxu0 0
        %1058 = vmatpush2.bf16.msra.mxu0 0
        %1059 = vmatprep.subr.bf16.mxu0 0
        %1060 = vmatpush2.bf16.msra.mxu0 0
        %1061 = vmatprep.subr.bf16.mxu0 0
        %1062 = vmatpush2.bf16.msra.mxu0 0
        %1063 = vmatprep.subr.bf16.mxu0 0
        %1064 = vmatpush2.bf16.msra.mxu0 0
        %1065 = vmatprep.subr.bf16.mxu0 0
        %1066 = vmatpush2.bf16.msra.mxu0 0
        %1067 = vmatprep.subr.bf16.mxu0 0
        %1068 = vmatpush2.bf16.msra.mxu0 0
        %1069 = vmatprep.mubr.bf16.mxu0 0
        %1070 = vmatmul.mubr.bf16.gmra.mxu0 %v1035
        %v1071 = vpop.f32.mrf.mxu0
        %v1072 = vadd.f32 %v1020, %v1071
        %v1073 = vpop.f32.mrf.mxu0
        %v1074 = vpop.f32.mrf.mxu0
        %v1075 = vadd.f32 %v1020, %v1074
        %v1076 = vpop.f32.mrf.mxu0
        %1077 = vdwg.mxu0
        %v1078 = vpack.c.bf16 %v1072, %v1072
        %v1079 = vpack.c.bf16 %v1075, %v1075
        %1081 = vrot.lane.b32.xlu0 %v1078, 96
        %v1082 = vpop.permute.xlu0 %1081
        %vm1083 = vcmask 64512
        %v1085 = vsel %vm1083, %v1078, 0
        %v1088 = vsel %vm1083, %v1082, 0
        %1090 = vmatprep.subr.bf16.mxu0 0
        %1091 = vmatpush1.bf16.xpose.msra.mxu0 0
        %1092 = vmatprep.subr.bf16.mxu0 0
        %1093 = vmatpush1.bf16.xpose.msra.mxu0 0
        %1094 = vmatprep.subr.bf16.mxu0 0
        %1095 = vmatpush1.bf16.xpose.msra.mxu0 0
        %1096 = vmatprep.subr.bf16.mxu0 0
        %1097 = vmatpush1.bf16.xpose.msra.mxu0 0
        %1098 = vmatprep.subr.bf16.mxu0 0
        %1099 = vmatpush1.bf16.xpose.msra.mxu0 0
        %1100 = vmatprep.subr.bf16.mxu0 0
        %1101 = vmatpush1.bf16.xpose.msra.mxu0 0
        %1102 = vmatprep.subr.bf16.mxu0 0
        %1103 = vmatpush1.bf16.xpose.msra.mxu0 0
        %1104 = vmatprep.subr.bf16.mxu0 0
        %1105 = vmatpush1.bf16.xpose.msra.mxu0 %v1088
        %1106 = vmatprep.subr.bf16.mxu0 0
        %1107 = vmatpush2.bf16.xpose.msra.mxu0 0
        %1108 = vmatprep.subr.bf16.mxu0 0
        %1109 = vmatpush2.bf16.xpose.msra.mxu0 0
        %1110 = vmatprep.subr.bf16.mxu0 0
        %1111 = vmatpush2.bf16.xpose.msra.mxu0 0
        %1112 = vmatprep.subr.bf16.mxu0 0
        %1113 = vmatpush2.bf16.xpose.msra.mxu0 0
        %1114 = vmatprep.subr.bf16.mxu0 0
        %1115 = vmatpush2.bf16.xpose.msra.mxu0 0
        %1116 = vmatprep.subr.bf16.mxu0 0
        %1117 = vmatpush2.bf16.xpose.msra.mxu0 0
        %1118 = vmatprep.subr.bf16.mxu0 0
        %1119 = vmatpush2.bf16.xpose.msra.mxu0 0
        %1120 = vmatprep.subr.bf16.mxu0 0
        %1121 = vmatpush2.bf16.xpose.msra.mxu0 0
        %1122 = vmatprep.mubr.bf16.mxu0 0
        %1123 = vmatmul.mubr.bf16.gmra.mxu0 %v1085
        %v1124 = vpop.f32.mrf.mxu0
        %v1125 = vadd.f32 0.0, %v1124
        %v1126 = vpop.f32.mrf.mxu0
        %v1127 = vpop.f32.mrf.mxu0
        %v1128 = vpop.f32.mrf.mxu0
        %1129 = vdwg.mxu0
        %1131 = vrot.lane.b32.xlu0 %v1079, 96
        %v1132 = vpop.permute.xlu0 %1131
        %v1134 = vsel %vm1083, %v1079, 0
        %v1137 = vsel %vm1083, %v1132, 0
        %1139 = vmatprep.subr.bf16.mxu0 0
        %1140 = vmatpush1.bf16.xpose.msra.mxu0 0
        %1141 = vmatprep.subr.bf16.mxu0 0
        %1142 = vmatpush1.bf16.xpose.msra.mxu0 0
        %1143 = vmatprep.subr.bf16.mxu0 0
        %1144 = vmatpush1.bf16.xpose.msra.mxu0 0
        %1145 = vmatprep.subr.bf16.mxu0 0
        %1146 = vmatpush1.bf16.xpose.msra.mxu0 0
        %1147 = vmatprep.subr.bf16.mxu0 0
        %1148 = vmatpush1.bf16.xpose.msra.mxu0 0
        %1149 = vmatprep.subr.bf16.mxu0 0
        %1150 = vmatpush1.bf16.xpose.msra.mxu0 0
        %1151 = vmatprep.subr.bf16.mxu0 0
        %1152 = vmatpush1.bf16.xpose.msra.mxu0 0
        %1153 = vmatprep.subr.bf16.mxu0 0
        %1154 = vmatpush1.bf16.xpose.msra.mxu0 %v1137
        %1155 = vmatprep.subr.bf16.mxu0 0
        %1156 = vmatpush2.bf16.xpose.msra.mxu0 0
        %1157 = vmatprep.subr.bf16.mxu0 0
        %1158 = vmatpush2.bf16.xpose.msra.mxu0 0
        %1159 = vmatprep.subr.bf16.mxu0 0
        %1160 = vmatpush2.bf16.xpose.msra.mxu0 0
        %1161 = vmatprep.subr.bf16.mxu0 0
        %1162 = vmatpush2.bf16.xpose.msra.mxu0 0
        %1163 = vmatprep.subr.bf16.mxu0 0
        %1164 = vmatpush2.bf16.xpose.msra.mxu0 0
        %1165 = vmatprep.subr.bf16.mxu0 0
        %1166 = vmatpush2.bf16.xpose.msra.mxu0 0
        %1167 = vmatprep.subr.bf16.mxu0 0
        %1168 = vmatpush2.bf16.xpose.msra.mxu0 0
        %1169 = vmatprep.subr.bf16.mxu0 0
        %1170 = vmatpush2.bf16.xpose.msra.mxu0 0
        %1171 = vmatprep.mubr.bf16.mxu0 0
        %1172 = vmatmul.mubr.bf16.gmra.mxu0 %v1134
        %v1173 = vpop.f32.mrf.mxu0
        %v1174 = vadd.f32 0.0, %v1173
        %v1175 = vpop.f32.mrf.mxu0
        %v1176 = vpop.f32.mrf.mxu0
        %v1177 = vpop.f32.mrf.mxu0
        %1178 = vdwg.mxu0
        %v1179 = vmul.f32 %v1125, 0.35355338
        %v1180 = vmul.f32 %v1174, 0.35355338
        %v1181 = vadd.f32 %v1179, %v971
        %v1182 = vadd.f32 %v1180, %v972
        %v1183 = vsel %vm1083, %v1181, -inf
        %1184 = vmax.xlane.f32.xlu0 %v1183
        %v1185 = vpop.xlane.xlu0 %1184
        %v1186 = vsel %vm1083, %v1182, -inf
        %1187 = vmax.xlane.f32.xlu0 %v1186
        %v1188 = vpop.xlane.xlu0 %1187
        %v1189 = vsub.f32 %v1181, %v1185
        %v1190 = vsub.f32 %v1182, %v1188
        %v1191 = vmul.f32 %v1189, 1.442695
        %v1192 = vpow.pop %v1191
        %v1193 = vmul.f32 %v1190, 1.442695
        %v1194 = vpow.pop %v1193
        %v1195 = vsel %vm1083, %v1192, 0.0
        %1196 = vadd.xlane.f32.xlu0 %v1195
        %v1197 = vpop.xlane.xlu0 %1196
        %v1198 = vsel %vm1083, %v1194, 0.0
        %1199 = vadd.xlane.f32.xlu0 %v1198
        %v1200 = vpop.xlane.xlu0 %1199
        %v1201 = vrcp.pop %v1197
        %v1202 = vmul.f32 %v1192, %v1201
        %v1203 = vrcp.pop %v1200
        %v1204 = vmul.f32 %v1194, %v1203
        %v1205 = vpack.c.bf16 %v1202, %v1202
        %v1206 = vpack.c.bf16 %v1204, %v1204
        %1207 = vrot.lane.b32.xlu0 %v1078, 64
        %v1208 = vpop.permute.xlu0 %1207
        %v1210 = vsel %vm1083, %v1205, 0
        %vm1212 = vcmask 1043456
        %v1214 = vsel %vm1212, %v1208, 0
        %1216 = vmatprep.subr.bf16.mxu0 0
        %1217 = vmatpush1.bf16.msra.mxu0 0
        %1218 = vmatprep.subr.bf16.mxu0 0
        %1219 = vmatpush1.bf16.msra.mxu0 0
        %1220 = vmatprep.subr.bf16.mxu0 0
        %1221 = vmatpush1.bf16.msra.mxu0 0
        %1222 = vmatprep.subr.bf16.mxu0 0
        %1223 = vmatpush1.bf16.msra.mxu0 0
        %1224 = vmatprep.subr.bf16.mxu0 0
        %1225 = vmatpush1.bf16.msra.mxu0 0
        %1226 = vmatprep.subr.bf16.mxu0 0
        %1227 = vmatpush1.bf16.msra.mxu0 0
        %1228 = vmatprep.subr.bf16.mxu0 0
        %1229 = vmatpush1.bf16.msra.mxu0 0
        %1230 = vmatprep.subr.bf16.mxu0 0
        %1231 = vmatpush1.bf16.msra.mxu0 %v1214
        %1232 = vmatprep.subr.bf16.mxu0 0
        %1233 = vmatpush2.bf16.msra.mxu0 0
        %1234 = vmatprep.subr.bf16.mxu0 0
        %1235 = vmatpush2.bf16.msra.mxu0 0
        %1236 = vmatprep.subr.bf16.mxu0 0
        %1237 = vmatpush2.bf16.msra.mxu0 0
        %1238 = vmatprep.subr.bf16.mxu0 0
        %1239 = vmatpush2.bf16.msra.mxu0 0
        %1240 = vmatprep.subr.bf16.mxu0 0
        %1241 = vmatpush2.bf16.msra.mxu0 0
        %1242 = vmatprep.subr.bf16.mxu0 0
        %1243 = vmatpush2.bf16.msra.mxu0 0
        %1244 = vmatprep.subr.bf16.mxu0 0
        %1245 = vmatpush2.bf16.msra.mxu0 0
        %1246 = vmatprep.subr.bf16.mxu0 0
        %1247 = vmatpush2.bf16.msra.mxu0 0
        %1248 = vmatprep.mubr.bf16.mxu0 0
        %1249 = vmatmul.mubr.bf16.gmra.mxu0 %v1210
        %v1250 = vpop.f32.mrf.mxu0
        %v1251 = vadd.f32 0.0, %v1250
        %v1252 = vpop.f32.mrf.mxu0
        %v1253 = vpop.f32.mrf.mxu0
        %v1254 = vpop.f32.mrf.mxu0
        %1255 = vdwg.mxu0
        %1256 = vrot.lane.b32.xlu0 %v1079, 64
        %v1257 = vpop.permute.xlu0 %1256
        %v1259 = vsel %vm1083, %v1206, 0
        %v1262 = vsel %vm1212, %v1257, 0
        %1264 = vmatprep.subr.bf16.mxu0 0
        %1265 = vmatpush1.bf16.msra.mxu0 0
        %1266 = vmatprep.subr.bf16.mxu0 0
        %1267 = vmatpush1.bf16.msra.mxu0 0
        %1268 = vmatprep.subr.bf16.mxu0 0
        %1269 = vmatpush1.bf16.msra.mxu0 0
        %1270 = vmatprep.subr.bf16.mxu0 0
        %1271 = vmatpush1.bf16.msra.mxu0 0
        %1272 = vmatprep.subr.bf16.mxu0 0
        %1273 = vmatpush1.bf16.msra.mxu0 0
        %1274 = vmatprep.subr.bf16.mxu0 0
        %1275 = vmatpush1.bf16.msra.mxu0 0
        %1276 = vmatprep.subr.bf16.mxu0 0
        %1277 = vmatpush1.bf16.msra.mxu0 0
        %1278 = vmatprep.subr.bf16.mxu0 0
        %1279 = vmatpush1.bf16.msra.mxu0 %v1262
        %1280 = vmatprep.subr.bf16.mxu0 0
        %1281 = vmatpush2.bf16.msra.mxu0 0
        %1282 = vmatprep.subr.bf16.mxu0 0
        %1283 = vmatpush2.bf16.msra.mxu0 0
        %1284 = vmatprep.subr.bf16.mxu0 0
        %1285 = vmatpush2.bf16.msra.mxu0 0
        %1286 = vmatprep.subr.bf16.mxu0 0
        %1287 = vmatpush2.bf16.msra.mxu0 0
        %1288 = vmatprep.subr.bf16.mxu0 0
        %1289 = vmatpush2.bf16.msra.mxu0 0
        %1290 = vmatprep.subr.bf16.mxu0 0
        %1291 = vmatpush2.bf16.msra.mxu0 0
        %1292 = vmatprep.subr.bf16.mxu0 0
        %1293 = vmatpush2.bf16.msra.mxu0 0
        %1294 = vmatprep.subr.bf16.mxu0 0
        %1295 = vmatpush2.bf16.msra.mxu0 0
        %1296 = vmatprep.mubr.bf16.mxu0 0
        %1297 = vmatmul.mubr.bf16.gmra.mxu0 %v1259
        %v1298 = vpop.f32.mrf.mxu0
        %v1299 = vadd.f32 0.0, %v1298
        %v1300 = vpop.f32.mrf.mxu0
        %v1301 = vpop.f32.mrf.mxu0
        %v1302 = vpop.f32.mrf.mxu0
        %1303 = vdwg.mxu0
        %1304 = vrot.lane.b32.xlu0 %v1078, 120
        %v1305 = vpop.permute.xlu0 %1304
        %1306 = vrot.lane.b32.xlu0 %v1078, 88
        %v1307 = vpop.permute.xlu0 %1306
        %v1309 = vsel %vm1083, %v1305, 0
        %v1312 = vsel %vm1083, %v1307, 0
        %1314 = vmatprep.subr.bf16.mxu0 0
        %1315 = vmatpush1.bf16.xpose.msra.mxu0 0
        %1316 = vmatprep.subr.bf16.mxu0 0
        %1317 = vmatpush1.bf16.xpose.msra.mxu0 0
        %1318 = vmatprep.subr.bf16.mxu0 0
        %1319 = vmatpush1.bf16.xpose.msra.mxu0 0
        %1320 = vmatprep.subr.bf16.mxu0 0
        %1321 = vmatpush1.bf16.xpose.msra.mxu0 0
        %1322 = vmatprep.subr.bf16.mxu0 0
        %1323 = vmatpush1.bf16.xpose.msra.mxu0 0
        %1324 = vmatprep.subr.bf16.mxu0 0
        %1325 = vmatpush1.bf16.xpose.msra.mxu0 0
        %1326 = vmatprep.subr.bf16.mxu0 0
        %1327 = vmatpush1.bf16.xpose.msra.mxu0 0
        %1328 = vmatprep.subr.bf16.mxu0 0
        %1329 = vmatpush1.bf16.xpose.msra.mxu0 %v1312
        %1330 = vmatprep.subr.bf16.mxu0 0
        %1331 = vmatpush2.bf16.xpose.msra.mxu0 0
        %1332 = vmatprep.subr.bf16.mxu0 0
        %1333 = vmatpush2.bf16.xpose.msra.mxu0 0
        %1334 = vmatprep.subr.bf16.mxu0 0
        %1335 = vmatpush2.bf16.xpose.msra.mxu0 0
        %1336 = vmatprep.subr.bf16.mxu0 0
        %1337 = vmatpush2.bf16.xpose.msra.mxu0 0
        %1338 = vmatprep.subr.bf16.mxu0 0
        %1339 = vmatpush2.bf16.xpose.msra.mxu0 0
        %1340 = vmatprep.subr.bf16.mxu0 0
        %1341 = vmatpush2.bf16.xpose.msra.mxu0 0
        %1342 = vmatprep.subr.bf16.mxu0 0
        %1343 = vmatpush2.bf16.xpose.msra.mxu0 0
        %1344 = vmatprep.subr.bf16.mxu0 0
        %1345 = vmatpush2.bf16.xpose.msra.mxu0 0
        %1346 = vmatprep.mubr.bf16.mxu0 0
        %1347 = vmatmul.mubr.bf16.gmra.mxu0 %v1309
        %v1348 = vpop.f32.mrf.mxu0
        %v1349 = vadd.f32 0.0, %v1348
        %v1350 = vpop.f32.mrf.mxu0
        %v1351 = vpop.f32.mrf.mxu0
        %v1352 = vpop.f32.mrf.mxu0
        %1353 = vdwg.mxu0
        %1354 = vrot.lane.b32.xlu0 %v1079, 120
        %v1355 = vpop.permute.xlu0 %1354
        %1356 = vrot.lane.b32.xlu0 %v1079, 88
        %v1357 = vpop.permute.xlu0 %1356
        %v1359 = vsel %vm1083, %v1355, 0
        %v1362 = vsel %vm1083, %v1357, 0
        %1364 = vmatprep.subr.bf16.mxu0 0
        %1365 = vmatpush1.bf16.xpose.msra.mxu0 0
        %1366 = vmatprep.subr.bf16.mxu0 0
        %1367 = vmatpush1.bf16.xpose.msra.mxu0 0
        %1368 = vmatprep.subr.bf16.mxu0 0
        %1369 = vmatpush1.bf16.xpose.msra.mxu0 0
        %1370 = vmatprep.subr.bf16.mxu0 0
        %1371 = vmatpush1.bf16.xpose.msra.mxu0 0
        %1372 = vmatprep.subr.bf16.mxu0 0
        %1373 = vmatpush1.bf16.xpose.msra.mxu0 0
        %1374 = vmatprep.subr.bf16.mxu0 0
        %1375 = vmatpush1.bf16.xpose.msra.mxu0 0
        %1376 = vmatprep.subr.bf16.mxu0 0
        %1377 = vmatpush1.bf16.xpose.msra.mxu0 0
        %1378 = vmatprep.subr.bf16.mxu0 0
        %1379 = vmatpush1.bf16.xpose.msra.mxu0 %v1362
        %1380 = vmatprep.subr.bf16.mxu0 0
        %1381 = vmatpush2.bf16.xpose.msra.mxu0 0
        %1382 = vmatprep.subr.bf16.mxu0 0
        %1383 = vmatpush2.bf16.xpose.msra.mxu0 0
        %1384 = vmatprep.subr.bf16.mxu0 0
        %1385 = vmatpush2.bf16.xpose.msra.mxu0 0
        %1386 = vmatprep.subr.bf16.mxu0 0
        %1387 = vmatpush2.bf16.xpose.msra.mxu0 0
        %1388 = vmatprep.subr.bf16.mxu0 0
        %1389 = vmatpush2.bf16.xpose.msra.mxu0 0
        %1390 = vmatprep.subr.bf16.mxu0 0
        %1391 = vmatpush2.bf16.xpose.msra.mxu0 0
        %1392 = vmatprep.subr.bf16.mxu0 0
        %1393 = vmatpush2.bf16.xpose.msra.mxu0 0
        %1394 = vmatprep.subr.bf16.mxu0 0
        %1395 = vmatpush2.bf16.xpose.msra.mxu0 0
        %1396 = vmatprep.mubr.bf16.mxu0 0
        %1397 = vmatmul.mubr.bf16.gmra.mxu0 %v1359
        %v1398 = vpop.f32.mrf.mxu0
        %v1399 = vadd.f32 0.0, %v1398
        %v1400 = vpop.f32.mrf.mxu0
        %v1401 = vpop.f32.mrf.mxu0
        %v1402 = vpop.f32.mrf.mxu0
        %1403 = vdwg.mxu0
        %v1404 = vmul.f32 %v1349, 0.35355338
        %v1405 = vmul.f32 %v1399, 0.35355338
        %v1406 = vadd.f32 %v1404, %v971
        %v1407 = vadd.f32 %v1405, %v972
        %v1408 = vsel %vm1083, %v1406, -inf
        %1409 = vmax.xlane.f32.xlu0 %v1408
        %v1410 = vpop.xlane.xlu0 %1409
        %v1411 = vsel %vm1083, %v1407, -inf
        %1412 = vmax.xlane.f32.xlu0 %v1411
        %v1413 = vpop.xlane.xlu0 %1412
        %v1414 = vsub.f32 %v1406, %v1410
        %v1415 = vsub.f32 %v1407, %v1413
        %v1416 = vmul.f32 %v1414, 1.442695
        %v1417 = vpow.pop %v1416
        %v1418 = vmul.f32 %v1415, 1.442695
        %v1419 = vpow.pop %v1418
        %v1420 = vsel %vm1083, %v1417, 0.0
        %1421 = vadd.xlane.f32.xlu0 %v1420
        %v1422 = vpop.xlane.xlu0 %1421
        %v1423 = vsel %vm1083, %v1419, 0.0
        %1424 = vadd.xlane.f32.xlu0 %v1423
        %v1425 = vpop.xlane.xlu0 %1424
        %v1426 = vrcp.pop %v1422
        %v1427 = vmul.f32 %v1417, %v1426
        %v1428 = vrcp.pop %v1425
        %v1429 = vmul.f32 %v1419, %v1428
        %v1430 = vpack.c.bf16 %v1427, %v1427
        %v1431 = vpack.c.bf16 %v1429, %v1429
        %1432 = vrot.lane.b32.xlu0 %v1078, 56
        %v1433 = vpop.permute.xlu0 %1432
        %v1435 = vsel %vm1083, %v1430, 0
        %v1438 = vsel %vm1212, %v1433, 0
        %1440 = vmatprep.subr.bf16.mxu0 0
        %1441 = vmatpush1.bf16.msra.mxu0 0
        %1442 = vmatprep.subr.bf16.mxu0 0
        %1443 = vmatpush1.bf16.msra.mxu0 0
        %1444 = vmatprep.subr.bf16.mxu0 0
        %1445 = vmatpush1.bf16.msra.mxu0 0
        %1446 = vmatprep.subr.bf16.mxu0 0
        %1447 = vmatpush1.bf16.msra.mxu0 0
        %1448 = vmatprep.subr.bf16.mxu0 0
        %1449 = vmatpush1.bf16.msra.mxu0 0
        %1450 = vmatprep.subr.bf16.mxu0 0
        %1451 = vmatpush1.bf16.msra.mxu0 0
        %1452 = vmatprep.subr.bf16.mxu0 0
        %1453 = vmatpush1.bf16.msra.mxu0 0
        %1454 = vmatprep.subr.bf16.mxu0 0
        %1455 = vmatpush1.bf16.msra.mxu0 %v1438
        %1456 = vmatprep.subr.bf16.mxu0 0
        %1457 = vmatpush2.bf16.msra.mxu0 0
        %1458 = vmatprep.subr.bf16.mxu0 0
        %1459 = vmatpush2.bf16.msra.mxu0 0
        %1460 = vmatprep.subr.bf16.mxu0 0
        %1461 = vmatpush2.bf16.msra.mxu0 0
        %1462 = vmatprep.subr.bf16.mxu0 0
        %1463 = vmatpush2.bf16.msra.mxu0 0
        %1464 = vmatprep.subr.bf16.mxu0 0
        %1465 = vmatpush2.bf16.msra.mxu0 0
        %1466 = vmatprep.subr.bf16.mxu0 0
        %1467 = vmatpush2.bf16.msra.mxu0 0
        %1468 = vmatprep.subr.bf16.mxu0 0
        %1469 = vmatpush2.bf16.msra.mxu0 0
        %1470 = vmatprep.subr.bf16.mxu0 0
        %1471 = vmatpush2.bf16.msra.mxu0 0
        %1472 = vmatprep.mubr.bf16.mxu0 0
        %1473 = vmatmul.mubr.bf16.gmra.mxu0 %v1435
        %v1474 = vpop.f32.mrf.mxu0
        %v1475 = vadd.f32 0.0, %v1474
        %v1476 = vpop.f32.mrf.mxu0
        %v1477 = vpop.f32.mrf.mxu0
        %v1478 = vpop.f32.mrf.mxu0
        %1479 = vdwg.mxu0
        %1480 = vrot.lane.b32.xlu0 %v1079, 56
        %v1481 = vpop.permute.xlu0 %1480
        %v1483 = vsel %vm1083, %v1431, 0
        %v1486 = vsel %vm1212, %v1481, 0
        %1488 = vmatprep.subr.bf16.mxu0 0
        %1489 = vmatpush1.bf16.msra.mxu0 0
        %1490 = vmatprep.subr.bf16.mxu0 0
        %1491 = vmatpush1.bf16.msra.mxu0 0
        %1492 = vmatprep.subr.bf16.mxu0 0
        %1493 = vmatpush1.bf16.msra.mxu0 0
        %1494 = vmatprep.subr.bf16.mxu0 0
        %1495 = vmatpush1.bf16.msra.mxu0 0
        %1496 = vmatprep.subr.bf16.mxu0 0
        %1497 = vmatpush1.bf16.msra.mxu0 0
        %1498 = vmatprep.subr.bf16.mxu0 0
        %1499 = vmatpush1.bf16.msra.mxu0 0
        %1500 = vmatprep.subr.bf16.mxu0 0
        %1501 = vmatpush1.bf16.msra.mxu0 0
        %1502 = vmatprep.subr.bf16.mxu0 0
        %1503 = vmatpush1.bf16.msra.mxu0 %v1486
        %1504 = vmatprep.subr.bf16.mxu0 0
        %1505 = vmatpush2.bf16.msra.mxu0 0
        %1506 = vmatprep.subr.bf16.mxu0 0
        %1507 = vmatpush2.bf16.msra.mxu0 0
        %1508 = vmatprep.subr.bf16.mxu0 0
        %1509 = vmatpush2.bf16.msra.mxu0 0
        %1510 = vmatprep.subr.bf16.mxu0 0
        %1511 = vmatpush2.bf16.msra.mxu0 0
        %1512 = vmatprep.subr.bf16.mxu0 0
        %1513 = vmatpush2.bf16.msra.mxu0 0
        %1514 = vmatprep.subr.bf16.mxu0 0
        %1515 = vmatpush2.bf16.msra.mxu0 0
        %1516 = vmatprep.subr.bf16.mxu0 0
        %1517 = vmatpush2.bf16.msra.mxu0 0
        %1518 = vmatprep.subr.bf16.mxu0 0
        %1519 = vmatpush2.bf16.msra.mxu0 0
        %1520 = vmatprep.mubr.bf16.mxu0 0
        %1521 = vmatmul.mubr.bf16.gmra.mxu0 %v1483
        %v1522 = vpop.f32.mrf.mxu0
        %v1523 = vadd.f32 0.0, %v1522
        %v1524 = vpop.f32.mrf.mxu0
        %v1525 = vpop.f32.mrf.mxu0
        %v1526 = vpop.f32.mrf.mxu0
        %1527 = vdwg.mxu0
        %1528 = vrot.lane.b32.xlu0 %v1078, 112
        %v1529 = vpop.permute.xlu0 %1528
        %1530 = vrot.lane.b32.xlu0 %v1078, 80
        %v1531 = vpop.permute.xlu0 %1530
        %v1533 = vsel %vm1083, %v1529, 0
        %v1536 = vsel %vm1083, %v1531, 0
        %1538 = vmatprep.subr.bf16.mxu0 0
        %1539 = vmatpush1.bf16.xpose.msra.mxu0 0
        %1540 = vmatprep.subr.bf16.mxu0 0
        %1541 = vmatpush1.bf16.xpose.msra.mxu0 0
        %1542 = vmatprep.subr.bf16.mxu0 0
        %1543 = vmatpush1.bf16.xpose.msra.mxu0 0
        %1544 = vmatprep.subr.bf16.mxu0 0
        %1545 = vmatpush1.bf16.xpose.msra.mxu0 0
        %1546 = vmatprep.subr.bf16.mxu0 0
        %1547 = vmatpush1.bf16.xpose.msra.mxu0 0
        %1548 = vmatprep.subr.bf16.mxu0 0
        %1549 = vmatpush1.bf16.xpose.msra.mxu0 0
        %1550 = vmatprep.subr.bf16.mxu0 0
        %1551 = vmatpush1.bf16.xpose.msra.mxu0 0
        %1552 = vmatprep.subr.bf16.mxu0 0
        %1553 = vmatpush1.bf16.xpose.msra.mxu0 %v1536
        %1554 = vmatprep.subr.bf16.mxu0 0
        %1555 = vmatpush2.bf16.xpose.msra.mxu0 0
        %1556 = vmatprep.subr.bf16.mxu0 0
        %1557 = vmatpush2.bf16.xpose.msra.mxu0 0
        %1558 = vmatprep.subr.bf16.mxu0 0
        %1559 = vmatpush2.bf16.xpose.msra.mxu0 0
        %1560 = vmatprep.subr.bf16.mxu0 0
        %1561 = vmatpush2.bf16.xpose.msra.mxu0 0
        %1562 = vmatprep.subr.bf16.mxu0 0
        %1563 = vmatpush2.bf16.xpose.msra.mxu0 0
        %1564 = vmatprep.subr.bf16.mxu0 0
        %1565 = vmatpush2.bf16.xpose.msra.mxu0 0
        %1566 = vmatprep.subr.bf16.mxu0 0
        %1567 = vmatpush2.bf16.xpose.msra.mxu0 0
        %1568 = vmatprep.subr.bf16.mxu0 0
        %1569 = vmatpush2.bf16.xpose.msra.mxu0 0
        %1570 = vmatprep.mubr.bf16.mxu0 0
        %1571 = vmatmul.mubr.bf16.gmra.mxu0 %v1533
        %v1572 = vpop.f32.mrf.mxu0
        %v1573 = vadd.f32 0.0, %v1572
        %v1574 = vpop.f32.mrf.mxu0
        %v1575 = vpop.f32.mrf.mxu0
        %v1576 = vpop.f32.mrf.mxu0
        %1577 = vdwg.mxu0
        %1578 = vrot.lane.b32.xlu0 %v1079, 112
        %v1579 = vpop.permute.xlu0 %1578
        %1580 = vrot.lane.b32.xlu0 %v1079, 80
        %v1581 = vpop.permute.xlu0 %1580
        %v1583 = vsel %vm1083, %v1579, 0
        %v1586 = vsel %vm1083, %v1581, 0
        %1588 = vmatprep.subr.bf16.mxu0 0
        %1589 = vmatpush1.bf16.xpose.msra.mxu0 0
        %1590 = vmatprep.subr.bf16.mxu0 0
        %1591 = vmatpush1.bf16.xpose.msra.mxu0 0
        %1592 = vmatprep.subr.bf16.mxu0 0
        %1593 = vmatpush1.bf16.xpose.msra.mxu0 0
        %1594 = vmatprep.subr.bf16.mxu0 0
        %1595 = vmatpush1.bf16.xpose.msra.mxu0 0
        %1596 = vmatprep.subr.bf16.mxu0 0
        %1597 = vmatpush1.bf16.xpose.msra.mxu0 0
        %1598 = vmatprep.subr.bf16.mxu0 0
        %1599 = vmatpush1.bf16.xpose.msra.mxu0 0
        %1600 = vmatprep.subr.bf16.mxu0 0
        %1601 = vmatpush1.bf16.xpose.msra.mxu0 0
        %1602 = vmatprep.subr.bf16.mxu0 0
        %1603 = vmatpush1.bf16.xpose.msra.mxu0 %v1586
        %1604 = vmatprep.subr.bf16.mxu0 0
        %1605 = vmatpush2.bf16.xpose.msra.mxu0 0
        %1606 = vmatprep.subr.bf16.mxu0 0
        %1607 = vmatpush2.bf16.xpose.msra.mxu0 0
        %1608 = vmatprep.subr.bf16.mxu0 0
        %1609 = vmatpush2.bf16.xpose.msra.mxu0 0
        %1610 = vmatprep.subr.bf16.mxu0 0
        %1611 = vmatpush2.bf16.xpose.msra.mxu0 0
        %1612 = vmatprep.subr.bf16.mxu0 0
        %1613 = vmatpush2.bf16.xpose.msra.mxu0 0
        %1614 = vmatprep.subr.bf16.mxu0 0
        %1615 = vmatpush2.bf16.xpose.msra.mxu0 0
        %1616 = vmatprep.subr.bf16.mxu0 0
        %1617 = vmatpush2.bf16.xpose.msra.mxu0 0
        %1618 = vmatprep.subr.bf16.mxu0 0
        %1619 = vmatpush2.bf16.xpose.msra.mxu0 0
        %1620 = vmatprep.mubr.bf16.mxu0 0
        %1621 = vmatmul.mubr.bf16.gmra.mxu0 %v1583
        %v1622 = vpop.f32.mrf.mxu0
        %v1623 = vadd.f32 0.0, %v1622
        %v1624 = vpop.f32.mrf.mxu0
        %v1625 = vpop.f32.mrf.mxu0
        %v1626 = vpop.f32.mrf.mxu0
        %1627 = vdwg.mxu0
        %v1628 = vmul.f32 %v1573, 0.35355338
        %v1629 = vmul.f32 %v1623, 0.35355338
        %v1630 = vadd.f32 %v1628, %v971
        %v1631 = vadd.f32 %v1629, %v972
        %v1632 = vsel %vm1083, %v1630, -inf
        %1633 = vmax.xlane.f32.xlu0 %v1632
        %v1634 = vpop.xlane.xlu0 %1633
        %v1635 = vsel %vm1083, %v1631, -inf
        %1636 = vmax.xlane.f32.xlu0 %v1635
        %v1637 = vpop.xlane.xlu0 %1636
        %v1638 = vsub.f32 %v1630, %v1634
        %v1639 = vsub.f32 %v1631, %v1637
        %v1640 = vmul.f32 %v1638, 1.442695
        %v1641 = vpow.pop %v1640
        %v1642 = vmul.f32 %v1639, 1.442695
        %v1643 = vpow.pop %v1642
        %v1644 = vsel %vm1083, %v1641, 0.0
        %1645 = vadd.xlane.f32.xlu0 %v1644
        %v1646 = vpop.xlane.xlu0 %1645
        %v1647 = vsel %vm1083, %v1643, 0.0
        %1648 = vadd.xlane.f32.xlu0 %v1647
        %v1649 = vpop.xlane.xlu0 %1648
        %v1650 = vrcp.pop %v1646
        %v1651 = vmul.f32 %v1641, %v1650
        %v1652 = vrcp.pop %v1649
        %v1653 = vmul.f32 %v1643, %v1652
        %v1654 = vpack.c.bf16 %v1651, %v1651
        %v1655 = vpack.c.bf16 %v1653, %v1653
        %1656 = vrot.lane.b32.xlu0 %v1078, 48
        %v1657 = vpop.permute.xlu0 %1656
        %v1659 = vsel %vm1083, %v1654, 0
        %v1662 = vsel %vm1212, %v1657, 0
        %1664 = vmatprep.subr.bf16.mxu0 0
        %1665 = vmatpush1.bf16.msra.mxu0 0
        %1666 = vmatprep.subr.bf16.mxu0 0
        %1667 = vmatpush1.bf16.msra.mxu0 0
        %1668 = vmatprep.subr.bf16.mxu0 0
        %1669 = vmatpush1.bf16.msra.mxu0 0
        %1670 = vmatprep.subr.bf16.mxu0 0
        %1671 = vmatpush1.bf16.msra.mxu0 0
        %1672 = vmatprep.subr.bf16.mxu0 0
        %1673 = vmatpush1.bf16.msra.mxu0 0
        %1674 = vmatprep.subr.bf16.mxu0 0
        %1675 = vmatpush1.bf16.msra.mxu0 0
        %1676 = vmatprep.subr.bf16.mxu0 0
        %1677 = vmatpush1.bf16.msra.mxu0 0
        %1678 = vmatprep.subr.bf16.mxu0 0
        %1679 = vmatpush1.bf16.msra.mxu0 %v1662
        %1680 = vmatprep.subr.bf16.mxu0 0
        %1681 = vmatpush2.bf16.msra.mxu0 0
        %1682 = vmatprep.subr.bf16.mxu0 0
        %1683 = vmatpush2.bf16.msra.mxu0 0
        %1684 = vmatprep.subr.bf16.mxu0 0
        %1685 = vmatpush2.bf16.msra.mxu0 0
        %1686 = vmatprep.subr.bf16.mxu0 0
        %1687 = vmatpush2.bf16.msra.mxu0 0
        %1688 = vmatprep.subr.bf16.mxu0 0
        %1689 = vmatpush2.bf16.msra.mxu0 0
        %1690 = vmatprep.subr.bf16.mxu0 0
        %1691 = vmatpush2.bf16.msra.mxu0 0
        %1692 = vmatprep.subr.bf16.mxu0 0
        %1693 = vmatpush2.bf16.msra.mxu0 0
        %1694 = vmatprep.subr.bf16.mxu0 0
        %1695 = vmatpush2.bf16.msra.mxu0 0
        %1696 = vmatprep.mubr.bf16.mxu0 0
        %1697 = vmatmul.mubr.bf16.gmra.mxu0 %v1659
        %v1698 = vpop.f32.mrf.mxu0
        %v1699 = vadd.f32 0.0, %v1698
        %v1700 = vpop.f32.mrf.mxu0
        %v1701 = vpop.f32.mrf.mxu0
        %v1702 = vpop.f32.mrf.mxu0
        %1703 = vdwg.mxu0
        %1704 = vrot.lane.b32.xlu0 %v1079, 48
        %v1705 = vpop.permute.xlu0 %1704
        %v1707 = vsel %vm1083, %v1655, 0
        %v1710 = vsel %vm1212, %v1705, 0
        %1712 = vmatprep.subr.bf16.mxu0 0
        %1713 = vmatpush1.bf16.msra.mxu0 0
        %1714 = vmatprep.subr.bf16.mxu0 0
        %1715 = vmatpush1.bf16.msra.mxu0 0
        %1716 = vmatprep.subr.bf16.mxu0 0
        %1717 = vmatpush1.bf16.msra.mxu0 0
        %1718 = vmatprep.subr.bf16.mxu0 0
        %1719 = vmatpush1.bf16.msra.mxu0 0
        %1720 = vmatprep.subr.bf16.mxu0 0
        %1721 = vmatpush1.bf16.msra.mxu0 0
        %1722 = vmatprep.subr.bf16.mxu0 0
        %1723 = vmatpush1.bf16.msra.mxu0 0
        %1724 = vmatprep.subr.bf16.mxu0 0
        %1725 = vmatpush1.bf16.msra.mxu0 0
        %1726 = vmatprep.subr.bf16.mxu0 0
        %1727 = vmatpush1.bf16.msra.mxu0 %v1710
        %1728 = vmatprep.subr.bf16.mxu0 0
        %1729 = vmatpush2.bf16.msra.mxu0 0
        %1730 = vmatprep.subr.bf16.mxu0 0
        %1731 = vmatpush2.bf16.msra.mxu0 0
        %1732 = vmatprep.subr.bf16.mxu0 0
        %1733 = vmatpush2.bf16.msra.mxu0 0
        %1734 = vmatprep.subr.bf16.mxu0 0
        %1735 = vmatpush2.bf16.msra.mxu0 0
        %1736 = vmatprep.subr.bf16.mxu0 0
        %1737 = vmatpush2.bf16.msra.mxu0 0
        %1738 = vmatprep.subr.bf16.mxu0 0
        %1739 = vmatpush2.bf16.msra.mxu0 0
        %1740 = vmatprep.subr.bf16.mxu0 0
        %1741 = vmatpush2.bf16.msra.mxu0 0
        %1742 = vmatprep.subr.bf16.mxu0 0
        %1743 = vmatpush2.bf16.msra.mxu0 0
        %1744 = vmatprep.mubr.bf16.mxu0 0
        %1745 = vmatmul.mubr.bf16.gmra.mxu0 %v1707
        %v1746 = vpop.f32.mrf.mxu0
        %v1747 = vadd.f32 0.0, %v1746
        %v1748 = vpop.f32.mrf.mxu0
        %v1749 = vpop.f32.mrf.mxu0
        %v1750 = vpop.f32.mrf.mxu0
        %1751 = vdwg.mxu0
        %1752 = vrot.lane.b32.xlu0 %v1078, 104
        %v1753 = vpop.permute.xlu0 %1752
        %1754 = vrot.lane.b32.xlu0 %v1078, 72
        %v1755 = vpop.permute.xlu0 %1754
        %v1757 = vsel %vm1083, %v1753, 0
        %v1760 = vsel %vm1083, %v1755, 0
        %1762 = vmatprep.subr.bf16.mxu0 0
        %1763 = vmatpush1.bf16.xpose.msra.mxu0 0
        %1764 = vmatprep.subr.bf16.mxu0 0
        %1765 = vmatpush1.bf16.xpose.msra.mxu0 0
        %1766 = vmatprep.subr.bf16.mxu0 0
        %1767 = vmatpush1.bf16.xpose.msra.mxu0 0
        %1768 = vmatprep.subr.bf16.mxu0 0
        %1769 = vmatpush1.bf16.xpose.msra.mxu0 0
        %1770 = vmatprep.subr.bf16.mxu0 0
        %1771 = vmatpush1.bf16.xpose.msra.mxu0 0
        %1772 = vmatprep.subr.bf16.mxu0 0
        %1773 = vmatpush1.bf16.xpose.msra.mxu0 0
        %1774 = vmatprep.subr.bf16.mxu0 0
        %1775 = vmatpush1.bf16.xpose.msra.mxu0 0
        %1776 = vmatprep.subr.bf16.mxu0 0
        %1777 = vmatpush1.bf16.xpose.msra.mxu0 %v1760
        %1778 = vmatprep.subr.bf16.mxu0 0
        %1779 = vmatpush2.bf16.xpose.msra.mxu0 0
        %1780 = vmatprep.subr.bf16.mxu0 0
        %1781 = vmatpush2.bf16.xpose.msra.mxu0 0
        %1782 = vmatprep.subr.bf16.mxu0 0
        %1783 = vmatpush2.bf16.xpose.msra.mxu0 0
        %1784 = vmatprep.subr.bf16.mxu0 0
        %1785 = vmatpush2.bf16.xpose.msra.mxu0 0
        %1786 = vmatprep.subr.bf16.mxu0 0
        %1787 = vmatpush2.bf16.xpose.msra.mxu0 0
        %1788 = vmatprep.subr.bf16.mxu0 0
        %1789 = vmatpush2.bf16.xpose.msra.mxu0 0
        %1790 = vmatprep.subr.bf16.mxu0 0
        %1791 = vmatpush2.bf16.xpose.msra.mxu0 0
        %1792 = vmatprep.subr.bf16.mxu0 0
        %1793 = vmatpush2.bf16.xpose.msra.mxu0 0
        %1794 = vmatprep.mubr.bf16.mxu0 0
        %1795 = vmatmul.mubr.bf16.gmra.mxu0 %v1757
        %v1796 = vpop.f32.mrf.mxu0
        %v1797 = vadd.f32 0.0, %v1796
        %v1798 = vpop.f32.mrf.mxu0
        %v1799 = vpop.f32.mrf.mxu0
        %v1800 = vpop.f32.mrf.mxu0
        %1801 = vdwg.mxu0
        %1802 = vrot.lane.b32.xlu0 %v1079, 104
        %v1803 = vpop.permute.xlu0 %1802
        %1804 = vrot.lane.b32.xlu0 %v1079, 72
        %v1805 = vpop.permute.xlu0 %1804
        %v1807 = vsel %vm1083, %v1803, 0
        %v1810 = vsel %vm1083, %v1805, 0
        %1812 = vmatprep.subr.bf16.mxu0 0
        %1813 = vmatpush1.bf16.xpose.msra.mxu0 0
        %1814 = vmatprep.subr.bf16.mxu0 0
        %1815 = vmatpush1.bf16.xpose.msra.mxu0 0
        %1816 = vmatprep.subr.bf16.mxu0 0
        %1817 = vmatpush1.bf16.xpose.msra.mxu0 0
        %1818 = vmatprep.subr.bf16.mxu0 0
        %1819 = vmatpush1.bf16.xpose.msra.mxu0 0
        %1820 = vmatprep.subr.bf16.mxu0 0
        %1821 = vmatpush1.bf16.xpose.msra.mxu0 0
        %1822 = vmatprep.subr.bf16.mxu0 0
        %1823 = vmatpush1.bf16.xpose.msra.mxu0 0
        %1824 = vmatprep.subr.bf16.mxu0 0
        %1825 = vmatpush1.bf16.xpose.msra.mxu0 0
        %1826 = vmatprep.subr.bf16.mxu0 0
        %1827 = vmatpush1.bf16.xpose.msra.mxu0 %v1810
        %1828 = vmatprep.subr.bf16.mxu0 0
        %1829 = vmatpush2.bf16.xpose.msra.mxu0 0
        %1830 = vmatprep.subr.bf16.mxu0 0
        %1831 = vmatpush2.bf16.xpose.msra.mxu0 0
        %1832 = vmatprep.subr.bf16.mxu0 0
        %1833 = vmatpush2.bf16.xpose.msra.mxu0 0
        %1834 = vmatprep.subr.bf16.mxu0 0
        %1835 = vmatpush2.bf16.xpose.msra.mxu0 0
        %1836 = vmatprep.subr.bf16.mxu0 0
        %1837 = vmatpush2.bf16.xpose.msra.mxu0 0
        %1838 = vmatprep.subr.bf16.mxu0 0
        %1839 = vmatpush2.bf16.xpose.msra.mxu0 0
        %1840 = vmatprep.subr.bf16.mxu0 0
        %1841 = vmatpush2.bf16.xpose.msra.mxu0 0
        %1842 = vmatprep.subr.bf16.mxu0 0
        %1843 = vmatpush2.bf16.xpose.msra.mxu0 0
        %1844 = vmatprep.mubr.bf16.mxu0 0
        %1845 = vmatmul.mubr.bf16.gmra.mxu0 %v1807
        %v1846 = vpop.f32.mrf.mxu0
        %v1847 = vadd.f32 0.0, %v1846
        %v1848 = vpop.f32.mrf.mxu0
        %v1849 = vpop.f32.mrf.mxu0
        %v1850 = vpop.f32.mrf.mxu0
        %1851 = vdwg.mxu0
        %v1852 = vmul.f32 %v1797, 0.35355338
        %v1853 = vmul.f32 %v1847, 0.35355338
        %v1854 = vadd.f32 %v1852, %v971
        %v1855 = vadd.f32 %v1853, %v972
        %v1856 = vsel %vm1083, %v1854, -inf
        %1857 = vmax.xlane.f32.xlu0 %v1856
        %v1858 = vpop.xlane.xlu0 %1857
        %v1859 = vsel %vm1083, %v1855, -inf
        %1860 = vmax.xlane.f32.xlu0 %v1859
        %v1861 = vpop.xlane.xlu0 %1860
        %v1862 = vsub.f32 %v1854, %v1858
        %v1863 = vsub.f32 %v1855, %v1861
        %v1864 = vmul.f32 %v1862, 1.442695
        %v1865 = vpow.pop %v1864
        %v1866 = vmul.f32 %v1863, 1.442695
        %v1867 = vpow.pop %v1866
        %v1868 = vsel %vm1083, %v1865, 0.0
        %1869 = vadd.xlane.f32.xlu0 %v1868
        %v1870 = vpop.xlane.xlu0 %1869
        %v1871 = vsel %vm1083, %v1867, 0.0
        %1872 = vadd.xlane.f32.xlu0 %v1871
        %v1873 = vpop.xlane.xlu0 %1872
        %v1874 = vrcp.pop %v1870
        %v1875 = vmul.f32 %v1865, %v1874
        %v1876 = vrcp.pop %v1873
        %v1877 = vmul.f32 %v1867, %v1876
        %v1878 = vpack.c.bf16 %v1875, %v1875
        %v1879 = vpack.c.bf16 %v1877, %v1877
        %1880 = vrot.lane.b32.xlu0 %v1078, 40
        %v1881 = vpop.permute.xlu0 %1880
        %v1883 = vsel %vm1083, %v1878, 0
        %v1886 = vsel %vm1212, %v1881, 0
        %1888 = vmatprep.subr.bf16.mxu0 0
        %1889 = vmatpush1.bf16.msra.mxu0 0
        %1890 = vmatprep.subr.bf16.mxu0 0
        %1891 = vmatpush1.bf16.msra.mxu0 0
        %1892 = vmatprep.subr.bf16.mxu0 0
        %1893 = vmatpush1.bf16.msra.mxu0 0
        %1894 = vmatprep.subr.bf16.mxu0 0
        %1895 = vmatpush1.bf16.msra.mxu0 0
        %1896 = vmatprep.subr.bf16.mxu0 0
        %1897 = vmatpush1.bf16.msra.mxu0 0
        %1898 = vmatprep.subr.bf16.mxu0 0
        %1899 = vmatpush1.bf16.msra.mxu0 0
        %1900 = vmatprep.subr.bf16.mxu0 0
        %1901 = vmatpush1.bf16.msra.mxu0 0
        %1902 = vmatprep.subr.bf16.mxu0 0
        %1903 = vmatpush1.bf16.msra.mxu0 %v1886
        %1904 = vmatprep.subr.bf16.mxu0 0
        %1905 = vmatpush2.bf16.msra.mxu0 0
        %1906 = vmatprep.subr.bf16.mxu0 0
        %1907 = vmatpush2.bf16.msra.mxu0 0
        %1908 = vmatprep.subr.bf16.mxu0 0
        %1909 = vmatpush2.bf16.msra.mxu0 0
        %1910 = vmatprep.subr.bf16.mxu0 0
        %1911 = vmatpush2.bf16.msra.mxu0 0
        %1912 = vmatprep.subr.bf16.mxu0 0
        %1913 = vmatpush2.bf16.msra.mxu0 0
        %1914 = vmatprep.subr.bf16.mxu0 0
        %1915 = vmatpush2.bf16.msra.mxu0 0
        %1916 = vmatprep.subr.bf16.mxu0 0
        %1917 = vmatpush2.bf16.msra.mxu0 0
        %1918 = vmatprep.subr.bf16.mxu0 0
        %1919 = vmatpush2.bf16.msra.mxu0 0
        %1920 = vmatprep.mubr.bf16.mxu0 0
        %1921 = vmatmul.mubr.bf16.gmra.mxu0 %v1883
        %v1922 = vpop.f32.mrf.mxu0
        %v1923 = vadd.f32 0.0, %v1922
        %v1924 = vpop.f32.mrf.mxu0
        %v1925 = vpop.f32.mrf.mxu0
        %v1926 = vpop.f32.mrf.mxu0
        %1927 = vdwg.mxu0
        %1928 = vrot.lane.b32.xlu0 %v1079, 40
        %v1929 = vpop.permute.xlu0 %1928
        %v1931 = vsel %vm1083, %v1879, 0
        %v1934 = vsel %vm1212, %v1929, 0
        %1936 = vmatprep.subr.bf16.mxu0 0
        %1937 = vmatpush1.bf16.msra.mxu0 0
        %1938 = vmatprep.subr.bf16.mxu0 0
        %1939 = vmatpush1.bf16.msra.mxu0 0
        %1940 = vmatprep.subr.bf16.mxu0 0
        %1941 = vmatpush1.bf16.msra.mxu0 0
        %1942 = vmatprep.subr.bf16.mxu0 0
        %1943 = vmatpush1.bf16.msra.mxu0 0
        %1944 = vmatprep.subr.bf16.mxu0 0
        %1945 = vmatpush1.bf16.msra.mxu0 0
        %1946 = vmatprep.subr.bf16.mxu0 0
        %1947 = vmatpush1.bf16.msra.mxu0 0
        %1948 = vmatprep.subr.bf16.mxu0 0
        %1949 = vmatpush1.bf16.msra.mxu0 0
        %1950 = vmatprep.subr.bf16.mxu0 0
        %1951 = vmatpush1.bf16.msra.mxu0 %v1934
        %1952 = vmatprep.subr.bf16.mxu0 0
        %1953 = vmatpush2.bf16.msra.mxu0 0
        %1954 = vmatprep.subr.bf16.mxu0 0
        %1955 = vmatpush2.bf16.msra.mxu0 0
        %1956 = vmatprep.subr.bf16.mxu0 0
        %1957 = vmatpush2.bf16.msra.mxu0 0
        %1958 = vmatprep.subr.bf16.mxu0 0
        %1959 = vmatpush2.bf16.msra.mxu0 0
        %1960 = vmatprep.subr.bf16.mxu0 0
        %1961 = vmatpush2.bf16.msra.mxu0 0
        %1962 = vmatprep.subr.bf16.mxu0 0
        %1963 = vmatpush2.bf16.msra.mxu0 0
        %1964 = vmatprep.subr.bf16.mxu0 0
        %1965 = vmatpush2.bf16.msra.mxu0 0
        %1966 = vmatprep.subr.bf16.mxu0 0
        %1967 = vmatpush2.bf16.msra.mxu0 0
        %1968 = vmatprep.mubr.bf16.mxu0 0
        %1969 = vmatmul.mubr.bf16.gmra.mxu0 %v1931
        %v1970 = vpop.f32.mrf.mxu0
        %v1971 = vadd.f32 0.0, %v1970
        %v1972 = vpop.f32.mrf.mxu0
        %v1973 = vpop.f32.mrf.mxu0
        %v1974 = vpop.f32.mrf.mxu0
        %1975 = vdwg.mxu0
        %1978 = vrot.lane.b32.xlu0 %v1475, 8
        %v1979 = vpop.permute.xlu0 %1978
        %1980 = vrot.lane.b32.xlu0 %v1523, 8
        %v1981 = vpop.permute.xlu0 %1980
        %1986 = vrot.lane.b32.xlu0 %v1699, 16
        %v1987 = vpop.permute.xlu0 %1986
        %1988 = vrot.lane.b32.xlu0 %v1747, 16
        %v1989 = vpop.permute.xlu0 %1988
        %1994 = vrot.lane.b32.xlu0 %v1923, 24
        %v1995 = vpop.permute.xlu0 %1994
        %1996 = vrot.lane.b32.xlu0 %v1971, 24
        %v1997 = vpop.permute.xlu0 %1996
        %v2000 = vsel %vm1083, %v1251, %v1979
        %v2001 = vsel %vm1083, %v1299, %v1981
        %vm2002 = vcmask 130048
        %v2003 = vsel %vm2002, %v2000, %v1987
        %v2004 = vsel %vm2002, %v2001, %v1989
        %vm2005 = vcmask 195584
        %v2006 = vsel %vm2005, %v2003, %v1995
        %v2007 = vsel %vm2005, %v2004, %v1997
        %v2008 = vpack.c.bf16 %v2007, %v2006
        %v2010 = vlaneseq
        %v2011 = vshrl.u32 %v2010, 7
        %v2012 = vsub.s32 0, %v2011
        %v2013 = vrot.slane %v941, %v2012
        %v2019 = vunpack.c.l.b16 %v937
        %v2020 = vunpack.c.l.b16 %v938
        %v2021 = vunpack.c.l.b16 %v939
        %v2022 = vunpack.c.l.b16 %v940
        %v2023 = vpack.c.b16 %v2020, %v2019
        %v2024 = vpack.c.b16 %v2022, %v2021
        %v2028 = vsel %vm975, %v2008, 0
        %2030 = vmatprep.subr.bf16.mxu0 0
        %2031 = vmatpush1.bf16.msra.mxu0 0
        %2032 = vmatprep.subr.bf16.mxu0 0
        %2033 = vmatpush1.bf16.msra.mxu0 0
        %2034 = vmatprep.subr.bf16.mxu0 0
        %2035 = vmatpush1.bf16.msra.mxu0 0
        %2036 = vmatprep.subr.bf16.mxu0 0
        %2037 = vmatpush1.bf16.msra.mxu0 0
        %2038 = vmatprep.subr.bf16.mxu0 0
        %2039 = vmatpush1.bf16.msra.mxu0 0
        %2040 = vmatprep.subr.bf16.mxu0 0
        %2041 = vmatpush1.bf16.msra.mxu0 0
        %2042 = vmatprep.subr.bf16.mxu0 0
        %2043 = vmatpush1.bf16.msra.mxu0 %v2024
        %2044 = vmatprep.subr.bf16.mxu0 0
        %2045 = vmatpush1.bf16.msra.mxu0 %v2023
        %2046 = vmatprep.subr.bf16.mxu0 0
        %2047 = vmatpush2.bf16.msra.mxu0 0
        %2048 = vmatprep.subr.bf16.mxu0 0
        %2049 = vmatpush2.bf16.msra.mxu0 0
        %2050 = vmatprep.subr.bf16.mxu0 0
        %2051 = vmatpush2.bf16.msra.mxu0 0
        %2052 = vmatprep.subr.bf16.mxu0 0
        %2053 = vmatpush2.bf16.msra.mxu0 0
        %2054 = vmatprep.subr.bf16.mxu0 0
        %2055 = vmatpush2.bf16.msra.mxu0 0
        %2056 = vmatprep.subr.bf16.mxu0 0
        %2057 = vmatpush2.bf16.msra.mxu0 0
        %2058 = vmatprep.subr.bf16.mxu0 0
        %2059 = vmatpush2.bf16.msra.mxu0 0
        %2060 = vmatprep.subr.bf16.mxu0 0
        %2061 = vmatpush2.bf16.msra.mxu0 0
        %2062 = vmatprep.mubr.bf16.mxu0 0
        %2063 = vmatmul.mubr.bf16.gmra.mxu0 %v2028
        %v2064 = vpop.f32.mrf.mxu0
        %v2065 = vadd.f32 %v2013, %v2064
        %v2066 = vpop.f32.mrf.mxu0
        %v2067 = vpop.f32.mrf.mxu0
        %v2068 = vadd.f32 %v2013, %v2067
        %v2069 = vpop.f32.mrf.mxu0
        %2070 = vdwg.mxu0
        %v2071 = vadd.f32 %v925, %v2065
        %v2072 = vadd.f32 %v926, %v2068
        %v2073 = vsel %vm975, %v2071, 0.0
        %2074 = vadd.xlane.f32.xlu0 %v2073
        %v2075 = vpop.xlane.xlu0 %2074
        %v2076 = vsel %vm975, %v2072, 0.0
        %2077 = vadd.xlane.f32.xlu0 %v2076
        %v2078 = vpop.xlane.xlu0 %2077
        %v2079 = vmul.f32 %v2075, %v982
        %v2080 = vmul.f32 %v2078, %v982
        %v2081 = vsub.f32 %v2071, %v2079
        %v2082 = vsub.f32 %v2072, %v2080
        %v2083 = vmul.f32 %v2081, %v2081
        %v2084 = vmul.f32 %v2082, %v2082
        %v2085 = vsel %vm975, %v2083, 0.0
        %2086 = vadd.xlane.f32.xlu0 %v2085
        %v2087 = vpop.xlane.xlu0 %2086
        %v2088 = vsel %vm975, %v2084, 0.0
        %2089 = vadd.xlane.f32.xlu0 %v2088
        %v2090 = vpop.xlane.xlu0 %2089
        %v2091 = vmul.f32 %v2087, %v982
        %v2092 = vmul.f32 %v2090, %v982
        %v2093 = vadd.f32 %v2091, 1e-05
        %v2094 = vadd.f32 %v2092, 1e-05
        %v2095 = vrsqrt.pop %v2093
        %v2096 = vrsqrt.pop %v2094
        %v2097 = vmul.f32 %v2081, %v2095
        %v2098 = vmul.f32 %v2082, %v2096
        %v2099 = vlaneseq
        %v2100 = vshrl.u32 %v2099, 7
        %v2101 = vsub.s32 2, %v2100
        %v2102 = vrot.slane %v931, %v2101
        %v2103 = vmul.f32 %v2097, %v2102
        %v2104 = vmul.f32 %v2098, %v2102
        %v2105 = vlaneseq
        %v2106 = vshrl.u32 %v2105, 7
        %v2107 = vsub.s32 3, %v2106
        %v2108 = vrot.slane %v931, %v2107
        %v2109 = vadd.f32 %v2103, %v2108
        %v2110 = vadd.f32 %v2104, %v2108
        %v2111 = vpack.c.bf16 %v2110, %v2109
        %v2113 = vlaneseq
        %v2114 = vshrl.u32 %v2113, 7
        %v2115 = vsub.s32 0, %v2114
        %v2116 = vrot.slane %v946, %v2115
        %v2122 = vunpack.c.l.b16 %v942
        %v2123 = vunpack.c.l.b16 %v943
        %v2124 = vunpack.c.l.b16 %v944
        %v2125 = vunpack.c.l.b16 %v945
        %v2126 = vpack.c.b16 %v2123, %v2122
        %v2127 = vpack.c.b16 %v2125, %v2124
        %v2131 = vsel %vm975, %v2111, 0
        %2133 = vmatprep.subr.bf16.mxu0 0
        %2134 = vmatpush1.bf16.msra.mxu0 0
        %2135 = vmatprep.subr.bf16.mxu0 0
        %2136 = vmatpush1.bf16.msra.mxu0 0
        %2137 = vmatprep.subr.bf16.mxu0 0
        %2138 = vmatpush1.bf16.msra.mxu0 0
        %2139 = vmatprep.subr.bf16.mxu0 0
        %2140 = vmatpush1.bf16.msra.mxu0 0
        %2141 = vmatprep.subr.bf16.mxu0 0
        %2142 = vmatpush1.bf16.msra.mxu0 0
        %2143 = vmatprep.subr.bf16.mxu0 0
        %2144 = vmatpush1.bf16.msra.mxu0 0
        %2145 = vmatprep.subr.bf16.mxu0 0
        %2146 = vmatpush1.bf16.msra.mxu0 %v2127
        %2147 = vmatprep.subr.bf16.mxu0 0
        %2148 = vmatpush1.bf16.msra.mxu0 %v2126
        %2149 = vmatprep.subr.bf16.mxu0 0
        %2150 = vmatpush2.bf16.msra.mxu0 0
        %2151 = vmatprep.subr.bf16.mxu0 0
        %2152 = vmatpush2.bf16.msra.mxu0 0
        %2153 = vmatprep.subr.bf16.mxu0 0
        %2154 = vmatpush2.bf16.msra.mxu0 0
        %2155 = vmatprep.subr.bf16.mxu0 0
        %2156 = vmatpush2.bf16.msra.mxu0 0
        %2157 = vmatprep.subr.bf16.mxu0 0
        %2158 = vmatpush2.bf16.msra.mxu0 0
        %2159 = vmatprep.subr.bf16.mxu0 0
        %2160 = vmatpush2.bf16.msra.mxu0 0
        %2161 = vmatprep.subr.bf16.mxu0 0
        %2162 = vmatpush2.bf16.msra.mxu0 0
        %2163 = vmatprep.subr.bf16.mxu0 0
        %2164 = vmatpush2.bf16.msra.mxu0 0
        %2165 = vmatprep.mubr.bf16.mxu0 0
        %2166 = vmatmul.mubr.bf16.gmra.mxu0 %v2131
        %v2167 = vpop.f32.mrf.mxu0
        %v2168 = vadd.f32 %v2116, %v2167
        %v2169 = vpop.f32.mrf.mxu0
        %v2170 = vpop.f32.mrf.mxu0
        %v2171 = vadd.f32 %v2116, %v2170
        %v2172 = vpop.f32.mrf.mxu0
        %2173 = vdwg.mxu0
        %v2179 = vunpack.c.l.s4 1966171168
        %v2180 = vunpack.c.0.s8 %v2179
        %v2181 = vlaneseq
        %v2182 = vshrl.u32 %v2181, 7
        %v2183 = vsub.s32 %v2180, %v2182
        %v2184 = vrot.slane %v927, %v2183
        %v2185 = vcombine.high %v2184, %v2184
        %v2187 = vunpack.c.l.s4 1966171168
        %v2188 = vunpack.c.0.s8 %v2187
        %v2189 = vlaneseq
        %v2190 = vshrl.u32 %v2189, 7
        %v2191 = vsub.s32 %v2188, %v2190
        %v2192 = vrot.slane %v2184, %v2191
        %v2194 = vunpack.c.l.s4 1966171168
        %v2195 = vunpack.c.0.s8 %v2194
        %v2196 = vlaneseq
        %v2197 = vshrl.u32 %v2196, 7
        %v2198 = vsub.s32 %v2195, %v2197
        %v2199 = vrot.slane %v2185, %v2198
        %v2200 = vcombine.high %v2192, %v2192
        %v2201 = vcombine.high %v2199, %v2199
        %v2203 = vunpack.c.l.s4 1966171168
        %v2204 = vunpack.c.0.s8 %v2203
        %v2205 = vlaneseq
        %v2206 = vshrl.u32 %v2205, 7
        %v2207 = vsub.s32 %v2204, %v2206
        %v2208 = vrot.slane %v928, %v2207
        %v2210 = vunpack.c.l.s4 1966171168
        %v2211 = vunpack.c.0.s8 %v2210
        %v2212 = vlaneseq
        %v2213 = vshrl.u32 %v2212, 7
        %v2214 = vsub.s32 %v2211, %v2213
        %v2215 = vrot.slane %v2208, %v2214
        %v2217 = vunpack.c.l.s4 1966171168
        %v2218 = vunpack.c.0.s8 %v2217
        %v2219 = vlaneseq
        %v2220 = vshrl.u32 %v2219, 7
        %v2221 = vsub.s32 %v2218, %v2220
        %v2222 = vrot.slane %v929, %v2221
        %v2223 = vcombine.high %v2222, %v2222
        %v2225 = vunpack.c.l.s4 1966171168
        %v2226 = vunpack.c.0.s8 %v2225
        %v2227 = vlaneseq
        %v2228 = vshrl.u32 %v2227, 7
        %v2229 = vsub.s32 %v2226, %v2228
        %v2230 = vrot.slane %v2222, %v2229
        %v2232 = vunpack.c.l.s4 1966171168
        %v2233 = vunpack.c.0.s8 %v2232
        %v2234 = vlaneseq
        %v2235 = vshrl.u32 %v2234, 7
        %v2236 = vsub.s32 %v2233, %v2235
        %v2237 = vrot.slane %v2223, %v2236
        %v2238 = vcombine.high %v2230, %v2230
        %v2239 = vcombine.high %v2237, %v2237
        %v2241 = vunpack.c.l.s4 1966171168
        %v2242 = vunpack.c.0.s8 %v2241
        %v2243 = vlaneseq
        %v2244 = vshrl.u32 %v2243, 7
        %v2245 = vsub.s32 %v2242, %v2244
        %v2246 = vrot.slane %v930, %v2245
        %v2248 = vunpack.c.l.s4 1966171168
        %v2249 = vunpack.c.0.s8 %v2248
        %v2250 = vlaneseq
        %v2251 = vshrl.u32 %v2250, 7
        %v2252 = vsub.s32 %v2249, %v2251
        %v2253 = vrot.slane %v2246, %v2252
        %v2255 = vlaneseq
        %v2256 = vshrl.u32 %v2255, 7
        %v2257 = vsub.s32 0, %v2256
        %v2258 = vrot.slane %v951, %v2257
        %v2260 = vcombine.low %v2192, %v2199
        %v2261 = vcombine.low %v2200, %v2201
        %v2262 = vcombine.low %v2215, %v2230
        %v2263 = vcombine.low %v2237, %v2238
        %v2265 = vunpack.c.l.s4 1966171168
        %v2266 = vunpack.c.0.s8 %v2265
        %v2267 = vlaneseq
        %v2268 = vshrl.u32 %v2267, 7
        %v2269 = vsub.s32 %v2266, %v2268
        %v2270 = vrot.slane %v2260, %v2269
        %v2272 = vunpack.c.l.s4 1966171168
        %v2273 = vunpack.c.0.s8 %v2272
        %v2274 = vlaneseq
        %v2275 = vshrl.u32 %v2274, 7
        %v2276 = vsub.s32 %v2273, %v2275
        %v2277 = vrot.slane %v2261, %v2276
        %v2279 = vunpack.c.l.s4 1966171168
        %v2280 = vunpack.c.0.s8 %v2279
        %v2281 = vlaneseq
        %v2282 = vshrl.u32 %v2281, 7
        %v2283 = vsub.s32 %v2280, %v2282
        %v2284 = vrot.slane %v2262, %v2283
        %v2286 = vunpack.c.l.s4 1966171168
        %v2287 = vunpack.c.0.s8 %v2286
        %v2288 = vlaneseq
        %v2289 = vshrl.u32 %v2288, 7
        %v2290 = vsub.s32 %v2287, %v2289
        %v2291 = vrot.slane %v2263, %v2290
        %v2292 = vcombine.low %v2270, %v2277
        %v2293 = vcombine.low %v2284, %v2291
        %v2295 = vunpack.c.l.s4 1966171168
        %v2296 = vunpack.c.0.s8 %v2295
        %v2297 = vlaneseq
        %v2298 = vshrl.u32 %v2297, 7
        %v2299 = vsub.s32 %v2296, %v2298
        %v2300 = vrot.slane %v2292, %v2299
        %v2302 = vunpack.c.l.s4 1966171168
        %v2303 = vunpack.c.0.s8 %v2302
        %v2304 = vlaneseq
        %v2305 = vshrl.u32 %v2304, 7
        %v2306 = vsub.s32 %v2303, %v2305
        %v2307 = vrot.slane %v2293, %v2306
        %v2308 = vcombine.low %v2300, %v2307
        %v2309 = vcombine.low %v2239, %v2253
        %v2311 = vunpack.c.l.s4 1966171168
        %v2312 = vunpack.c.0.s8 %v2311
        %v2313 = vlaneseq
        %v2314 = vshrl.u32 %v2313, 7
        %v2315 = vsub.s32 %v2312, %v2314
        %v2316 = vrot.slane %v2309, %v2315
        %v2318 = vunpack.c.l.s4 1966171168
        %v2319 = vunpack.c.0.s8 %v2318
        %v2320 = vlaneseq
        %v2321 = vshrl.u32 %v2320, 7
        %v2322 = vsub.s32 %v2319, %v2321
        %v2323 = vrot.slane %v2316, %v2322
        %v2328 = vunpack.c.l.b16 %v947
        %v2329 = vunpack.c.l.b16 %v948
        %v2330 = vunpack.c.l.b16 %v949
        %v2331 = vunpack.c.l.b16 %v950
        %v2332 = vpack.c.b16 %v2329, %v2328
        %v2333 = vpack.c.b16 %v2331, %v2330
        %v2337 = vsel %vm975, %v2308, 0
        %v2340 = vsel %vm975, %v2323, 0
        %2342 = vmatprep.subr.bf16.mxu0 0
        %2343 = vmatpush1.bf16.msra.mxu0 0
        %2344 = vmatprep.subr.bf16.mxu0 0
        %2345 = vmatpush1.bf16.msra.mxu0 0
        %2346 = vmatprep.subr.bf16.mxu0 0
        %2347 = vmatpush1.bf16.msra.mxu0 0
        %2348 = vmatprep.subr.bf16.mxu0 0
        %2349 = vmatpush1.bf16.msra.mxu0 0
        %2350 = vmatprep.subr.bf16.mxu0 0
        %2351 = vmatpush1.bf16.msra.mxu0 0
        %2352 = vmatprep.subr.bf16.mxu0 0
        %2353 = vmatpush1.bf16.msra.mxu0 0
        %2354 = vmatprep.subr.bf16.mxu0 0
        %2355 = vmatpush1.bf16.msra.mxu0 %v2333
        %2356 = vmatprep.subr.bf16.mxu0 0
        %2357 = vmatpush1.bf16.msra.mxu0 %v2332
        %2358 = vmatprep.subr.bf16.mxu0 0
        %2359 = vmatpush2.bf16.msra.mxu0 0
        %2360 = vmatprep.subr.bf16.mxu0 0
        %2361 = vmatpush2.bf16.msra.mxu0 0
        %2362 = vmatprep.subr.bf16.mxu0 0
        %2363 = vmatpush2.bf16.msra.mxu0 0
        %2364 = vmatprep.subr.bf16.mxu0 0
        %2365 = vmatpush2.bf16.msra.mxu0 0
        %2366 = vmatprep.subr.bf16.mxu0 0
        %2367 = vmatpush2.bf16.msra.mxu0 0
        %2368 = vmatprep.subr.bf16.mxu0 0
        %2369 = vmatpush2.bf16.msra.mxu0 0
        %2370 = vmatprep.subr.bf16.mxu0 0
        %2371 = vmatpush2.bf16.msra.mxu0 0
        %2372 = vmatprep.subr.bf16.mxu0 0
        %2373 = vmatpush2.bf16.msra.mxu0 0
        %2374 = vmatprep.mubr.bf16.mxu0 0
        %2375 = vmatmul.mubr.bf16.gmra.mxu0 %v2337
        %v2376 = vpop.f32.mrf.mxu0
        %v2377 = vadd.f32 %v2258, %v2376
        %v2378 = vpop.f32.mrf.mxu0
        %v2379 = vpop.f32.mrf.mxu0
        %v2380 = vadd.f32 %v2258, %v2379
        %v2381 = vpop.f32.mrf.mxu0
        %2382 = vmatprep.mubr.bf16.mxu0 0
        %2383 = vmatmul.mubr.bf16.gmra.mxu0 %v2340
        %v2384 = vpop.f32.mrf.mxu0
        %v2385 = vadd.f32 %v2258, %v2384
        %v2386 = vpop.f32.mrf.mxu0
        %v2387 = vpop.f32.mrf.mxu0
        %v2388 = vpop.f32.mrf.mxu0
        %2389 = vdwg.mxu0
        %v2393 = vcombine.high %v2377, %v2377
        %v2395 = vunpack.c.l.s4 1983009808
        %v2396 = vunpack.c.0.s8 %v2395
        %v2397 = vlaneseq
        %v2398 = vshrl.u32 %v2397, 7
        %v2399 = vsub.s32 %v2396, %v2398
        %v2400 = vrot.slane %v2377, %v2399
        %v2402 = vunpack.c.l.s4 1983009808
        %v2403 = vunpack.c.0.s8 %v2402
        %v2404 = vlaneseq
        %v2405 = vshrl.u32 %v2404, 7
        %v2406 = vsub.s32 %v2403, %v2405
        %v2407 = vrot.slane %v2393, %v2406
        %v2408 = vcombine.high %v2400, %v2400
        %v2409 = vcombine.high %v2407, %v2407
        %v2410 = vcombine.high %v2380, %v2380
        %v2412 = vunpack.c.l.s4 1983009808
        %v2413 = vunpack.c.0.s8 %v2412
        %v2414 = vlaneseq
        %v2415 = vshrl.u32 %v2414, 7
        %v2416 = vsub.s32 %v2413, %v2415
        %v2417 = vrot.slane %v2380, %v2416
        %v2419 = vunpack.c.l.s4 1983009808
        %v2420 = vunpack.c.0.s8 %v2419
        %v2421 = vlaneseq
        %v2422 = vshrl.u32 %v2421, 7
        %v2423 = vsub.s32 %v2420, %v2422
        %v2424 = vrot.slane %v2410, %v2423
        %v2425 = vcombine.high %v2417, %v2417
        %v2426 = vcombine.high %v2424, %v2424
        %v2428 = vunpack.c.l.s4 1983009808
        %v2429 = vunpack.c.0.s8 %v2428
        %v2430 = vlaneseq
        %v2431 = vshrl.u32 %v2430, 7
        %v2432 = vsub.s32 %v2429, %v2431
        %v2433 = vrot.slane %v2385, %v2432
        %v2434 = vcombine.high %v2433, %v2433
        %v2435 = vpack.c.bf16 %v2168, %v2168
        %v2436 = vpack.c.bf16 %v2171, %v2171
        %v2437 = vcombine.low %v2400, %v2408
        %v2438 = vcombine.low %v2407, %v2409
        %v2440 = vunpack.c.l.s4 1983009808
        %v2441 = vunpack.c.0.s8 %v2440
        %v2442 = vlaneseq
        %v2443 = vshrl.u32 %v2442, 7
        %v2444 = vsub.s32 %v2441, %v2443
        %v2445 = vrot.slane %v2437, %v2444
        %v2447 = vunpack.c.l.s4 1983009808
        %v2448 = vunpack.c.0.s8 %v2447
        %v2449 = vlaneseq
        %v2450 = vshrl.u32 %v2449, 7
        %v2451 = vsub.s32 %v2448, %v2450
        %v2452 = vrot.slane %v2438, %v2451
        %v2453 = vcombine.low %v2445, %v2452
        %v2455 = vunpack.c.l.s4 1983009808
        %v2456 = vunpack.c.0.s8 %v2455
        %v2457 = vlaneseq
        %v2458 = vshrl.u32 %v2457, 7
        %v2459 = vsub.s32 %v2456, %v2458
        %v2460 = vrot.slane %v2417, %v2459
        %v2461 = vcombine.low %v2425, %v2424
        %v2462 = vcombine.low %v2426, %v2433
        %v2464 = vunpack.c.l.s4 1983009808
        %v2465 = vunpack.c.0.s8 %v2464
        %v2466 = vlaneseq
        %v2467 = vshrl.u32 %v2466, 7
        %v2468 = vsub.s32 %v2465, %v2467
        %v2469 = vrot.slane %v2461, %v2468
        %v2471 = vunpack.c.l.s4 1983009808
        %v2472 = vunpack.c.0.s8 %v2471
        %v2473 = vlaneseq
        %v2474 = vshrl.u32 %v2473, 7
        %v2475 = vsub.s32 %v2472, %v2474
        %v2476 = vrot.slane %v2462, %v2475
        %v2477 = vcombine.low %v2469, %v2476
        %v2479 = vunpack.c.l.s4 1983009808
        %v2480 = vunpack.c.0.s8 %v2479
        %v2481 = vlaneseq
        %v2482 = vshrl.u32 %v2481, 7
        %v2483 = vsub.s32 %v2480, %v2482
        %v2484 = vrot.slane %v2434, %v2483
        %v2489 = vpack.c.bf16 %v2460, %v2453
        %v2490 = vpack.c.bf16 %v2484, %v2477
        %v2492 = vsel %vm1083, %v2435, 0
        %v2495 = vsel %vm1083, %v2489, 0
        %2497 = vmatprep.subr.bf16.mxu0 0
        %2498 = vmatpush1.bf16.xpose.msra.mxu0 0
        %2499 = vmatprep.subr.bf16.mxu0 0
        %2500 = vmatpush1.bf16.xpose.msra.mxu0 0
        %2501 = vmatprep.subr.bf16.mxu0 0
        %2502 = vmatpush1.bf16.xpose.msra.mxu0 0
        %2503 = vmatprep.subr.bf16.mxu0 0
        %2504 = vmatpush1.bf16.xpose.msra.mxu0 0
        %2505 = vmatprep.subr.bf16.mxu0 0
        %2506 = vmatpush1.bf16.xpose.msra.mxu0 0
        %2507 = vmatprep.subr.bf16.mxu0 0
        %2508 = vmatpush1.bf16.xpose.msra.mxu0 0
        %2509 = vmatprep.subr.bf16.mxu0 0
        %2510 = vmatpush1.bf16.xpose.msra.mxu0 0
        %2511 = vmatprep.subr.bf16.mxu0 0
        %2512 = vmatpush1.bf16.xpose.msra.mxu0 %v2495
        %2513 = vmatprep.subr.bf16.mxu0 0
        %2514 = vmatpush2.bf16.xpose.msra.mxu0 0
        %2515 = vmatprep.subr.bf16.mxu0 0
        %2516 = vmatpush2.bf16.xpose.msra.mxu0 0
        %2517 = vmatprep.subr.bf16.mxu0 0
        %2518 = vmatpush2.bf16.xpose.msra.mxu0 0
        %2519 = vmatprep.subr.bf16.mxu0 0
        %2520 = vmatpush2.bf16.xpose.msra.mxu0 0
        %2521 = vmatprep.subr.bf16.mxu0 0
        %2522 = vmatpush2.bf16.xpose.msra.mxu0 0
        %2523 = vmatprep.subr.bf16.mxu0 0
        %2524 = vmatpush2.bf16.xpose.msra.mxu0 0
        %2525 = vmatprep.subr.bf16.mxu0 0
        %2526 = vmatpush2.bf16.xpose.msra.mxu0 0
        %2527 = vmatprep.subr.bf16.mxu0 0
        %2528 = vmatpush2.bf16.xpose.msra.mxu0 0
        %2529 = vmatprep.mubr.bf16.mxu0 0
        %2530 = vmatmul.mubr.bf16.gmra.mxu0 %v2492
        %v2531 = vpop.f32.mrf.mxu0
        %v2532 = vadd.f32 0.0, %v2531
        %v2533 = vpop.f32.mrf.mxu0
        %v2534 = vpop.f32.mrf.mxu0
        %v2535 = vpop.f32.mrf.mxu0
        %2536 = vdwg.mxu0
        %v2538 = vsel %vm1083, %v2436, 0
        %v2541 = vsel %vm1083, %v2490, 0
        %2543 = vmatprep.subr.bf16.mxu0 0
        %2544 = vmatpush1.bf16.xpose.msra.mxu0 0
        %2545 = vmatprep.subr.bf16.mxu0 0
        %2546 = vmatpush1.bf16.xpose.msra.mxu0 0
        %2547 = vmatprep.subr.bf16.mxu0 0
        %2548 = vmatpush1.bf16.xpose.msra.mxu0 0
        %2549 = vmatprep.subr.bf16.mxu0 0
        %2550 = vmatpush1.bf16.xpose.msra.mxu0 0
        %2551 = vmatprep.subr.bf16.mxu0 0
        %2552 = vmatpush1.bf16.xpose.msra.mxu0 0
        %2553 = vmatprep.subr.bf16.mxu0 0
        %2554 = vmatpush1.bf16.xpose.msra.mxu0 0
        %2555 = vmatprep.subr.bf16.mxu0 0
        %2556 = vmatpush1.bf16.xpose.msra.mxu0 0
        %2557 = vmatprep.subr.bf16.mxu0 0
        %2558 = vmatpush1.bf16.xpose.msra.mxu0 %v2541
        %2559 = vmatprep.subr.bf16.mxu0 0
        %2560 = vmatpush2.bf16.xpose.msra.mxu0 0
        %2561 = vmatprep.subr.bf16.mxu0 0
        %2562 = vmatpush2.bf16.xpose.msra.mxu0 0
        %2563 = vmatprep.subr.bf16.mxu0 0
        %2564 = vmatpush2.bf16.xpose.msra.mxu0 0
        %2565 = vmatprep.subr.bf16.mxu0 0
        %2566 = vmatpush2.bf16.xpose.msra.mxu0 0
        %2567 = vmatprep.subr.bf16.mxu0 0
        %2568 = vmatpush2.bf16.xpose.msra.mxu0 0
        %2569 = vmatprep.subr.bf16.mxu0 0
        %2570 = vmatpush2.bf16.xpose.msra.mxu0 0
        %2571 = vmatprep.subr.bf16.mxu0 0
        %2572 = vmatpush2.bf16.xpose.msra.mxu0 0
        %2573 = vmatprep.subr.bf16.mxu0 0
        %2574 = vmatpush2.bf16.xpose.msra.mxu0 0
        %2575 = vmatprep.mubr.bf16.mxu0 0
        %2576 = vmatmul.mubr.bf16.gmra.mxu0 %v2538
        %v2577 = vpop.f32.mrf.mxu0
        %v2578 = vadd.f32 0.0, %v2577
        %v2579 = vpop.f32.mrf.mxu0
        %v2580 = vpop.f32.mrf.mxu0
        %v2581 = vpop.f32.mrf.mxu0
        %2582 = vdwg.mxu0
        %v2583 = vmul.f32 %v2532, 0.35355338
        %v2584 = vmul.f32 %v2578, 0.35355338
        %v2585 = vadd.f32 %v2583, %v973
        %v2586 = vadd.f32 %v2584, %v974
        %vm2587 = vcmask 80896
        %v2588 = vsel %vm2587, %v2585, -inf
        %2589 = vmax.xlane.f32.xlu0 %v2588
        %v2590 = vpop.xlane.xlu0 %2589
        %v2591 = vsel %vm2587, %v2586, -inf
        %2592 = vmax.xlane.f32.xlu0 %v2591
        %v2593 = vpop.xlane.xlu0 %2592
        %v2594 = vsub.f32 %v2585, %v2590
        %v2595 = vsub.f32 %v2586, %v2593
        %v2596 = vmul.f32 %v2594, 1.442695
        %v2597 = vpow.pop %v2596
        %v2598 = vmul.f32 %v2595, 1.442695
        %v2599 = vpow.pop %v2598
        %v2600 = vsel %vm2587, %v2597, 0.0
        %2601 = vadd.xlane.f32.xlu0 %v2600
        %v2602 = vpop.xlane.xlu0 %2601
        %v2603 = vsel %vm2587, %v2599, 0.0
        %2604 = vadd.xlane.f32.xlu0 %v2603
        %v2605 = vpop.xlane.xlu0 %2604
        %v2606 = vrcp.pop %v2602
        %v2607 = vmul.f32 %v2597, %v2606
        %v2608 = vrcp.pop %v2605
        %v2609 = vmul.f32 %v2599, %v2608
        %v2610 = vpack.c.bf16 %v2607, %v2607
        %v2611 = vpack.c.bf16 %v2609, %v2609
        %2613 = vrot.lane.b32.xlu0 %v2489, 96
        %v2614 = vpop.permute.xlu0 %2613
        %v2616 = vsel %vm2587, %v2610, 0
        %vm2618 = vcmask 1044480
        %v2620 = vsel %vm2618, %v2614, 0
        %2622 = vmatprep.subr.bf16.mxu0 0
        %2623 = vmatpush1.bf16.msra.mxu0 0
        %2624 = vmatprep.subr.bf16.mxu0 0
        %2625 = vmatpush1.bf16.msra.mxu0 0
        %2626 = vmatprep.subr.bf16.mxu0 0
        %2627 = vmatpush1.bf16.msra.mxu0 0
        %2628 = vmatprep.subr.bf16.mxu0 0
        %2629 = vmatpush1.bf16.msra.mxu0 0
        %2630 = vmatprep.subr.bf16.mxu0 0
        %2631 = vmatpush1.bf16.msra.mxu0 0
        %2632 = vmatprep.subr.bf16.mxu0 0
        %2633 = vmatpush1.bf16.msra.mxu0 0
        %2634 = vmatprep.subr.bf16.mxu0 0
        %2635 = vmatpush1.bf16.msra.mxu0 0
        %2636 = vmatprep.subr.bf16.mxu0 0
        %2637 = vmatpush1.bf16.msra.mxu0 %v2620
        %2638 = vmatprep.subr.bf16.mxu0 0
        %2639 = vmatpush2.bf16.msra.mxu0 0
        %2640 = vmatprep.subr.bf16.mxu0 0
        %2641 = vmatpush2.bf16.msra.mxu0 0
        %2642 = vmatprep.subr.bf16.mxu0 0
        %2643 = vmatpush2.bf16.msra.mxu0 0
        %2644 = vmatprep.subr.bf16.mxu0 0
        %2645 = vmatpush2.bf16.msra.mxu0 0
        %2646 = vmatprep.subr.bf16.mxu0 0
        %2647 = vmatpush2.bf16.msra.mxu0 0
        %2648 = vmatprep.subr.bf16.mxu0 0
        %2649 = vmatpush2.bf16.msra.mxu0 0
        %2650 = vmatprep.subr.bf16.mxu0 0
        %2651 = vmatpush2.bf16.msra.mxu0 0
        %2652 = vmatprep.subr.bf16.mxu0 0
        %2653 = vmatpush2.bf16.msra.mxu0 0
        %2654 = vmatprep.mubr.bf16.mxu0 0
        %2655 = vmatmul.mubr.bf16.gmra.mxu0 %v2616
        %v2656 = vpop.f32.mrf.mxu0
        %v2657 = vadd.f32 0.0, %v2656
        %v2658 = vpop.f32.mrf.mxu0
        %v2659 = vpop.f32.mrf.mxu0
        %v2660 = vpop.f32.mrf.mxu0
        %2661 = vdwg.mxu0
        %2663 = vrot.lane.b32.xlu0 %v2490, 96
        %v2664 = vpop.permute.xlu0 %2663
        %v2666 = vsel %vm2587, %v2611, 0
        %v2669 = vsel %vm2618, %v2664, 0
        %2671 = vmatprep.subr.bf16.mxu0 0
        %2672 = vmatpush1.bf16.msra.mxu0 0
        %2673 = vmatprep.subr.bf16.mxu0 0
        %2674 = vmatpush1.bf16.msra.mxu0 0
        %2675 = vmatprep.subr.bf16.mxu0 0
        %2676 = vmatpush1.bf16.msra.mxu0 0
        %2677 = vmatprep.subr.bf16.mxu0 0
        %2678 = vmatpush1.bf16.msra.mxu0 0
        %2679 = vmatprep.subr.bf16.mxu0 0
        %2680 = vmatpush1.bf16.msra.mxu0 0
        %2681 = vmatprep.subr.bf16.mxu0 0
        %2682 = vmatpush1.bf16.msra.mxu0 0
        %2683 = vmatprep.subr.bf16.mxu0 0
        %2684 = vmatpush1.bf16.msra.mxu0 0
        %2685 = vmatprep.subr.bf16.mxu0 0
        %2686 = vmatpush1.bf16.msra.mxu0 %v2669
        %2687 = vmatprep.subr.bf16.mxu0 0
        %2688 = vmatpush2.bf16.msra.mxu0 0
        %2689 = vmatprep.subr.bf16.mxu0 0
        %2690 = vmatpush2.bf16.msra.mxu0 0
        %2691 = vmatprep.subr.bf16.mxu0 0
        %2692 = vmatpush2.bf16.msra.mxu0 0
        %2693 = vmatprep.subr.bf16.mxu0 0
        %2694 = vmatpush2.bf16.msra.mxu0 0
        %2695 = vmatprep.subr.bf16.mxu0 0
        %2696 = vmatpush2.bf16.msra.mxu0 0
        %2697 = vmatprep.subr.bf16.mxu0 0
        %2698 = vmatpush2.bf16.msra.mxu0 0
        %2699 = vmatprep.subr.bf16.mxu0 0
        %2700 = vmatpush2.bf16.msra.mxu0 0
        %2701 = vmatprep.subr.bf16.mxu0 0
        %2702 = vmatpush2.bf16.msra.mxu0 0
        %2703 = vmatprep.mubr.bf16.mxu0 0
        %2704 = vmatmul.mubr.bf16.gmra.mxu0 %v2666
        %v2705 = vpop.f32.mrf.mxu0
        %v2706 = vadd.f32 0.0, %v2705
        %v2707 = vpop.f32.mrf.mxu0
        %v2708 = vpop.f32.mrf.mxu0
        %v2709 = vpop.f32.mrf.mxu0
        %2710 = vdwg.mxu0
        %2712 = vrot.lane.b32.xlu0 %v2435, 120
        %v2713 = vpop.permute.xlu0 %2712
        %2714 = vrot.lane.b32.xlu0 %v2489, 120
        %v2715 = vpop.permute.xlu0 %2714
        %v2717 = vsel %vm1083, %v2713, 0
        %v2720 = vsel %vm1083, %v2715, 0
        %2722 = vmatprep.subr.bf16.mxu0 0
        %2723 = vmatpush1.bf16.xpose.msra.mxu0 0
        %2724 = vmatprep.subr.bf16.mxu0 0
        %2725 = vmatpush1.bf16.xpose.msra.mxu0 0
        %2726 = vmatprep.subr.bf16.mxu0 0
        %2727 = vmatpush1.bf16.xpose.msra.mxu0 0
        %2728 = vmatprep.subr.bf16.mxu0 0
        %2729 = vmatpush1.bf16.xpose.msra.mxu0 0
        %2730 = vmatprep.subr.bf16.mxu0 0
        %2731 = vmatpush1.bf16.xpose.msra.mxu0 0
        %2732 = vmatprep.subr.bf16.mxu0 0
        %2733 = vmatpush1.bf16.xpose.msra.mxu0 0
        %2734 = vmatprep.subr.bf16.mxu0 0
        %2735 = vmatpush1.bf16.xpose.msra.mxu0 0
        %2736 = vmatprep.subr.bf16.mxu0 0
        %2737 = vmatpush1.bf16.xpose.msra.mxu0 %v2720
        %2738 = vmatprep.subr.bf16.mxu0 0
        %2739 = vmatpush2.bf16.xpose.msra.mxu0 0
        %2740 = vmatprep.subr.bf16.mxu0 0
        %2741 = vmatpush2.bf16.xpose.msra.mxu0 0
        %2742 = vmatprep.subr.bf16.mxu0 0
        %2743 = vmatpush2.bf16.xpose.msra.mxu0 0
        %2744 = vmatprep.subr.bf16.mxu0 0
        %2745 = vmatpush2.bf16.xpose.msra.mxu0 0
        %2746 = vmatprep.subr.bf16.mxu0 0
        %2747 = vmatpush2.bf16.xpose.msra.mxu0 0
        %2748 = vmatprep.subr.bf16.mxu0 0
        %2749 = vmatpush2.bf16.xpose.msra.mxu0 0
        %2750 = vmatprep.subr.bf16.mxu0 0
        %2751 = vmatpush2.bf16.xpose.msra.mxu0 0
        %2752 = vmatprep.subr.bf16.mxu0 0
        %2753 = vmatpush2.bf16.xpose.msra.mxu0 0
        %2754 = vmatprep.mubr.bf16.mxu0 0
        %2755 = vmatmul.mubr.bf16.gmra.mxu0 %v2717
        %v2756 = vpop.f32.mrf.mxu0
        %v2757 = vadd.f32 0.0, %v2756
        %v2758 = vpop.f32.mrf.mxu0
        %v2759 = vpop.f32.mrf.mxu0
        %v2760 = vpop.f32.mrf.mxu0
        %2761 = vdwg.mxu0
        %2763 = vrot.lane.b32.xlu0 %v2436, 120
        %v2764 = vpop.permute.xlu0 %2763
        %2765 = vrot.lane.b32.xlu0 %v2490, 120
        %v2766 = vpop.permute.xlu0 %2765
        %v2768 = vsel %vm1083, %v2764, 0
        %v2771 = vsel %vm1083, %v2766, 0
        %2773 = vmatprep.subr.bf16.mxu0 0
        %2774 = vmatpush1.bf16.xpose.msra.mxu0 0
        %2775 = vmatprep.subr.bf16.mxu0 0
        %2776 = vmatpush1.bf16.xpose.msra.mxu0 0
        %2777 = vmatprep.subr.bf16.mxu0 0
        %2778 = vmatpush1.bf16.xpose.msra.mxu0 0
        %2779 = vmatprep.subr.bf16.mxu0 0
        %2780 = vmatpush1.bf16.xpose.msra.mxu0 0
        %2781 = vmatprep.subr.bf16.mxu0 0
        %2782 = vmatpush1.bf16.xpose.msra.mxu0 0
        %2783 = vmatprep.subr.bf16.mxu0 0
        %2784 = vmatpush1.bf16.xpose.msra.mxu0 0
        %2785 = vmatprep.subr.bf16.mxu0 0
        %2786 = vmatpush1.bf16.xpose.msra.mxu0 0
        %2787 = vmatprep.subr.bf16.mxu0 0
        %2788 = vmatpush1.bf16.xpose.msra.mxu0 %v2771
        %2789 = vmatprep.subr.bf16.mxu0 0
        %2790 = vmatpush2.bf16.xpose.msra.mxu0 0
        %2791 = vmatprep.subr.bf16.mxu0 0
        %2792 = vmatpush2.bf16.xpose.msra.mxu0 0
        %2793 = vmatprep.subr.bf16.mxu0 0
        %2794 = vmatpush2.bf16.xpose.msra.mxu0 0
        %2795 = vmatprep.subr.bf16.mxu0 0
        %2796 = vmatpush2.bf16.xpose.msra.mxu0 0
        %2797 = vmatprep.subr.bf16.mxu0 0
        %2798 = vmatpush2.bf16.xpose.msra.mxu0 0
        %2799 = vmatprep.subr.bf16.mxu0 0
        %2800 = vmatpush2.bf16.xpose.msra.mxu0 0
        %2801 = vmatprep.subr.bf16.mxu0 0
        %2802 = vmatpush2.bf16.xpose.msra.mxu0 0
        %2803 = vmatprep.subr.bf16.mxu0 0
        %2804 = vmatpush2.bf16.xpose.msra.mxu0 0
        %2805 = vmatprep.mubr.bf16.mxu0 0
        %2806 = vmatmul.mubr.bf16.gmra.mxu0 %v2768
        %v2807 = vpop.f32.mrf.mxu0
        %v2808 = vadd.f32 0.0, %v2807
        %v2809 = vpop.f32.mrf.mxu0
        %v2810 = vpop.f32.mrf.mxu0
        %v2811 = vpop.f32.mrf.mxu0
        %2812 = vdwg.mxu0
        %v2813 = vmul.f32 %v2757, 0.35355338
        %v2814 = vmul.f32 %v2808, 0.35355338
        %v2815 = vadd.f32 %v2813, %v973
        %v2816 = vadd.f32 %v2814, %v974
        %v2817 = vsel %vm2587, %v2815, -inf
        %2818 = vmax.xlane.f32.xlu0 %v2817
        %v2819 = vpop.xlane.xlu0 %2818
        %v2820 = vsel %vm2587, %v2816, -inf
        %2821 = vmax.xlane.f32.xlu0 %v2820
        %v2822 = vpop.xlane.xlu0 %2821
        %v2823 = vsub.f32 %v2815, %v2819
        %v2824 = vsub.f32 %v2816, %v2822
        %v2825 = vmul.f32 %v2823, 1.442695
        %v2826 = vpow.pop %v2825
        %v2827 = vmul.f32 %v2824, 1.442695
        %v2828 = vpow.pop %v2827
        %v2829 = vsel %vm2587, %v2826, 0.0
        %2830 = vadd.xlane.f32.xlu0 %v2829
        %v2831 = vpop.xlane.xlu0 %2830
        %v2832 = vsel %vm2587, %v2828, 0.0
        %2833 = vadd.xlane.f32.xlu0 %v2832
        %v2834 = vpop.xlane.xlu0 %2833
        %v2835 = vrcp.pop %v2831
        %v2836 = vmul.f32 %v2826, %v2835
        %v2837 = vrcp.pop %v2834
        %v2838 = vmul.f32 %v2828, %v2837
        %v2839 = vpack.c.bf16 %v2836, %v2836
        %v2840 = vpack.c.bf16 %v2838, %v2838
        %2841 = vrot.lane.b32.xlu0 %v2489, 88
        %v2842 = vpop.permute.xlu0 %2841
        %v2844 = vsel %vm2587, %v2839, 0
        %v2847 = vsel %vm2618, %v2842, 0
        %2849 = vmatprep.subr.bf16.mxu0 0
        %2850 = vmatpush1.bf16.msra.mxu0 0
        %2851 = vmatprep.subr.bf16.mxu0 0
        %2852 = vmatpush1.bf16.msra.mxu0 0
        %2853 = vmatprep.subr.bf16.mxu0 0
        %2854 = vmatpush1.bf16.msra.mxu0 0
        %2855 = vmatprep.subr.bf16.mxu0 0
        %2856 = vmatpush1.bf16.msra.mxu0 0
        %2857 = vmatprep.subr.bf16.mxu0 0
        %2858 = vmatpush1.bf16.msra.mxu0 0
        %2859 = vmatprep.subr.bf16.mxu0 0
        %2860 = vmatpush1.bf16.msra.mxu0 0
        %2861 = vmatprep.subr.bf16.mxu0 0
        %2862 = vmatpush1.bf16.msra.mxu0 0
        %2863 = vmatprep.subr.bf16.mxu0 0
        %2864 = vmatpush1.bf16.msra.mxu0 %v2847
        %2865 = vmatprep.subr.bf16.mxu0 0
        %2866 = vmatpush2.bf16.msra.mxu0 0
        %2867 = vmatprep.subr.bf16.mxu0 0
        %2868 = vmatpush2.bf16.msra.mxu0 0
        %2869 = vmatprep.subr.bf16.mxu0 0
        %2870 = vmatpush2.bf16.msra.mxu0 0
        %2871 = vmatprep.subr.bf16.mxu0 0
        %2872 = vmatpush2.bf16.msra.mxu0 0
        %2873 = vmatprep.subr.bf16.mxu0 0
        %2874 = vmatpush2.bf16.msra.mxu0 0
        %2875 = vmatprep.subr.bf16.mxu0 0
        %2876 = vmatpush2.bf16.msra.mxu0 0
        %2877 = vmatprep.subr.bf16.mxu0 0
        %2878 = vmatpush2.bf16.msra.mxu0 0
        %2879 = vmatprep.subr.bf16.mxu0 0
        %2880 = vmatpush2.bf16.msra.mxu0 0
        %2881 = vmatprep.mubr.bf16.mxu0 0
        %2882 = vmatmul.mubr.bf16.gmra.mxu0 %v2844
        %v2883 = vpop.f32.mrf.mxu0
        %v2884 = vadd.f32 0.0, %v2883
        %v2885 = vpop.f32.mrf.mxu0
        %v2886 = vpop.f32.mrf.mxu0
        %v2887 = vpop.f32.mrf.mxu0
        %2888 = vdwg.mxu0
        %2889 = vrot.lane.b32.xlu0 %v2490, 88
        %v2890 = vpop.permute.xlu0 %2889
        %v2892 = vsel %vm2587, %v2840, 0
        %v2895 = vsel %vm2618, %v2890, 0
        %2897 = vmatprep.subr.bf16.mxu0 0
        %2898 = vmatpush1.bf16.msra.mxu0 0
        %2899 = vmatprep.subr.bf16.mxu0 0
        %2900 = vmatpush1.bf16.msra.mxu0 0
        %2901 = vmatprep.subr.bf16.mxu0 0
        %2902 = vmatpush1.bf16.msra.mxu0 0
        %2903 = vmatprep.subr.bf16.mxu0 0
        %2904 = vmatpush1.bf16.msra.mxu0 0
        %2905 = vmatprep.subr.bf16.mxu0 0
        %2906 = vmatpush1.bf16.msra.mxu0 0
        %2907 = vmatprep.subr.bf16.mxu0 0
        %2908 = vmatpush1.bf16.msra.mxu0 0
        %2909 = vmatprep.subr.bf16.mxu0 0
        %2910 = vmatpush1.bf16.msra.mxu0 0
        %2911 = vmatprep.subr.bf16.mxu0 0
        %2912 = vmatpush1.bf16.msra.mxu0 %v2895
        %2913 = vmatprep.subr.bf16.mxu0 0
        %2914 = vmatpush2.bf16.msra.mxu0 0
        %2915 = vmatprep.subr.bf16.mxu0 0
        %2916 = vmatpush2.bf16.msra.mxu0 0
        %2917 = vmatprep.subr.bf16.mxu0 0
        %2918 = vmatpush2.bf16.msra.mxu0 0
        %2919 = vmatprep.subr.bf16.mxu0 0
        %2920 = vmatpush2.bf16.msra.mxu0 0
        %2921 = vmatprep.subr.bf16.mxu0 0
        %2922 = vmatpush2.bf16.msra.mxu0 0
        %2923 = vmatprep.subr.bf16.mxu0 0
        %2924 = vmatpush2.bf16.msra.mxu0 0
        %2925 = vmatprep.subr.bf16.mxu0 0
        %2926 = vmatpush2.bf16.msra.mxu0 0
        %2927 = vmatprep.subr.bf16.mxu0 0
        %2928 = vmatpush2.bf16.msra.mxu0 0
        %2929 = vmatprep.mubr.bf16.mxu0 0
        %2930 = vmatmul.mubr.bf16.gmra.mxu0 %v2892
        %v2931 = vpop.f32.mrf.mxu0
        %v2932 = vadd.f32 0.0, %v2931
        %v2933 = vpop.f32.mrf.mxu0
        %v2934 = vpop.f32.mrf.mxu0
        %v2935 = vpop.f32.mrf.mxu0
        %2936 = vdwg.mxu0
        %2937 = vrot.lane.b32.xlu0 %v2435, 112
        %v2938 = vpop.permute.xlu0 %2937
        %2939 = vrot.lane.b32.xlu0 %v2489, 112
        %v2940 = vpop.permute.xlu0 %2939
        %v2942 = vsel %vm1083, %v2938, 0
        %v2945 = vsel %vm1083, %v2940, 0
        %2947 = vmatprep.subr.bf16.mxu0 0
        %2948 = vmatpush1.bf16.xpose.msra.mxu0 0
        %2949 = vmatprep.subr.bf16.mxu0 0
        %2950 = vmatpush1.bf16.xpose.msra.mxu0 0
        %2951 = vmatprep.subr.bf16.mxu0 0
        %2952 = vmatpush1.bf16.xpose.msra.mxu0 0
        %2953 = vmatprep.subr.bf16.mxu0 0
        %2954 = vmatpush1.bf16.xpose.msra.mxu0 0
        %2955 = vmatprep.subr.bf16.mxu0 0
        %2956 = vmatpush1.bf16.xpose.msra.mxu0 0
        %2957 = vmatprep.subr.bf16.mxu0 0
        %2958 = vmatpush1.bf16.xpose.msra.mxu0 0
        %2959 = vmatprep.subr.bf16.mxu0 0
        %2960 = vmatpush1.bf16.xpose.msra.mxu0 0
        %2961 = vmatprep.subr.bf16.mxu0 0
        %2962 = vmatpush1.bf16.xpose.msra.mxu0 %v2945
        %2963 = vmatprep.subr.bf16.mxu0 0
        %2964 = vmatpush2.bf16.xpose.msra.mxu0 0
        %2965 = vmatprep.subr.bf16.mxu0 0
        %2966 = vmatpush2.bf16.xpose.msra.mxu0 0
        %2967 = vmatprep.subr.bf16.mxu0 0
        %2968 = vmatpush2.bf16.xpose.msra.mxu0 0
        %2969 = vmatprep.subr.bf16.mxu0 0
        %2970 = vmatpush2.bf16.xpose.msra.mxu0 0
        %2971 = vmatprep.subr.bf16.mxu0 0
        %2972 = vmatpush2.bf16.xpose.msra.mxu0 0
        %2973 = vmatprep.subr.bf16.mxu0 0
        %2974 = vmatpush2.bf16.xpose.msra.mxu0 0
        %2975 = vmatprep.subr.bf16.mxu0 0
        %2976 = vmatpush2.bf16.xpose.msra.mxu0 0
        %2977 = vmatprep.subr.bf16.mxu0 0
        %2978 = vmatpush2.bf16.xpose.msra.mxu0 0
        %2979 = vmatprep.mubr.bf16.mxu0 0
        %2980 = vmatmul.mubr.bf16.gmra.mxu0 %v2942
        %v2981 = vpop.f32.mrf.mxu0
        %v2982 = vadd.f32 0.0, %v2981
        %v2983 = vpop.f32.mrf.mxu0
        %v2984 = vpop.f32.mrf.mxu0
        %v2985 = vpop.f32.mrf.mxu0
        %2986 = vdwg.mxu0
        %2987 = vrot.lane.b32.xlu0 %v2436, 112
        %v2988 = vpop.permute.xlu0 %2987
        %2989 = vrot.lane.b32.xlu0 %v2490, 112
        %v2990 = vpop.permute.xlu0 %2989
        %v2992 = vsel %vm1083, %v2988, 0
        %v2995 = vsel %vm1083, %v2990, 0
        %2997 = vmatprep.subr.bf16.mxu0 0
        %2998 = vmatpush1.bf16.xpose.msra.mxu0 0
        %2999 = vmatprep.subr.bf16.mxu0 0
        %3000 = vmatpush1.bf16.xpose.msra.mxu0 0
        %3001 = vmatprep.subr.bf16.mxu0 0
        %3002 = vmatpush1.bf16.xpose.msra.mxu0 0
        %3003 = vmatprep.subr.bf16.mxu0 0
        %3004 = vmatpush1.bf16.xpose.msra.mxu0 0
        %3005 = vmatprep.subr.bf16.mxu0 0
        %3006 = vmatpush1.bf16.xpose.msra.mxu0 0
        %3007 = vmatprep.subr.bf16.mxu0 0
        %3008 = vmatpush1.bf16.xpose.msra.mxu0 0
        %3009 = vmatprep.subr.bf16.mxu0 0
        %3010 = vmatpush1.bf16.xpose.msra.mxu0 0
        %3011 = vmatprep.subr.bf16.mxu0 0
        %3012 = vmatpush1.bf16.xpose.msra.mxu0 %v2995
        %3013 = vmatprep.subr.bf16.mxu0 0
        %3014 = vmatpush2.bf16.xpose.msra.mxu0 0
        %3015 = vmatprep.subr.bf16.mxu0 0
        %3016 = vmatpush2.bf16.xpose.msra.mxu0 0
        %3017 = vmatprep.subr.bf16.mxu0 0
        %3018 = vmatpush2.bf16.xpose.msra.mxu0 0
        %3019 = vmatprep.subr.bf16.mxu0 0
        %3020 = vmatpush2.bf16.xpose.msra.mxu0 0
        %3021 = vmatprep.subr.bf16.mxu0 0
        %3022 = vmatpush2.bf16.xpose.msra.mxu0 0
        %3023 = vmatprep.subr.bf16.mxu0 0
        %3024 = vmatpush2.bf16.xpose.msra.mxu0 0
        %3025 = vmatprep.subr.bf16.mxu0 0
        %3026 = vmatpush2.bf16.xpose.msra.mxu0 0
        %3027 = vmatprep.subr.bf16.mxu0 0
        %3028 = vmatpush2.bf16.xpose.msra.mxu0 0
        %3029 = vmatprep.mubr.bf16.mxu0 0
        %3030 = vmatmul.mubr.bf16.gmra.mxu0 %v2992
        %v3031 = vpop.f32.mrf.mxu0
        %v3032 = vadd.f32 0.0, %v3031
        %v3033 = vpop.f32.mrf.mxu0
        %v3034 = vpop.f32.mrf.mxu0
        %v3035 = vpop.f32.mrf.mxu0
        %3036 = vdwg.mxu0
        %v3037 = vmul.f32 %v2982, 0.35355338
        %v3038 = vmul.f32 %v3032, 0.35355338
        %v3039 = vadd.f32 %v3037, %v973
        %v3040 = vadd.f32 %v3038, %v974
        %v3041 = vsel %vm2587, %v3039, -inf
        %3042 = vmax.xlane.f32.xlu0 %v3041
        %v3043 = vpop.xlane.xlu0 %3042
        %v3044 = vsel %vm2587, %v3040, -inf
        %3045 = vmax.xlane.f32.xlu0 %v3044
        %v3046 = vpop.xlane.xlu0 %3045
        %v3047 = vsub.f32 %v3039, %v3043
        %v3048 = vsub.f32 %v3040, %v3046
        %v3049 = vmul.f32 %v3047, 1.442695
        %v3050 = vpow.pop %v3049
        %v3051 = vmul.f32 %v3048, 1.442695
        %v3052 = vpow.pop %v3051
        %v3053 = vsel %vm2587, %v3050, 0.0
        %3054 = vadd.xlane.f32.xlu0 %v3053
        %v3055 = vpop.xlane.xlu0 %3054
        %v3056 = vsel %vm2587, %v3052, 0.0
        %3057 = vadd.xlane.f32.xlu0 %v3056
        %v3058 = vpop.xlane.xlu0 %3057
        %v3059 = vrcp.pop %v3055
        %v3060 = vmul.f32 %v3050, %v3059
        %v3061 = vrcp.pop %v3058
        %v3062 = vmul.f32 %v3052, %v3061
        %v3063 = vpack.c.bf16 %v3060, %v3060
        %v3064 = vpack.c.bf16 %v3062, %v3062
        %3065 = vrot.lane.b32.xlu0 %v2489, 80
        %v3066 = vpop.permute.xlu0 %3065
        %v3068 = vsel %vm2587, %v3063, 0
        %v3071 = vsel %vm2618, %v3066, 0
        %3073 = vmatprep.subr.bf16.mxu0 0
        %3074 = vmatpush1.bf16.msra.mxu0 0
        %3075 = vmatprep.subr.bf16.mxu0 0
        %3076 = vmatpush1.bf16.msra.mxu0 0
        %3077 = vmatprep.subr.bf16.mxu0 0
        %3078 = vmatpush1.bf16.msra.mxu0 0
        %3079 = vmatprep.subr.bf16.mxu0 0
        %3080 = vmatpush1.bf16.msra.mxu0 0
        %3081 = vmatprep.subr.bf16.mxu0 0
        %3082 = vmatpush1.bf16.msra.mxu0 0
        %3083 = vmatprep.subr.bf16.mxu0 0
        %3084 = vmatpush1.bf16.msra.mxu0 0
        %3085 = vmatprep.subr.bf16.mxu0 0
        %3086 = vmatpush1.bf16.msra.mxu0 0
        %3087 = vmatprep.subr.bf16.mxu0 0
        %3088 = vmatpush1.bf16.msra.mxu0 %v3071
        %3089 = vmatprep.subr.bf16.mxu0 0
        %3090 = vmatpush2.bf16.msra.mxu0 0
        %3091 = vmatprep.subr.bf16.mxu0 0
        %3092 = vmatpush2.bf16.msra.mxu0 0
        %3093 = vmatprep.subr.bf16.mxu0 0
        %3094 = vmatpush2.bf16.msra.mxu0 0
        %3095 = vmatprep.subr.bf16.mxu0 0
        %3096 = vmatpush2.bf16.msra.mxu0 0
        %3097 = vmatprep.subr.bf16.mxu0 0
        %3098 = vmatpush2.bf16.msra.mxu0 0
        %3099 = vmatprep.subr.bf16.mxu0 0
        %3100 = vmatpush2.bf16.msra.mxu0 0
        %3101 = vmatprep.subr.bf16.mxu0 0
        %3102 = vmatpush2.bf16.msra.mxu0 0
        %3103 = vmatprep.subr.bf16.mxu0 0
        %3104 = vmatpush2.bf16.msra.mxu0 0
        %3105 = vmatprep.mubr.bf16.mxu0 0
        %3106 = vmatmul.mubr.bf16.gmra.mxu0 %v3068
        %v3107 = vpop.f32.mrf.mxu0
        %v3108 = vadd.f32 0.0, %v3107
        %v3109 = vpop.f32.mrf.mxu0
        %v3110 = vpop.f32.mrf.mxu0
        %v3111 = vpop.f32.mrf.mxu0
        %3112 = vdwg.mxu0
        %3113 = vrot.lane.b32.xlu0 %v2490, 80
        %v3114 = vpop.permute.xlu0 %3113
        %v3116 = vsel %vm2587, %v3064, 0
        %v3119 = vsel %vm2618, %v3114, 0
        %3121 = vmatprep.subr.bf16.mxu0 0
        %3122 = vmatpush1.bf16.msra.mxu0 0
        %3123 = vmatprep.subr.bf16.mxu0 0
        %3124 = vmatpush1.bf16.msra.mxu0 0
        %3125 = vmatprep.subr.bf16.mxu0 0
        %3126 = vmatpush1.bf16.msra.mxu0 0
        %3127 = vmatprep.subr.bf16.mxu0 0
        %3128 = vmatpush1.bf16.msra.mxu0 0
        %3129 = vmatprep.subr.bf16.mxu0 0
        %3130 = vmatpush1.bf16.msra.mxu0 0
        %3131 = vmatprep.subr.bf16.mxu0 0
        %3132 = vmatpush1.bf16.msra.mxu0 0
        %3133 = vmatprep.subr.bf16.mxu0 0
        %3134 = vmatpush1.bf16.msra.mxu0 0
        %3135 = vmatprep.subr.bf16.mxu0 0
        %3136 = vmatpush1.bf16.msra.mxu0 %v3119
        %3137 = vmatprep.subr.bf16.mxu0 0
        %3138 = vmatpush2.bf16.msra.mxu0 0
        %3139 = vmatprep.subr.bf16.mxu0 0
        %3140 = vmatpush2.bf16.msra.mxu0 0
        %3141 = vmatprep.subr.bf16.mxu0 0
        %3142 = vmatpush2.bf16.msra.mxu0 0
        %3143 = vmatprep.subr.bf16.mxu0 0
        %3144 = vmatpush2.bf16.msra.mxu0 0
        %3145 = vmatprep.subr.bf16.mxu0 0
        %3146 = vmatpush2.bf16.msra.mxu0 0
        %3147 = vmatprep.subr.bf16.mxu0 0
        %3148 = vmatpush2.bf16.msra.mxu0 0
        %3149 = vmatprep.subr.bf16.mxu0 0
        %3150 = vmatpush2.bf16.msra.mxu0 0
        %3151 = vmatprep.subr.bf16.mxu0 0
        %3152 = vmatpush2.bf16.msra.mxu0 0
        %3153 = vmatprep.mubr.bf16.mxu0 0
        %3154 = vmatmul.mubr.bf16.gmra.mxu0 %v3116
        %v3155 = vpop.f32.mrf.mxu0
        %v3156 = vadd.f32 0.0, %v3155
        %v3157 = vpop.f32.mrf.mxu0
        %v3158 = vpop.f32.mrf.mxu0
        %v3159 = vpop.f32.mrf.mxu0
        %3160 = vdwg.mxu0
        %3161 = vrot.lane.b32.xlu0 %v2435, 104
        %v3162 = vpop.permute.xlu0 %3161
        %3163 = vrot.lane.b32.xlu0 %v2489, 104
        %v3164 = vpop.permute.xlu0 %3163
        %v3166 = vsel %vm1083, %v3162, 0
        %v3169 = vsel %vm1083, %v3164, 0
        %3171 = vmatprep.subr.bf16.mxu0 0
        %3172 = vmatpush1.bf16.xpose.msra.mxu0 0
        %3173 = vmatprep.subr.bf16.mxu0 0
        %3174 = vmatpush1.bf16.xpose.msra.mxu0 0
        %3175 = vmatprep.subr.bf16.mxu0 0
        %3176 = vmatpush1.bf16.xpose.msra.mxu0 0
        %3177 = vmatprep.subr.bf16.mxu0 0
        %3178 = vmatpush1.bf16.xpose.msra.mxu0 0
        %3179 = vmatprep.subr.bf16.mxu0 0
        %3180 = vmatpush1.bf16.xpose.msra.mxu0 0
        %3181 = vmatprep.subr.bf16.mxu0 0
        %3182 = vmatpush1.bf16.xpose.msra.mxu0 0
        %3183 = vmatprep.subr.bf16.mxu0 0
        %3184 = vmatpush1.bf16.xpose.msra.mxu0 0
        %3185 = vmatprep.subr.bf16.mxu0 0
        %3186 = vmatpush1.bf16.xpose.msra.mxu0 %v3169
        %3187 = vmatprep.subr.bf16.mxu0 0
        %3188 = vmatpush2.bf16.xpose.msra.mxu0 0
        %3189 = vmatprep.subr.bf16.mxu0 0
        %3190 = vmatpush2.bf16.xpose.msra.mxu0 0
        %3191 = vmatprep.subr.bf16.mxu0 0
        %3192 = vmatpush2.bf16.xpose.msra.mxu0 0
        %3193 = vmatprep.subr.bf16.mxu0 0
        %3194 = vmatpush2.bf16.xpose.msra.mxu0 0
        %3195 = vmatprep.subr.bf16.mxu0 0
        %3196 = vmatpush2.bf16.xpose.msra.mxu0 0
        %3197 = vmatprep.subr.bf16.mxu0 0
        %3198 = vmatpush2.bf16.xpose.msra.mxu0 0
        %3199 = vmatprep.subr.bf16.mxu0 0
        %3200 = vmatpush2.bf16.xpose.msra.mxu0 0
        %3201 = vmatprep.subr.bf16.mxu0 0
        %3202 = vmatpush2.bf16.xpose.msra.mxu0 0
        %3203 = vmatprep.mubr.bf16.mxu0 0
        %3204 = vmatmul.mubr.bf16.gmra.mxu0 %v3166
        %v3205 = vpop.f32.mrf.mxu0
        %v3206 = vadd.f32 0.0, %v3205
        %v3207 = vpop.f32.mrf.mxu0
        %v3208 = vpop.f32.mrf.mxu0
        %v3209 = vpop.f32.mrf.mxu0
        %3210 = vdwg.mxu0
        %3211 = vrot.lane.b32.xlu0 %v2436, 104
        %v3212 = vpop.permute.xlu0 %3211
        %3213 = vrot.lane.b32.xlu0 %v2490, 104
        %v3214 = vpop.permute.xlu0 %3213
        %v3216 = vsel %vm1083, %v3212, 0
        %v3219 = vsel %vm1083, %v3214, 0
        %3221 = vmatprep.subr.bf16.mxu0 0
        %3222 = vmatpush1.bf16.xpose.msra.mxu0 0
        %3223 = vmatprep.subr.bf16.mxu0 0
        %3224 = vmatpush1.bf16.xpose.msra.mxu0 0
        %3225 = vmatprep.subr.bf16.mxu0 0
        %3226 = vmatpush1.bf16.xpose.msra.mxu0 0
        %3227 = vmatprep.subr.bf16.mxu0 0
        %3228 = vmatpush1.bf16.xpose.msra.mxu0 0
        %3229 = vmatprep.subr.bf16.mxu0 0
        %3230 = vmatpush1.bf16.xpose.msra.mxu0 0
        %3231 = vmatprep.subr.bf16.mxu0 0
        %3232 = vmatpush1.bf16.xpose.msra.mxu0 0
        %3233 = vmatprep.subr.bf16.mxu0 0
        %3234 = vmatpush1.bf16.xpose.msra.mxu0 0
        %3235 = vmatprep.subr.bf16.mxu0 0
        %3236 = vmatpush1.bf16.xpose.msra.mxu0 %v3219
        %3237 = vmatprep.subr.bf16.mxu0 0
        %3238 = vmatpush2.bf16.xpose.msra.mxu0 0
        %3239 = vmatprep.subr.bf16.mxu0 0
        %3240 = vmatpush2.bf16.xpose.msra.mxu0 0
        %3241 = vmatprep.subr.bf16.mxu0 0
        %3242 = vmatpush2.bf16.xpose.msra.mxu0 0
        %3243 = vmatprep.subr.bf16.mxu0 0
        %3244 = vmatpush2.bf16.xpose.msra.mxu0 0
        %3245 = vmatprep.subr.bf16.mxu0 0
        %3246 = vmatpush2.bf16.xpose.msra.mxu0 0
        %3247 = vmatprep.subr.bf16.mxu0 0
        %3248 = vmatpush2.bf16.xpose.msra.mxu0 0
        %3249 = vmatprep.subr.bf16.mxu0 0
        %3250 = vmatpush2.bf16.xpose.msra.mxu0 0
        %3251 = vmatprep.subr.bf16.mxu0 0
        %3252 = vmatpush2.bf16.xpose.msra.mxu0 0
        %3253 = vmatprep.mubr.bf16.mxu0 0
        %3254 = vmatmul.mubr.bf16.gmra.mxu0 %v3216
        %v3255 = vpop.f32.mrf.mxu0
        %v3256 = vadd.f32 0.0, %v3255
        %v3257 = vpop.f32.mrf.mxu0
        %v3258 = vpop.f32.mrf.mxu0
        %v3259 = vpop.f32.mrf.mxu0
        %3260 = vdwg.mxu0
        %v3261 = vmul.f32 %v3206, 0.35355338
        %v3262 = vmul.f32 %v3256, 0.35355338
        %v3263 = vadd.f32 %v3261, %v973
        %v3264 = vadd.f32 %v3262, %v974
        %v3265 = vsel %vm2587, %v3263, -inf
        %3266 = vmax.xlane.f32.xlu0 %v3265
        %v3267 = vpop.xlane.xlu0 %3266
        %v3268 = vsel %vm2587, %v3264, -inf
        %3269 = vmax.xlane.f32.xlu0 %v3268
        %v3270 = vpop.xlane.xlu0 %3269
        %v3271 = vsub.f32 %v3263, %v3267
        %v3272 = vsub.f32 %v3264, %v3270
        %v3273 = vmul.f32 %v3271, 1.442695
        %v3274 = vpow.pop %v3273
        %v3275 = vmul.f32 %v3272, 1.442695
        %v3276 = vpow.pop %v3275
        %v3277 = vsel %vm2587, %v3274, 0.0
        %3278 = vadd.xlane.f32.xlu0 %v3277
        %v3279 = vpop.xlane.xlu0 %3278
        %v3280 = vsel %vm2587, %v3276, 0.0
        %3281 = vadd.xlane.f32.xlu0 %v3280
        %v3282 = vpop.xlane.xlu0 %3281
        %v3283 = vrcp.pop %v3279
        %v3284 = vmul.f32 %v3274, %v3283
        %v3285 = vrcp.pop %v3282
        %v3286 = vmul.f32 %v3276, %v3285
        %v3287 = vpack.c.bf16 %v3284, %v3284
        %v3288 = vpack.c.bf16 %v3286, %v3286
        %3289 = vrot.lane.b32.xlu0 %v2489, 72
        %v3290 = vpop.permute.xlu0 %3289
        %v3292 = vsel %vm2587, %v3287, 0
        %v3295 = vsel %vm2618, %v3290, 0
        %3297 = vmatprep.subr.bf16.mxu0 0
        %3298 = vmatpush1.bf16.msra.mxu0 0
        %3299 = vmatprep.subr.bf16.mxu0 0
        %3300 = vmatpush1.bf16.msra.mxu0 0
        %3301 = vmatprep.subr.bf16.mxu0 0
        %3302 = vmatpush1.bf16.msra.mxu0 0
        %3303 = vmatprep.subr.bf16.mxu0 0
        %3304 = vmatpush1.bf16.msra.mxu0 0
        %3305 = vmatprep.subr.bf16.mxu0 0
        %3306 = vmatpush1.bf16.msra.mxu0 0
        %3307 = vmatprep.subr.bf16.mxu0 0
        %3308 = vmatpush1.bf16.msra.mxu0 0
        %3309 = vmatprep.subr.bf16.mxu0 0
        %3310 = vmatpush1.bf16.msra.mxu0 0
        %3311 = vmatprep.subr.bf16.mxu0 0
        %3312 = vmatpush1.bf16.msra.mxu0 %v3295
        %3313 = vmatprep.subr.bf16.mxu0 0
        %3314 = vmatpush2.bf16.msra.mxu0 0
        %3315 = vmatprep.subr.bf16.mxu0 0
        %3316 = vmatpush2.bf16.msra.mxu0 0
        %3317 = vmatprep.subr.bf16.mxu0 0
        %3318 = vmatpush2.bf16.msra.mxu0 0
        %3319 = vmatprep.subr.bf16.mxu0 0
        %3320 = vmatpush2.bf16.msra.mxu0 0
        %3321 = vmatprep.subr.bf16.mxu0 0
        %3322 = vmatpush2.bf16.msra.mxu0 0
        %3323 = vmatprep.subr.bf16.mxu0 0
        %3324 = vmatpush2.bf16.msra.mxu0 0
        %3325 = vmatprep.subr.bf16.mxu0 0
        %3326 = vmatpush2.bf16.msra.mxu0 0
        %3327 = vmatprep.subr.bf16.mxu0 0
        %3328 = vmatpush2.bf16.msra.mxu0 0
        %3329 = vmatprep.mubr.bf16.mxu0 0
        %3330 = vmatmul.mubr.bf16.gmra.mxu0 %v3292
        %v3331 = vpop.f32.mrf.mxu0
        %v3332 = vadd.f32 0.0, %v3331
        %v3333 = vpop.f32.mrf.mxu0
        %v3334 = vpop.f32.mrf.mxu0
        %v3335 = vpop.f32.mrf.mxu0
        %3336 = vdwg.mxu0
        %3337 = vrot.lane.b32.xlu0 %v2490, 72
        %v3338 = vpop.permute.xlu0 %3337
        %v3340 = vsel %vm2587, %v3288, 0
        %v3343 = vsel %vm2618, %v3338, 0
        %3345 = vmatprep.subr.bf16.mxu0 0
        %3346 = vmatpush1.bf16.msra.mxu0 0
        %3347 = vmatprep.subr.bf16.mxu0 0
        %3348 = vmatpush1.bf16.msra.mxu0 0
        %3349 = vmatprep.subr.bf16.mxu0 0
        %3350 = vmatpush1.bf16.msra.mxu0 0
        %3351 = vmatprep.subr.bf16.mxu0 0
        %3352 = vmatpush1.bf16.msra.mxu0 0
        %3353 = vmatprep.subr.bf16.mxu0 0
        %3354 = vmatpush1.bf16.msra.mxu0 0
        %3355 = vmatprep.subr.bf16.mxu0 0
        %3356 = vmatpush1.bf16.msra.mxu0 0
        %3357 = vmatprep.subr.bf16.mxu0 0
        %3358 = vmatpush1.bf16.msra.mxu0 0
        %3359 = vmatprep.subr.bf16.mxu0 0
        %3360 = vmatpush1.bf16.msra.mxu0 %v3343
        %3361 = vmatprep.subr.bf16.mxu0 0
        %3362 = vmatpush2.bf16.msra.mxu0 0
        %3363 = vmatprep.subr.bf16.mxu0 0
        %3364 = vmatpush2.bf16.msra.mxu0 0
        %3365 = vmatprep.subr.bf16.mxu0 0
        %3366 = vmatpush2.bf16.msra.mxu0 0
        %3367 = vmatprep.subr.bf16.mxu0 0
        %3368 = vmatpush2.bf16.msra.mxu0 0
        %3369 = vmatprep.subr.bf16.mxu0 0
        %3370 = vmatpush2.bf16.msra.mxu0 0
        %3371 = vmatprep.subr.bf16.mxu0 0
        %3372 = vmatpush2.bf16.msra.mxu0 0
        %3373 = vmatprep.subr.bf16.mxu0 0
        %3374 = vmatpush2.bf16.msra.mxu0 0
        %3375 = vmatprep.subr.bf16.mxu0 0
        %3376 = vmatpush2.bf16.msra.mxu0 0
        %3377 = vmatprep.mubr.bf16.mxu0 0
        %3378 = vmatmul.mubr.bf16.gmra.mxu0 %v3340
        %v3379 = vpop.f32.mrf.mxu0
        %v3380 = vadd.f32 0.0, %v3379
        %v3381 = vpop.f32.mrf.mxu0
        %v3382 = vpop.f32.mrf.mxu0
        %v3383 = vpop.f32.mrf.mxu0
        %3384 = vdwg.mxu0
        %3387 = vrot.lane.b32.xlu0 %v2884, 8
        %v3388 = vpop.permute.xlu0 %3387
        %3389 = vrot.lane.b32.xlu0 %v2932, 8
        %v3390 = vpop.permute.xlu0 %3389
        %3395 = vrot.lane.b32.xlu0 %v3108, 16
        %v3396 = vpop.permute.xlu0 %3395
        %3397 = vrot.lane.b32.xlu0 %v3156, 16
        %v3398 = vpop.permute.xlu0 %3397
        %3403 = vrot.lane.b32.xlu0 %v3332, 24
        %v3404 = vpop.permute.xlu0 %3403
        %3405 = vrot.lane.b32.xlu0 %v3380, 24
        %v3406 = vpop.permute.xlu0 %3405
        %v3409 = vsel %vm1083, %v2657, %v3388
        %v3410 = vsel %vm1083, %v2706, %v3390
        %v3411 = vsel %vm2002, %v3409, %v3396
        %v3412 = vsel %vm2002, %v3410, %v3398
        %v3413 = vsel %vm2005, %v3411, %v3404
        %v3414 = vsel %vm2005, %v3412, %v3406
        %v3415 = vpack.c.bf16 %v3414, %v3413
        %v3417 = vlaneseq
        %v3418 = vshrl.u32 %v3417, 7
        %v3419 = vsub.s32 0, %v3418
        %v3420 = vrot.slane %v956, %v3419
        %v3426 = vunpack.c.l.b16 %v952
        %v3427 = vunpack.c.l.b16 %v953
        %v3428 = vunpack.c.l.b16 %v954
        %v3429 = vunpack.c.l.b16 %v955
        %v3430 = vpack.c.b16 %v3427, %v3426
        %v3431 = vpack.c.b16 %v3429, %v3428
        %v3435 = vsel %vm975, %v3415, 0
        %3437 = vmatprep.subr.bf16.mxu0 0
        %3438 = vmatpush1.bf16.msra.mxu0 0
        %3439 = vmatprep.subr.bf16.mxu0 0
        %3440 = vmatpush1.bf16.msra.mxu0 0
        %3441 = vmatprep.subr.bf16.mxu0 0
        %3442 = vmatpush1.bf16.msra.mxu0 0
        %3443 = vmatprep.subr.bf16.mxu0 0
        %3444 = vmatpush1.bf16.msra.mxu0 0
        %3445 = vmatprep.subr.bf16.mxu0 0
        %3446 = vmatpush1.bf16.msra.mxu0 0
        %3447 = vmatprep.subr.bf16.mxu0 0
        %3448 = vmatpush1.bf16.msra.mxu0 0
        %3449 = vmatprep.subr.bf16.mxu0 0
        %3450 = vmatpush1.bf16.msra.mxu0 %v3431
        %3451 = vmatprep.subr.bf16.mxu0 0
        %3452 = vmatpush1.bf16.msra.mxu0 %v3430
        %3453 = vmatprep.subr.bf16.mxu0 0
        %3454 = vmatpush2.bf16.msra.mxu0 0
        %3455 = vmatprep.subr.bf16.mxu0 0
        %3456 = vmatpush2.bf16.msra.mxu0 0
        %3457 = vmatprep.subr.bf16.mxu0 0
        %3458 = vmatpush2.bf16.msra.mxu0 0
        %3459 = vmatprep.subr.bf16.mxu0 0
        %3460 = vmatpush2.bf16.msra.mxu0 0
        %3461 = vmatprep.subr.bf16.mxu0 0
        %3462 = vmatpush2.bf16.msra.mxu0 0
        %3463 = vmatprep.subr.bf16.mxu0 0
        %3464 = vmatpush2.bf16.msra.mxu0 0
        %3465 = vmatprep.subr.bf16.mxu0 0
        %3466 = vmatpush2.bf16.msra.mxu0 0
        %3467 = vmatprep.subr.bf16.mxu0 0
        %3468 = vmatpush2.bf16.msra.mxu0 0
        %3469 = vmatprep.mubr.bf16.mxu0 0
        %3470 = vmatmul.mubr.bf16.gmra.mxu0 %v3435
        %v3471 = vpop.f32.mrf.mxu0
        %v3472 = vadd.f32 %v3420, %v3471
        %v3473 = vpop.f32.mrf.mxu0
        %v3474 = vpop.f32.mrf.mxu0
        %v3475 = vadd.f32 %v3420, %v3474
        %v3476 = vpop.f32.mrf.mxu0
        %3477 = vdwg.mxu0
        %v3478 = vadd.f32 %v2071, %v3472
        %v3479 = vadd.f32 %v2072, %v3475
        %v3480 = vsel %vm975, %v3478, 0.0
        %3481 = vadd.xlane.f32.xlu0 %v3480
        %v3482 = vpop.xlane.xlu0 %3481
        %v3483 = vsel %vm975, %v3479, 0.0
        %3484 = vadd.xlane.f32.xlu0 %v3483
        %v3485 = vpop.xlane.xlu0 %3484
        %v3486 = vmul.f32 %v3482, %v982
        %v3487 = vmul.f32 %v3485, %v982
        %v3488 = vsub.f32 %v3478, %v3486
        %v3489 = vsub.f32 %v3479, %v3487
        %v3490 = vmul.f32 %v3488, %v3488
        %v3491 = vmul.f32 %v3489, %v3489
        %v3492 = vsel %vm975, %v3490, 0.0
        %3493 = vadd.xlane.f32.xlu0 %v3492
        %v3494 = vpop.xlane.xlu0 %3493
        %v3495 = vsel %vm975, %v3491, 0.0
        %3496 = vadd.xlane.f32.xlu0 %v3495
        %v3497 = vpop.xlane.xlu0 %3496
        %v3498 = vmul.f32 %v3494, %v982
        %v3499 = vmul.f32 %v3497, %v982
        %v3500 = vadd.f32 %v3498, 1e-05
        %v3501 = vadd.f32 %v3499, 1e-05
        %v3502 = vrsqrt.pop %v3500
        %v3503 = vrsqrt.pop %v3501
        %v3504 = vmul.f32 %v3488, %v3502
        %v3505 = vmul.f32 %v3489, %v3503
        %v3506 = vlaneseq
        %v3507 = vshrl.u32 %v3506, 7
        %v3508 = vsub.s32 4, %v3507
        %v3509 = vrot.slane %v931, %v3508
        %v3510 = vmul.f32 %v3504, %v3509
        %v3511 = vmul.f32 %v3505, %v3509
        %v3512 = vlaneseq
        %v3513 = vshrl.u32 %v3512, 7
        %v3514 = vsub.s32 5, %v3513
        %v3515 = vrot.slane %v931, %v3514
        %v3516 = vadd.f32 %v3510, %v3515
        %v3517 = vadd.f32 %v3511, %v3515
        %v3518 = vpack.c.bf16 %v3517, %v3516
        %v3520 = vlaneseq
        %v3521 = vshrl.u32 %v3520, 7
        %v3522 = vsub.s32 0, %v3521
        %v3523 = vrot.slane %v961, %v3522
        %v3529 = vunpack.c.l.b16 %v957
        %v3530 = vunpack.c.l.b16 %v958
        %v3531 = vunpack.c.l.b16 %v959
        %v3532 = vunpack.c.l.b16 %v960
        %v3533 = vpack.c.b16 %v3530, %v3529
        %v3534 = vpack.c.b16 %v3532, %v3531
        %v3538 = vsel %vm975, %v3518, 0
        %3540 = vmatprep.subr.bf16.mxu0 0
        %3541 = vmatpush1.bf16.msra.mxu0 0
        %3542 = vmatprep.subr.bf16.mxu0 0
        %3543 = vmatpush1.bf16.msra.mxu0 0
        %3544 = vmatprep.subr.bf16.mxu0 0
        %3545 = vmatpush1.bf16.msra.mxu0 0
        %3546 = vmatprep.subr.bf16.mxu0 0
        %3547 = vmatpush1.bf16.msra.mxu0 0
        %3548 = vmatprep.subr.bf16.mxu0 0
        %3549 = vmatpush1.bf16.msra.mxu0 0
        %3550 = vmatprep.subr.bf16.mxu0 0
        %3551 = vmatpush1.bf16.msra.mxu0 0
        %3552 = vmatprep.subr.bf16.mxu0 0
        %3553 = vmatpush1.bf16.msra.mxu0 %v3534
        %3554 = vmatprep.subr.bf16.mxu0 0
        %3555 = vmatpush1.bf16.msra.mxu0 %v3533
        %3556 = vmatprep.subr.bf16.mxu0 0
        %3557 = vmatpush2.bf16.msra.mxu0 0
        %3558 = vmatprep.subr.bf16.mxu0 0
        %3559 = vmatpush2.bf16.msra.mxu0 0
        %3560 = vmatprep.subr.bf16.mxu0 0
        %3561 = vmatpush2.bf16.msra.mxu0 0
        %3562 = vmatprep.subr.bf16.mxu0 0
        %3563 = vmatpush2.bf16.msra.mxu0 0
        %3564 = vmatprep.subr.bf16.mxu0 0
        %3565 = vmatpush2.bf16.msra.mxu0 0
        %3566 = vmatprep.subr.bf16.mxu0 0
        %3567 = vmatpush2.bf16.msra.mxu0 0
        %3568 = vmatprep.subr.bf16.mxu0 0
        %3569 = vmatpush2.bf16.msra.mxu0 0
        %3570 = vmatprep.subr.bf16.mxu0 0
        %3571 = vmatpush2.bf16.msra.mxu0 0
        %3572 = vmatprep.mubr.bf16.mxu0 0
        %3573 = vmatmul.mubr.bf16.gmra.mxu0 %v3538
        %v3574 = vpop.f32.mrf.mxu0
        %v3575 = vadd.f32 %v3523, %v3574
        %v3576 = vpop.f32.mrf.mxu0
        %v3577 = vpop.f32.mrf.mxu0
        %v3578 = vadd.f32 %v3523, %v3577
        %v3579 = vpop.f32.mrf.mxu0
        %3580 = vdwg.mxu0
        %v3581 = vmax.f32 %v3575, 0.0
        %v3582 = vmax.f32 %v3578, 0.0
        %v3583 = vpack.c.bf16 %v3582, %v3581
        %v3585 = vlaneseq
        %v3586 = vshrl.u32 %v3585, 7
        %v3587 = vsub.s32 0, %v3586
        %v3588 = vrot.slane %v970, %v3587
        %v3598 = vunpack.c.l.b16 %v962
        %v3599 = vunpack.c.l.b16 %v963
        %v3600 = vunpack.c.l.b16 %v964
        %v3601 = vunpack.c.l.b16 %v965
        %v3602 = vunpack.c.l.b16 %v966
        %v3603 = vunpack.c.l.b16 %v967
        %v3604 = vunpack.c.l.b16 %v968
        %v3605 = vunpack.c.l.b16 %v969
        %v3606 = vpack.c.b16 %v3599, %v3598
        %v3607 = vpack.c.b16 %v3601, %v3600
        %v3608 = vpack.c.b16 %v3603, %v3602
        %v3609 = vpack.c.b16 %v3605, %v3604
        %vm3614 = vcmask 523264
        %v3616 = vsel %vm3614, %v3583, 0
        %3618 = vmatprep.subr.bf16.mxu0 0
        %3619 = vmatpush1.bf16.msra.mxu0 0
        %3620 = vmatprep.subr.bf16.mxu0 0
        %3621 = vmatpush1.bf16.msra.mxu0 0
        %3622 = vmatprep.subr.bf16.mxu0 0
        %3623 = vmatpush1.bf16.msra.mxu0 0
        %3624 = vmatprep.subr.bf16.mxu0 0
        %3625 = vmatpush1.bf16.msra.mxu0 0
        %3626 = vmatprep.subr.bf16.mxu0 0
        %3627 = vmatpush1.bf16.msra.mxu0 %v3609
        %3628 = vmatprep.subr.bf16.mxu0 0
        %3629 = vmatpush1.bf16.msra.mxu0 %v3608
        %3630 = vmatprep.subr.bf16.mxu0 0
        %3631 = vmatpush1.bf16.msra.mxu0 %v3607
        %3632 = vmatprep.subr.bf16.mxu0 0
        %3633 = vmatpush1.bf16.msra.mxu0 %v3606
        %3634 = vmatprep.subr.bf16.mxu0 0
        %3635 = vmatpush2.bf16.msra.mxu0 0
        %3636 = vmatprep.subr.bf16.mxu0 0
        %3637 = vmatpush2.bf16.msra.mxu0 0
        %3638 = vmatprep.subr.bf16.mxu0 0
        %3639 = vmatpush2.bf16.msra.mxu0 0
        %3640 = vmatprep.subr.bf16.mxu0 0
        %3641 = vmatpush2.bf16.msra.mxu0 0
        %3642 = vmatprep.subr.bf16.mxu0 0
        %3643 = vmatpush2.bf16.msra.mxu0 0
        %3644 = vmatprep.subr.bf16.mxu0 0
        %3645 = vmatpush2.bf16.msra.mxu0 0
        %3646 = vmatprep.subr.bf16.mxu0 0
        %3647 = vmatpush2.bf16.msra.mxu0 0
        %3648 = vmatprep.subr.bf16.mxu0 0
        %3649 = vmatpush2.bf16.msra.mxu0 0
        %3650 = vmatprep.mubr.bf16.mxu0 0
        %3651 = vmatmul.mubr.bf16.gmra.mxu0 %v3616
        %v3652 = vpop.f32.mrf.mxu0
        %v3653 = vadd.f32 %v3588, %v3652
        %v3654 = vpop.f32.mrf.mxu0
        %v3655 = vpop.f32.mrf.mxu0
        %v3656 = vadd.f32 %v3588, %v3655
        %v3657 = vpop.f32.mrf.mxu0
        %3658 = vdwg.mxu0
        %v3659 = vadd.f32 %v3478, %v3653
        %v3660 = vadd.f32 %v3479, %v3656
        %3661 = vst.msk [vmem:[#allocation2] sm:$0xff] %vm975, %v3659
        %3662 = vst.msk [vmem:[#allocation2 + $0x8] sm:$0xff] %vm975, %v3660
        %p3663 = scmp.eq.s32.totalorder %s46, 1
        // Predicated region
        $region105: #{tpu_custom_call.1} parent=87 // pred_check
          %p3664 = pneg %p3663
        $region106: #{tpu_custom_call.1} parent=87 // pred_check_branch
          %3666 = sbr.rel (%p3664) target = $region108
        $region107: #{tpu_custom_call.1} parent=87 // pred_region
          %3667 = vst.msk [vmem:[#allocation14] sm:$0xff] %vm975, %v3659
          %3668 = vst.msk [vmem:[#allocation14 + $0x8] sm:$0xff] %vm975, %v3660
        $region108: #{tpu_custom_call.1} parent=87 // pred_fallthru
          _
        // Predicated region
        $region109: #{tpu_custom_call.1} parent=87 // pred_check
          %p3669 = pneg %p513
        $region110: #{tpu_custom_call.1} parent=87 // pred_check_branch
          %3671 = sbr.rel (%p3669) target = $region112
        $region111: #{tpu_custom_call.1} parent=87 // pred_region
          %s3672 = smul.u32 2, %s45
          %s3674 = ssub.s32 256, 256
          %3675 = vsyncadd [#allocation10], %s3674
          %s3676 = smul.addr %s3672, 128
          %s3677 = scalar_lea.hbm %s19, %s3676
          %s3678 = sshll.u32 [#allocation14], 4
          %s3679 = int_to_ptr.vmem [resolvable:$true] %s3678
          %3684 = dma.vmem_to_hbm [thread:$0]  %s3679, 256, %s3677, [#allocation10], 128, 128, 8
        $region112: #{tpu_custom_call.1} parent=87 // pred_fallthru
          _
        // Predicated region
        $region113: #{tpu_custom_call.1} parent=87 // pred_check
          %p3685 = pneg %p513
        $region114: #{tpu_custom_call.1} parent=87 // pred_check_branch
          %3687 = sbr.rel (%p3685) target = $region116
        $region115: #{tpu_custom_call.1} parent=87 // pred_region
          %3688 = dma.done [#allocation10], 256
        $region116: #{tpu_custom_call.1} parent=87 // pred_fallthru
          _
      $region88: #{tpu_custom_call.1} parent=5 // pred_fallthru
        _
      %p3689 = scmp.le.s32.totalorder 2, %s36
      // Predicated region
      $region117: #{tpu_custom_call.1} parent=5 // pred_check
        %p3690 = pneg %p3689
      $region118: #{tpu_custom_call.1} parent=5 // pred_check_branch
        %3692 = sbr.rel (%p3690) target = $region120
      $region119: #{tpu_custom_call.1} parent=5 // pred_region
        %s3693 = ssub.s32 %s36, 2
      $region120: #{tpu_custom_call.1} parent=5 // pred_fallthru
        _
    $region6: #{tpu_custom_call.1} parent=1 // loop_footer
      %s40 = sadd.s32 1, %s36
    $region7: #{tpu_custom_call.1} parent=1 // loop_footer_branch
      %35 = sbr.rel target = $region3
    $region8: #{tpu_custom_call.1} parent=1 // loop_exit
      _
    %3694 = vsyncpa [#allocation9], 1
    %s3695 = scalar_lea.sflag [#allocation9], 1
    %3696 = vsyncpa %s3695, 1
    %3697 = vsyncpa [#allocation12], 1
    %s3698 = scalar_lea.sflag [#allocation12], 1
    %3699 = vsyncpa %s3698, 1
    %3700 = vsyncpa [#allocation10], 1
    %s3701 = scalar_lea.sflag [#allocation10], 1
    %3702 = vsyncpa %s3701, 1

</llo_original>
